<compile_context>
chip_gen: v7x
topology: tpu7x:2x2x1
jax: 0.10.0
libtpu: 0.0.40
codegen_flags: <defaults>
</compile_context>

<pallas_src>
import numpy as np
import jax
import jax.numpy as jnp
from jax import lax
from jax.experimental import pallas as pl
from jax.experimental.pallas import tpu as pltpu

# ----------------------------- synthetic "network" ---------------------------
EDGE_Z = 1.0
INPUT_SIZE = (3, 16, 16)          # (C, H, W) like the original INPUT_SIZE
NUM_CLASSES = 10
SUBFIELDS = True
OUTPUT_AREAS = ['VISp5', 'VISl5']
BN_EPS = 1e-5

# Each entry mimics one `layer` of the mouse network:
#   Conv2dMask(in_ch, out_ch, kernel, gsh, gsw, stride, padding, mask=3)
#   sub = (left, width, bottom, height) == get_subsample_indices(layer)
LAYERS = [
    dict(source='input',   target='LGNd',    in_ch=3, out_ch=8, kernel=3,
         stride=1, padding=1, gsh=0.8, gsw=1.0, sub=(0, 16, 0, 16)),
    dict(source='LGNd',    target='VISp4',   in_ch=8, out_ch=8, kernel=3,
         stride=1, padding=1, gsh=0.8, gsw=1.0, sub=(2, 12, 2, 12)),
    dict(source='VISp4',   target='VISp2/3', in_ch=8, out_ch=8, kernel=3,
         stride=1, padding=1, gsh=0.8, gsw=1.0, sub=(0, 12, 0, 12)),
    dict(source='VISp2/3', target='VISp5',   in_ch=8, out_ch=8, kernel=3,
         stride=1, padding=1, gsh=0.8, gsw=1.0, sub=(0, 12, 0, 12)),
    dict(source='VISp4',   target='VISp5',   in_ch=8, out_ch=8, kernel=3,
         stride=1, padding=1, gsh=0.8, gsw=1.0, sub=(0, 12, 0, 12)),
    dict(source='VISp2/3', target='VISl4',   in_ch=8, out_ch=8, kernel=3,
         stride=1, padding=1, gsh=0.8, gsw=1.0, sub=(0, 12, 0, 12)),
    dict(source='VISl4',   target='VISl2/3', in_ch=8, out_ch=8, kernel=3,
         stride=1, padding=1, gsh=0.8, gsw=1.0, sub=(0, 12, 0, 12)),
    dict(source='VISl2/3', target='VISl5',   in_ch=8, out_ch=8, kernel=3,
         stride=1, padding=1, gsh=0.8, gsw=1.0, sub=(0, 12, 0, 12)),
]

# nx.topological_sort replacement (fixed topological order of the DAG above).
TOP_SORT = ['input', 'LGNd', 'VISp4', 'VISp2/3', 'VISp5',
            'VISl4', 'VISl2/3', 'VISl5']

# ------------------------------- slab geometry --------------------------------
VALID = 12                         # valid feature-map side after narrowing
BLK = VALID + 2                    # 14: valid region + 1-pixel zero ring
BLK2 = BLK * BLK                   # 196 lanes per image
GUARD = 128                        # lane guard: aligned stores + zero padding
NCH = 8                            # channels per area (input padded 3 -> 8)
TAP_SHIFTS = [(di - 1) * BLK + (dj - 1) for di in range(3) for dj in range(3)]
assert GUARD > max(abs(s) for s in TAP_SHIFTS)


# --------------------------- Conv2dMask mask making ---------------------------
def make_gaussian_kernel_mask(rng, peak, sigma):
    width = int(sigma * EDGE_Z)
    x = np.arange(-width, width + 1)
    X, Y = np.meshgrid(x, x)
    radius = np.sqrt(X ** 2 + Y ** 2)
    probability = peak * np.exp(-radius ** 2 / 2 / sigma ** 2)
    return rng.rand(len(x), len(x)) < probability


def make_gaussian_kernel_mask_vary_channel(rng, peak, sigma, kernel_size,
                                           out_channels, in_channels):
    re = np.zeros((out_channels, in_channels, kernel_size, kernel_size))
    for i in range(out_channels):
        for j in range(in_channels):
            re[i, j, :] = make_gaussian_kernel_mask(rng, peak, sigma)
    return re


def _adaptive_pool_matrix(in_size, out_size):
    A = np.zeros((out_size, in_size), np.float32)
    for p in range(out_size):
        start = int(np.floor(p * in_size / out_size))
        end = int(np.ceil((p + 1) * in_size / out_size))
        A[p, start:end] = 1.0 / (end - start)
    return A


# -------------------------------- parameters ----------------------------------
def build_params():
    mask_rng = np.random.RandomState(0)
    key = jax.random.PRNGKey(0)
    convs, bns = {}, {}
    for L in LAYERS:
        name = L['source'] + L['target']
        Cout, Cin, K = L['out_ch'], L['in_ch'], L['kernel']
        key, kw, kb = jax.random.split(key, 3)
        w = 0.1 * jax.random.normal(kw, (Cout, Cin, K, K), jnp.float32)
        b = 0.01 * jax.random.normal(kb, (Cout,), jnp.float32)
        mask = jnp.asarray(
            make_gaussian_kernel_mask_vary_channel(
                mask_rng, L['gsh'], L['gsw'], K, Cout, Cin),
            jnp.float32)
        convs[name] = dict(w=w, b=b, mask=mask)
        if L['target'] not in bns:
            key, k1, k2, k3, k4 = jax.random.split(key, 5)
            gamma = 1.0 + 0.1 * jax.random.normal(k1, (Cout,), jnp.float32)
            beta = 0.05 * jax.random.normal(k2, (Cout,), jnp.float32)
            mean = 0.1 * jax.random.normal(k3, (Cout,), jnp.float32)
            var = 1.0 + 0.1 * jax.random.uniform(k4, (Cout,), jnp.float32)
            scale = gamma / jnp.sqrt(var + BN_EPS)
            shift = beta - mean * scale
            bns[L['target']] = dict(scale=scale, shift=shift)
    # classifier size: sum over OUTPUT_AREAS of 16 * out_channels of '%s2/3'->area
    total = 0
    for area in OUTPUT_AREAS:
        src = area[:-1] + '2/3'
        L = next(l for l in LAYERS if l['source'] == src and l['target'] == area)
        total += int(16 * L['out_ch'])
    key, kw, kb = jax.random.split(key, 3)
    wc = 0.05 * jax.random.normal(kw, (NUM_CLASSES, total), jnp.float32)
    bc = 0.01 * jax.random.normal(kb, (NUM_CLASSES,), jnp.float32)
    return dict(convs=convs, bns=bns, classifier=dict(w=wc, b=bc))


# ------------------- host-side folding of conv / BN / pool --------------------
def build_fused_params(params):
    """Fold conv taps, BN scale and (pool + classifier) into kernel operands."""
    # Geometry / topology assumptions baked into the fused kernel below.
    assert OUTPUT_AREAS == ['VISp5', 'VISl5']
    assert {(L['source'], L['target']) for L in LAYERS} == {
        ('input', 'LGNd'), ('LGNd', 'VISp4'), ('VISp4', 'VISp2/3'),
        ('VISp4', 'VISp5'), ('VISp2/3', 'VISp5'), ('VISp2/3', 'VISl4'),
        ('VISl4', 'VISl2/3'), ('VISl2/3', 'VISl5')}
    for L in LAYERS:
        assert L['kernel'] == 3 and L['stride'] == 1 and L['padding'] == 1
        assert L['out_ch'] == NCH
        if L['source'] == 'input':
            assert L['sub'] == (0, 16, 0, 16)
        elif L['source'] == 'LGNd':
            assert L['sub'] == (2, 12, 2, 12)
        else:
            assert L['sub'] == (0, 12, 0, 12)

    # Per-area BN affine folded with the summed conv biases:
    #   relu(scale * (conv_sum + bias_sum) + shift) == relu((scale.W)x + beta)
    bias_sum = {}
    for L in LAYERS:
        cp = params['convs'][L['source'] + L['target']]
        bias_sum[L['target']] = (bias_sum.get(L['target'], 0.0)
                                 + np.asarray(cp['b'], np.float32))
    alpha, beta = {}, {}
    for area in TOP_SORT[1:]:
        bn = params['bns'][area]
        scale = np.asarray(bn['scale'], np.float32)
        shift = np.asarray(bn['shift'], np.float32)
        alpha[area] = scale
        beta[area] = shift + scale * bias_sum[area]

    def find(src, tgt):
        return next(l for l in LAYERS if l['source'] == src and l['target'] == tgt)

    def stacked_w(layer, pad_cin_to=None):
        """(cout, 9*cin) weight with taps stacked in K and BN scale folded in."""
        cp = params['convs'][layer['source'] + layer['target']]
        wm = np.asarray(cp['w'] * cp['mask'], np.float32)       # (cout, cin, 3, 3)
        wm = wm * alpha[layer['target']][:, None, None, None]   # fold BN scale
        cout, cin = wm.shape[0], wm.shape[1]
        if pad_cin_to is not None and cin < pad_cin_to:
            wm = np.concatenate(
                [wm, np.zeros((cout, pad_cin_to - cin, 3, 3), np.float32)], axis=1)
            cin = pad_cin_to
        # column index = tap * cin + c, tap = di*3 + dj  (matches im2col stack)
        return np.transpose(wm, (0, 2, 3, 1)).reshape(cout, 9 * cin)

    fused = {}
    fused['w_in_lgnd'] = jnp.asarray(stacked_w(find('input', 'LGNd'),
                                               pad_cin_to=NCH))
    fused['w_lgnd_p4'] = jnp.asarray(stacked_w(find('LGNd', 'VISp4')))
    # Same-source edges merged on M (output rows): 0..7 / 8..15.
    fused['w_p4_merged'] = jnp.asarray(np.concatenate(
        [stacked_w(find('VISp4', 'VISp2/3')),
         stacked_w(find('VISp4', 'VISp5'))], axis=0))
    fused['w_p23_merged'] = jnp.asarray(np.concatenate(
        [stacked_w(find('VISp2/3', 'VISp5')),
         stacked_w(find('VISp2/3', 'VISl4'))], axis=0))
    fused['w_l4_l23'] = jnp.asarray(stacked_w(find('VISl4', 'VISl2/3')))
    fused['w_l23_l5'] = jnp.asarray(stacked_w(find('VISl2/3', 'VISl5')))
    fused['beta'] = {a: jnp.asarray(beta[a].reshape(-1, 1)) for a in TOP_SORT[1:]}

    # Fold AdaptiveAvgPool2d(4) + flatten + Linear column block per output area.
    P = _adaptive_pool_matrix(VALID, 4)                        # (4, 12)
    poolw = np.zeros((16, BLK2), np.float32)
    for p in range(4):
        for q in range(4):
            for h in range(VALID):
                for w in range(VALID):
                    poolw[p * 4 + q, (h + 1) * BLK + (w + 1)] = P[p, h] * P[q, w]
    wc = np.asarray(params['classifier']['w'], np.float32)     # (10, 256)
    bc = np.asarray(params['classifier']['b'], np.float32)
    # Feature layout fed to the classifier is [later areas | ... | first area]
    # (the reference prepends later areas in the concat loop).
    col0, off = {}, 0
    for area in reversed(OUTPUT_AREAS):
        col0[area] = off
        off += 16 * NCH
    fused['gcat'] = {}
    for area in OUTPUT_AREAS:
        g = np.zeros((BLK2, NCH * NUM_CLASSES), np.float32)
        for k in range(NUM_CLASSES):
            for c in range(NCH):
                wkc = wc[k, col0[area] + c * 16: col0[area] + (c + 1) * 16]
                g[:, k * NCH + c] = poolw.T @ wkc              # (196,)
        fused['gcat'][area] = jnp.asarray(g)
    diag = np.zeros((NCH, NCH * NUM_CLASSES), np.float32)
    hsum = np.zeros((NCH * NUM_CLASSES, NUM_CLASSES), np.float32)
    for k in range(NUM_CLASSES):
        for c in range(NCH):
            diag[c, k * NCH + c] = 1.0
            hsum[k * NCH + c, k] = 1.0
    fused['diag'] = jnp.asarray(diag)
    fused['hsum'] = jnp.asarray(hsum)
    fused['bc'] = jnp.asarray(bc.reshape(1, -1))
    return fused


# ------------------------------ fused Pallas kernel ----------------------------
def _make_fused_kernel(n_in, tile_n, idx):
    mc = tile_n * BLK2

    def kernel(*refs):
        in_refs = refs[:n_in]
        o_ref = refs[n_in]
        slab_a = refs[n_in + 1]
        slab_b = refs[n_in + 2]

        def ld(name):
            return in_refs[idx[name]][...]

        x_ref = in_refs[idx['x']]

        # Zero the guard bands once per grid step; all later stores touch only
        # [GUARD, GUARD+mc), so the guards implement the conv zero padding
        # around / between the per-image 14x14 blocks (safe with "parallel").
        zg = jnp.zeros((NCH, GUARD), jnp.float32)
        for slab in (slab_a, slab_b):
            slab[:, :GUARD] = zg
            slab[:, GUARD + mc:] = zg

        # Interior (12x12 per block) mask: broadcast once, reused as a multiply.
        mask8 = jnp.broadcast_to(ld('mask'), (NCH, mc))

        def im2col(src_ref):
            # Producer-side im2col: 9 lane-shifted windows stacked on the
            # contraction axis -> one (72, mc) operand per source slab.
            parts = [src_ref[:, GUARD + s: GUARD + s + mc] for s in TAP_SHIFTS]
            return jnp.concatenate(parts, axis=0)

        def conv(src_ref, w_name):
            # One MXU dot per (merged) edge: (M, 72) @ (72, mc), f32 accumulate.
            return jnp.dot(ld(w_name), im2col(src_ref),
                           preferred_element_type=jnp.float32)

        def act(pre, b_name):
            # BN scale already folded into the weights; only beta + ReLU left.
            return jnp.maximum(pre + ld(b_name), 0.0)

        def store(slab, val):
            # Aligned partial store of the valid region only (GUARD = 128).
            slab[:, GUARD:GUARD + mc] = val * mask8

        # Classifier operands loaded once.
        diag = ld('diag')                                     # (8, 80)
        hsum = ld('hsum')                                     # (80, 10)

        def classify(val, g_name):
            # Folded AdaptiveAvgPool2d(4) + flatten + Linear column block.
            g = ld(g_name)                                    # (196, 80), hoisted
            rows = []
            for n in range(tile_n):
                s_n = val[:, n * BLK2:(n + 1) * BLK2]         # (8, 196)
                r = jnp.dot(s_n, g, preferred_element_type=jnp.float32)
                u = jnp.sum(r * diag, axis=0, keepdims=True)  # (1, 80)
                rows.append(jnp.dot(u, hsum,
                                    preferred_element_type=jnp.float32))
            return jnp.concatenate(rows, axis=0) if tile_n > 1 else rows[0]

        # ------------------------------ conv DAG ------------------------------
        # input -> LGNd                                        (slab A)
        store(slab_a, act(conv(x_ref, 'w_in_lgnd'), 'b_LGNd'))
        # LGNd -> VISp4                                        (slab B)
        store(slab_b, act(conv(slab_a, 'w_lgnd_p4'), 'b_VISp4'))
        # VISp4 -> {VISp2/3, VISp5 partial}: one merged M=16 dot
        y = conv(slab_b, 'w_p4_merged')
        store(slab_a, act(y[:NCH], 'b_VISp2/3'))               # VISp2/3 -> A
        p5_partial = y[NCH:]
        # VISp2/3 -> {VISp5 partial, VISl4}: one merged M=16 dot
        y = conv(slab_a, 'w_p23_merged')
        visp5 = jnp.maximum(p5_partial + y[:NCH] + ld('b_VISp5'), 0.0)
        logits = ld('bc') + classify(visp5, 'g_VISp5')         # no slab store
        store(slab_b, act(y[NCH:], 'b_VISl4'))                 # VISl4 -> B
        # VISl4 -> VISl2/3                                     (slab A)
        store(slab_a, act(conv(slab_b, 'w_l4_l23'), 'b_VISl2/3'))
        # VISl2/3 -> VISl5 (classifier only; consumed as a value)
        visl5 = jnp.maximum(conv(slab_a, 'w_l23_l5') + ld('b_VISl5'), 0.0)
        logits = logits + classify(visl5, 'g_VISl5')

        o_ref[...] = logits

    return kernel


def mousenet_forward(fused, x_nchw):
    n = x_nchw.shape[0]
    assert x_nchw.shape[1:] == (3, 16, 16)

    # Batch-tiled grid: each grid step handles `tile_n` images.  The tile is
    # small, so per-step VMEM is tiny on every TPU generation (v5e 16 MiB
    # scoped default, v7x 64 MiB physical) and the "parallel" batch axis can
    # be split across TensorCores.
    tile_n = n if n <= 8 else max(t for t in (8, 4, 2, 1) if n % t == 0)
    num_tiles = n // tile_n
    tile_mc = tile_n * BLK2
    width = tile_mc + 2 * GUARD

    # Input slab per tile: channel-major (8, tile_n*196), channels padded
    # 3 -> 8 so the im2col tap stack stays sublane-aligned.  The 14x14 window
    # of input pixels 1..14 is the receptive field of the LGNd outputs that
    # survive the (2, 12, 2, 12) subfield narrowing of the LGNd->VISp4 edge.
    xw = x_nchw[:, :, 1:15, 1:15].astype(jnp.float32)        # (N, 3, 14, 14)
    xw = jnp.pad(xw, ((0, 0), (0, NCH - 3), (0, 0), (0, 0)))  # (N, 8, 14, 14)
    xw = xw.reshape(num_tiles, tile_n, NCH, BLK2)
    xw = jnp.transpose(xw, (0, 2, 1, 3)).reshape(num_tiles, NCH, tile_mc)
    x_slab = jnp.pad(xw, ((0, 0), (0, 0), (GUARD, GUARD)))

    # Interior mask: 1 on the 12x12 valid region of every 14x14 block.
    blk_mask = np.zeros((BLK, BLK), np.float32)
    blk_mask[1:1 + VALID, 1:1 + VALID] = 1.0
    mask = jnp.asarray(np.tile(blk_mask.reshape(-1), tile_n).reshape(1, tile_mc))

    inputs, in_specs, idx = [], [], {}

    def add(name, arr, spec=None):
        idx[name] = len(inputs)
        inputs.append(arr)
        if spec is None:  # whole array, VMEM resident across grid steps
            nd = arr.ndim
            spec = pl.BlockSpec(arr.shape, lambda i, _nd=nd: (0,) * _nd)
        in_specs.append(spec)

    add('x', x_slab, pl.BlockSpec((None, NCH, width), lambda i: (i, 0, 0)))
    add('mask', mask)
    for name in ('w_in_lgnd', 'w_lgnd_p4', 'w_p4_merged', 'w_p23_merged',
                 'w_l4_l23', 'w_l23_l5'):
        add(name, fused[name])
    for area in TOP_SORT[1:]:
        add('b_' + area, fused['beta'][area])
    for area in OUTPUT_AREAS:
        add('g_' + area, fused['gcat'][area])
    add('diag', fused['diag'])
    add('hsum', fused['hsum'])
    add('bc', fused['bc'])

    kernel = _make_fused_kernel(len(inputs), tile_n, idx)
    out = pl.pallas_call(
        kernel,
        out_shape=jax.ShapeDtypeStruct((num_tiles, tile_n, NUM_CLASSES),
                                       jnp.float32),
        grid=(num_tiles,),
        in_specs=in_specs,
        out_specs=pl.BlockSpec((None, tile_n, NUM_CLASSES), lambda i: (i, 0, 0)),
        scratch_shapes=[pltpu.VMEM((NCH, width), jnp.float32) for _ in range(2)],
        compiler_params=pltpu.CompilerParams(
            dimension_semantics=("parallel",)),
    )(*inputs)
    return out.reshape(n, NUM_CLASSES)


# --------------------------- pure-JAX reference check --------------------------
def reference_forward(params, x_nchw):
    """Plain XLA implementation mirroring the PyTorch module semantics."""
    x = x_nchw.astype(jnp.float32)
    calc = {}
    for area in TOP_SORT[1:]:
        acc = None
        for L in LAYERS:
            if L['target'] != area:
                continue
            src = x if L['source'] == 'input' else calc[L['source']]
            left, width, bottom, height = L['sub']
            src = src[:, :, left:left + width, bottom:bottom + height]
            cp = params['convs'][L['source'] + L['target']]
            y = lax.conv_general_dilated(
                src, cp['w'] * cp['mask'],
                window_strides=(L['stride'], L['stride']),
                padding=[(L['padding'], L['padding'])] * 2,
                dimension_numbers=('NCHW', 'OIHW', 'NCHW'),
                precision=lax.Precision.HIGHEST)
            y = y + cp['b'][None, :, None, None]
            acc = y if acc is None else acc + y
        bn = params['bns'][area]
        acc = (acc * bn['scale'][None, :, None, None]
               + bn['shift'][None, :, None, None])
        calc[area] = jnp.maximum(acc, 0.0)
    re = None
    for area in OUTPUT_AREAS:
        a = calc[area]
        nb, c = a.shape[0], a.shape[1]
        pooled = a.reshape(nb, c, 4, 3, 4, 3).mean(axis=(3, 5))   # 12 -> 4 exact
        feat = pooled.reshape(nb, c * 16)
        re = feat if re is None else jnp.concatenate([feat, re], axis=1)
    wc, bc = params['classifier']['w'], params['classifier']['b']
    return re @ wc.T + bc


# ----------------------------------- main --------------------------------------
if __name__ == "__main__":
    params = build_params()
    fused = build_fused_params(params)

    # Primary check: batch = 2 (single grid step).
    key = jax.random.PRNGKey(0)
    x = jax.random.normal(
        key, (2, INPUT_SIZE[0], INPUT_SIZE[1], INPUT_SIZE[2]), jnp.float32)
    fwd = jax.jit(mousenet_forward)
    out = fwd(fused, x)
    jax.block_until_ready(out)
    assert out.shape == (2, NUM_CLASSES)
    assert bool(jnp.all(jnp.isfinite(out)))
    ref = jax.jit(reference_forward)(params, x)
    max_diff = float(jnp.max(jnp.abs(out - ref)))
    assert bool(jnp.allclose(out, ref, atol=5e-2, rtol=5e-2)), max_diff

    # Secondary check: batch = 16 exercises the batch-tiled "parallel" grid
    # (2 tiles of 8 images, scratch-slab reuse across grid steps).
    x2 = jax.random.normal(
        jax.random.PRNGKey(1),
        (16, INPUT_SIZE[0], INPUT_SIZE[1], INPUT_SIZE[2]), jnp.float32)
    out2 = jax.jit(mousenet_forward)(fused, x2)
    jax.block_until_ready(out2)
    ref2 = jax.jit(reference_forward)(params, x2)
    max_diff2 = float(jnp.max(jnp.abs(out2 - ref2)))
    assert bool(jnp.allclose(out2, ref2, atol=5e-2, rtol=5e-2)), max_diff2

    print("KERNEL_OK")
</pallas_src>

<mosaic_0001>
module attributes {stable_mosaic.version = 11 : i64} {
  func.func @kernel(%arg0: i32, %arg1: memref<1x8x648xf32, #tpu.memory_space<vmem>>, %arg2: memref<1x392xf32, #tpu.memory_space<vmem>>, %arg3: memref<8x72xf32, #tpu.memory_space<vmem>>, %arg4: memref<8x72xf32, #tpu.memory_space<vmem>>, %arg5: memref<16x72xf32, #tpu.memory_space<vmem>>, %arg6: memref<16x72xf32, #tpu.memory_space<vmem>>, %arg7: memref<8x72xf32, #tpu.memory_space<vmem>>, %arg8: memref<8x72xf32, #tpu.memory_space<vmem>>, %arg9: memref<8x1xf32, #tpu.memory_space<vmem>>, %arg10: memref<8x1xf32, #tpu.memory_space<vmem>>, %arg11: memref<8x1xf32, #tpu.memory_space<vmem>>, %arg12: memref<8x1xf32, #tpu.memory_space<vmem>>, %arg13: memref<8x1xf32, #tpu.memory_space<vmem>>, %arg14: memref<8x1xf32, #tpu.memory_space<vmem>>, %arg15: memref<8x1xf32, #tpu.memory_space<vmem>>, %arg16: memref<196x80xf32, #tpu.memory_space<vmem>>, %arg17: memref<196x80xf32, #tpu.memory_space<vmem>>, %arg18: memref<8x80xf32, #tpu.memory_space<vmem>>, %arg19: memref<80x10xf32, #tpu.memory_space<vmem>>, %arg20: memref<1x10xf32, #tpu.memory_space<vmem>>, %arg21: memref<1x2x10xf32, #tpu.memory_space<vmem>>, %arg22: memref<8x648xf32, #tpu.memory_space<vmem>>, %arg23: memref<8x648xf32, #tpu.memory_space<vmem>>) attributes {dimension_semantics = [#tpu.dimension_semantics<parallel>], iteration_bounds = array<i64: 1>, scalar_prefetch = 0 : i64, scratch_operands = 2 : i64, tpu.core_type = #tpu.core_type<tc>, window_params = [{transform_indices = @transform_0, window_bounds = array<i64: 1, 8, 648>}, {pipeline_mode = #tpu.pipeline_mode<synchronous>, transform_indices = @transform_1, window_bounds = array<i64: 1, 392>}, {pipeline_mode = #tpu.pipeline_mode<synchronous>, transform_indices = @transform_2, window_bounds = array<i64: 8, 72>}, {pipeline_mode = #tpu.pipeline_mode<synchronous>, transform_indices = @transform_3, window_bounds = array<i64: 8, 72>}, {pipeline_mode = #tpu.pipeline_mode<synchronous>, transform_indices = @transform_4, window_bounds = array<i64: 16, 72>}, {pipeline_mode = #tpu.pipeline_mode<synchronous>, transform_indices = @transform_5, window_bounds = array<i64: 16, 72>}, {pipeline_mode = #tpu.pipeline_mode<synchronous>, transform_indices = @transform_6, window_bounds = array<i64: 8, 72>}, {pipeline_mode = #tpu.pipeline_mode<synchronous>, transform_indices = @transform_7, window_bounds = array<i64: 8, 72>}, {pipeline_mode = #tpu.pipeline_mode<synchronous>, transform_indices = @transform_8, window_bounds = array<i64: 8, 1>}, {pipeline_mode = #tpu.pipeline_mode<synchronous>, transform_indices = @transform_9, window_bounds = array<i64: 8, 1>}, {pipeline_mode = #tpu.pipeline_mode<synchronous>, transform_indices = @transform_10, window_bounds = array<i64: 8, 1>}, {pipeline_mode = #tpu.pipeline_mode<synchronous>, transform_indices = @transform_11, window_bounds = array<i64: 8, 1>}, {pipeline_mode = #tpu.pipeline_mode<synchronous>, transform_indices = @transform_12, window_bounds = array<i64: 8, 1>}, {pipeline_mode = #tpu.pipeline_mode<synchronous>, transform_indices = @transform_13, window_bounds = array<i64: 8, 1>}, {pipeline_mode = #tpu.pipeline_mode<synchronous>, transform_indices = @transform_14, window_bounds = array<i64: 8, 1>}, {pipeline_mode = #tpu.pipeline_mode<synchronous>, transform_indices = @transform_15, window_bounds = array<i64: 196, 80>}, {pipeline_mode = #tpu.pipeline_mode<synchronous>, transform_indices = @transform_16, window_bounds = array<i64: 196, 80>}, {pipeline_mode = #tpu.pipeline_mode<synchronous>, transform_indices = @transform_17, window_bounds = array<i64: 8, 80>}, {pipeline_mode = #tpu.pipeline_mode<synchronous>, transform_indices = @transform_18, window_bounds = array<i64: 80, 10>}, {pipeline_mode = #tpu.pipeline_mode<synchronous>, transform_indices = @transform_19, window_bounds = array<i64: 1, 10>}, {transform_indices = @transform_20, window_bounds = array<i64: 1, 2, 10>}]} {
    %cst = arith.constant 0.000000e+00 : f32
    %0 = vector.broadcast %cst : f32 to vector<8x128xf32>
    %c0 = arith.constant 0 : index
    %c0_0 = arith.constant 0 : index
    %1 = vector.load %arg22[%c0, %c0_0] : memref<8x648xf32, #tpu.memory_space<vmem>>, vector<8x128xf32>
    tpu.vector_store %arg22[%c0, %c0_0], %0 {strides = array<i32>} : memref<8x648xf32, #tpu.memory_space<vmem>>, vector<8x128xf32>,
    %c0_1 = arith.constant 0 : index
    %c520 = arith.constant 520 : index
    %2 = vector.load %arg22[%c0_1, %c520] : memref<8x648xf32, #tpu.memory_space<vmem>>, vector<8x128xf32>
    tpu.vector_store %arg22[%c0_1, %c520], %0 {strides = array<i32>} : memref<8x648xf32, #tpu.memory_space<vmem>>, vector<8x128xf32>,
    %c0_2 = arith.constant 0 : index
    %c0_3 = arith.constant 0 : index
    %3 = vector.load %arg23[%c0_2, %c0_3] : memref<8x648xf32, #tpu.memory_space<vmem>>, vector<8x128xf32>
    tpu.vector_store %arg23[%c0_2, %c0_3], %0 {strides = array<i32>} : memref<8x648xf32, #tpu.memory_space<vmem>>, vector<8x128xf32>,
    %c0_4 = arith.constant 0 : index
    %c520_5 = arith.constant 520 : index
    %4 = vector.load %arg23[%c0_4, %c520_5] : memref<8x648xf32, #tpu.memory_space<vmem>>, vector<8x128xf32>
    tpu.vector_store %arg23[%c0_4, %c520_5], %0 {strides = array<i32>} : memref<8x648xf32, #tpu.memory_space<vmem>>, vector<8x128xf32>,
    %c0_6 = arith.constant 0 : index
    %c0_7 = arith.constant 0 : index
    %5 = vector.load %arg2[%c0_6, %c0_7] : memref<1x392xf32, #tpu.memory_space<vmem>>, vector<1x392xf32>
    %6 = vector.shape_cast %5 : vector<1x392xf32> to vector<1x392xf32>
    %7 = vector.broadcast %6 : vector<1x392xf32> to vector<8x392xf32>
    %c0_8 = arith.constant 0 : index
    %c0_9 = arith.constant 0 : index
    %8 = vector.load %arg18[%c0_8, %c0_9] : memref<8x80xf32, #tpu.memory_space<vmem>>, vector<8x80xf32>
    %c0_10 = arith.constant 0 : index
    %c0_11 = arith.constant 0 : index
    %9 = vector.load %arg19[%c0_10, %c0_11] : memref<80x10xf32, #tpu.memory_space<vmem>>, vector<80x10xf32>
    %c0_12 = arith.constant 0 : index
    %c0_13 = arith.constant 0 : index
    %10 = vector.load %arg3[%c0_12, %c0_13] : memref<8x72xf32, #tpu.memory_space<vmem>>, vector<8x72xf32>
    %c0_14 = arith.constant 0 : index
    %c0_15 = arith.constant 0 : index
    %c113 = arith.constant 113 : index
    %11 = vector.load %arg1[%c0_14, %c0_15, %c113] : memref<1x8x648xf32, #tpu.memory_space<vmem>>, vector<1x8x392xf32>
    %12 = vector.shape_cast %11 : vector<1x8x392xf32> to vector<8x392xf32>
    %c0_16 = arith.constant 0 : index
    %c0_17 = arith.constant 0 : index
    %c114 = arith.constant 114 : index
    %13 = vector.load %arg1[%c0_16, %c0_17, %c114] : memref<1x8x648xf32, #tpu.memory_space<vmem>>, vector<1x8x392xf32>
    %14 = vector.shape_cast %13 : vector<1x8x392xf32> to vector<8x392xf32>
    %c0_18 = arith.constant 0 : index
    %c0_19 = arith.constant 0 : index
    %c115 = arith.constant 115 : index
    %15 = vector.load %arg1[%c0_18, %c0_19, %c115] : memref<1x8x648xf32, #tpu.memory_space<vmem>>, vector<1x8x392xf32>
    %16 = vector.shape_cast %15 : vector<1x8x392xf32> to vector<8x392xf32>
    %c0_20 = arith.constant 0 : index
    %c0_21 = arith.constant 0 : index
    %c127 = arith.constant 127 : index
    %17 = vector.load %arg1[%c0_20, %c0_21, %c127] : memref<1x8x648xf32, #tpu.memory_space<vmem>>, vector<1x8x392xf32>
    %18 = vector.shape_cast %17 : vector<1x8x392xf32> to vector<8x392xf32>
    %c0_22 = arith.constant 0 : index
    %c0_23 = arith.constant 0 : index
    %c128 = arith.constant 128 : index
    %19 = vector.load %arg1[%c0_22, %c0_23, %c128] : memref<1x8x648xf32, #tpu.memory_space<vmem>>, vector<1x8x392xf32>
    %20 = vector.shape_cast %19 : vector<1x8x392xf32> to vector<8x392xf32>
    %c0_24 = arith.constant 0 : index
    %c0_25 = arith.constant 0 : index
    %c129 = arith.constant 129 : index
    %21 = vector.load %arg1[%c0_24, %c0_25, %c129] : memref<1x8x648xf32, #tpu.memory_space<vmem>>, vector<1x8x392xf32>
    %22 = vector.shape_cast %21 : vector<1x8x392xf32> to vector<8x392xf32>
    %c0_26 = arith.constant 0 : index
    %c0_27 = arith.constant 0 : index
    %c141 = arith.constant 141 : index
    %23 = vector.load %arg1[%c0_26, %c0_27, %c141] : memref<1x8x648xf32, #tpu.memory_space<vmem>>, vector<1x8x392xf32>
    %24 = vector.shape_cast %23 : vector<1x8x392xf32> to vector<8x392xf32>
    %c0_28 = arith.constant 0 : index
    %c0_29 = arith.constant 0 : index
    %c142 = arith.constant 142 : index
    %25 = vector.load %arg1[%c0_28, %c0_29, %c142] : memref<1x8x648xf32, #tpu.memory_space<vmem>>, vector<1x8x392xf32>
    %26 = vector.shape_cast %25 : vector<1x8x392xf32> to vector<8x392xf32>
    %c0_30 = arith.constant 0 : index
    %c0_31 = arith.constant 0 : index
    %c143 = arith.constant 143 : index
    %27 = vector.load %arg1[%c0_30, %c0_31, %c143] : memref<1x8x648xf32, #tpu.memory_space<vmem>>, vector<1x8x392xf32>
    %28 = vector.shape_cast %27 : vector<1x8x392xf32> to vector<8x392xf32>
    %29 = tpu.concatenate %12, %14, %16, %18, %20, %22, %24, %26, %28 in 0 : vector<8x392xf32>, vector<8x392xf32>, vector<8x392xf32>, vector<8x392xf32>, vector<8x392xf32>, vector<8x392xf32>, vector<8x392xf32>, vector<8x392xf32>, vector<8x392xf32> -> vector<72x392xf32>
    %cst_32 = arith.constant dense<0.000000e+00> : vector<8x392xf32>
    %30 = tpu.matmul %10, %29, %cst_32 {dimension_numbers = #tpu.dot_dimension_numbers<[1], [0], [0], [1], [0, 0, 1, 1], [], []>} : vector<8x72xf32>, vector<72x392xf32>, vector<8x392xf32> -> vector<8x392xf32>
    %c0_33 = arith.constant 0 : index
    %c0_34 = arith.constant 0 : index
    %31 = vector.load %arg9[%c0_33, %c0_34] : memref<8x1xf32, #tpu.memory_space<vmem>>, vector<8x1xf32>
    %32 = vector.broadcast %31 : vector<8x1xf32> to vector<8x392xf32>
    %33 = arith.addf %30, %32 : vector<8x392xf32>
    %cst_35 = arith.constant 0.000000e+00 : f32
    %34 = vector.broadcast %cst_35 : f32 to vector<8x392xf32>
    %35 = arith.maximumf %33, %34 : vector<8x392xf32>
    %36 = arith.mulf %35, %7 : vector<8x392xf32>
    %c0_36 = arith.constant 0 : index
    %c128_37 = arith.constant 128 : index
    %37 = vector.load %arg22[%c0_36, %c128_37] : memref<8x648xf32, #tpu.memory_space<vmem>>, vector<8x392xf32>
    tpu.vector_store %arg22[%c0_36, %c128_37], %36 {strides = array<i32>} : memref<8x648xf32, #tpu.memory_space<vmem>>, vector<8x392xf32>,
    %c0_38 = arith.constant 0 : index
    %c0_39 = arith.constant 0 : index
    %38 = vector.load %arg4[%c0_38, %c0_39] : memref<8x72xf32, #tpu.memory_space<vmem>>, vector<8x72xf32>
    %c0_40 = arith.constant 0 : index
    %c113_41 = arith.constant 113 : index
    %39 = vector.load %arg22[%c0_40, %c113_41] : memref<8x648xf32, #tpu.memory_space<vmem>>, vector<8x392xf32>
    %c0_42 = arith.constant 0 : index
    %c114_43 = arith.constant 114 : index
    %40 = vector.load %arg22[%c0_42, %c114_43] : memref<8x648xf32, #tpu.memory_space<vmem>>, vector<8x392xf32>
    %c0_44 = arith.constant 0 : index
    %c115_45 = arith.constant 115 : index
    %41 = vector.load %arg22[%c0_44, %c115_45] : memref<8x648xf32, #tpu.memory_space<vmem>>, vector<8x392xf32>
    %c0_46 = arith.constant 0 : index
    %c127_47 = arith.constant 127 : index
    %42 = vector.load %arg22[%c0_46, %c127_47] : memref<8x648xf32, #tpu.memory_space<vmem>>, vector<8x392xf32>
    %c0_48 = arith.constant 0 : index
    %c128_49 = arith.constant 128 : index
    %43 = vector.load %arg22[%c0_48, %c128_49] : memref<8x648xf32, #tpu.memory_space<vmem>>, vector<8x392xf32>
    %c0_50 = arith.constant 0 : index
    %c129_51 = arith.constant 129 : index
    %44 = vector.load %arg22[%c0_50, %c129_51] : memref<8x648xf32, #tpu.memory_space<vmem>>, vector<8x392xf32>
    %c0_52 = arith.constant 0 : index
    %c141_53 = arith.constant 141 : index
    %45 = vector.load %arg22[%c0_52, %c141_53] : memref<8x648xf32, #tpu.memory_space<vmem>>, vector<8x392xf32>
    %c0_54 = arith.constant 0 : index
    %c142_55 = arith.constant 142 : index
    %46 = vector.load %arg22[%c0_54, %c142_55] : memref<8x648xf32, #tpu.memory_space<vmem>>, vector<8x392xf32>
    %c0_56 = arith.constant 0 : index
    %c143_57 = arith.constant 143 : index
    %47 = vector.load %arg22[%c0_56, %c143_57] : memref<8x648xf32, #tpu.memory_space<vmem>>, vector<8x392xf32>
    %48 = tpu.concatenate %39, %40, %41, %42, %43, %44, %45, %46, %47 in 0 : vector<8x392xf32>, vector<8x392xf32>, vector<8x392xf32>, vector<8x392xf32>, vector<8x392xf32>, vector<8x392xf32>, vector<8x392xf32>, vector<8x392xf32>, vector<8x392xf32> -> vector<72x392xf32>
    %cst_58 = arith.constant dense<0.000000e+00> : vector<8x392xf32>
    %49 = tpu.matmul %38, %48, %cst_58 {dimension_numbers = #tpu.dot_dimension_numbers<[1], [0], [0], [1], [0, 0, 1, 1], [], []>} : vector<8x72xf32>, vector<72x392xf32>, vector<8x392xf32> -> vector<8x392xf32>
    %c0_59 = arith.constant 0 : index
    %c0_60 = arith.constant 0 : index
    %50 = vector.load %arg10[%c0_59, %c0_60] : memref<8x1xf32, #tpu.memory_space<vmem>>, vector<8x1xf32>
    %51 = vector.broadcast %50 : vector<8x1xf32> to vector<8x392xf32>
    %52 = arith.addf %49, %51 : vector<8x392xf32>
    %cst_61 = arith.constant 0.000000e+00 : f32
    %53 = vector.broadcast %cst_61 : f32 to vector<8x392xf32>
    %54 = arith.maximumf %52, %53 : vector<8x392xf32>
    %55 = arith.mulf %54, %7 : vector<8x392xf32>
    %c0_62 = arith.constant 0 : index
    %c128_63 = arith.constant 128 : index
    %56 = vector.load %arg23[%c0_62, %c128_63] : memref<8x648xf32, #tpu.memory_space<vmem>>, vector<8x392xf32>
    tpu.vector_store %arg23[%c0_62, %c128_63], %55 {strides = array<i32>} : memref<8x648xf32, #tpu.memory_space<vmem>>, vector<8x392xf32>,
    %c0_64 = arith.constant 0 : index
    %c0_65 = arith.constant 0 : index
    %57 = vector.load %arg5[%c0_64, %c0_65] : memref<16x72xf32, #tpu.memory_space<vmem>>, vector<16x72xf32>
    %c0_66 = arith.constant 0 : index
    %c113_67 = arith.constant 113 : index
    %58 = vector.load %arg23[%c0_66, %c113_67] : memref<8x648xf32, #tpu.memory_space<vmem>>, vector<8x392xf32>
    %c0_68 = arith.constant 0 : index
    %c114_69 = arith.constant 114 : index
    %59 = vector.load %arg23[%c0_68, %c114_69] : memref<8x648xf32, #tpu.memory_space<vmem>>, vector<8x392xf32>
    %c0_70 = arith.constant 0 : index
    %c115_71 = arith.constant 115 : index
    %60 = vector.load %arg23[%c0_70, %c115_71] : memref<8x648xf32, #tpu.memory_space<vmem>>, vector<8x392xf32>
    %c0_72 = arith.constant 0 : index
    %c127_73 = arith.constant 127 : index
    %61 = vector.load %arg23[%c0_72, %c127_73] : memref<8x648xf32, #tpu.memory_space<vmem>>, vector<8x392xf32>
    %c0_74 = arith.constant 0 : index
    %c128_75 = arith.constant 128 : index
    %62 = vector.load %arg23[%c0_74, %c128_75] : memref<8x648xf32, #tpu.memory_space<vmem>>, vector<8x392xf32>
    %c0_76 = arith.constant 0 : index
    %c129_77 = arith.constant 129 : index
    %63 = vector.load %arg23[%c0_76, %c129_77] : memref<8x648xf32, #tpu.memory_space<vmem>>, vector<8x392xf32>
    %c0_78 = arith.constant 0 : index
    %c141_79 = arith.constant 141 : index
    %64 = vector.load %arg23[%c0_78, %c141_79] : memref<8x648xf32, #tpu.memory_space<vmem>>, vector<8x392xf32>
    %c0_80 = arith.constant 0 : index
    %c142_81 = arith.constant 142 : index
    %65 = vector.load %arg23[%c0_80, %c142_81] : memref<8x648xf32, #tpu.memory_space<vmem>>, vector<8x392xf32>
    %c0_82 = arith.constant 0 : index
    %c143_83 = arith.constant 143 : index
    %66 = vector.load %arg23[%c0_82, %c143_83] : memref<8x648xf32, #tpu.memory_space<vmem>>, vector<8x392xf32>
    %67 = tpu.concatenate %58, %59, %60, %61, %62, %63, %64, %65, %66 in 0 : vector<8x392xf32>, vector<8x392xf32>, vector<8x392xf32>, vector<8x392xf32>, vector<8x392xf32>, vector<8x392xf32>, vector<8x392xf32>, vector<8x392xf32>, vector<8x392xf32> -> vector<72x392xf32>
    %cst_84 = arith.constant dense<0.000000e+00> : vector<16x392xf32>
    %68 = tpu.matmul %57, %67, %cst_84 {dimension_numbers = #tpu.dot_dimension_numbers<[1], [0], [0], [1], [0, 0, 1, 1], [], []>} : vector<16x72xf32>, vector<72x392xf32>, vector<16x392xf32> -> vector<16x392xf32>
    %69 = vector.extract_strided_slice %68 {offsets = [0, 0], sizes = [8, 392], strides = [1, 1]} : vector<16x392xf32> to vector<8x392xf32>
    %c0_85 = arith.constant 0 : index
    %c0_86 = arith.constant 0 : index
    %70 = vector.load %arg11[%c0_85, %c0_86] : memref<8x1xf32, #tpu.memory_space<vmem>>, vector<8x1xf32>
    %71 = vector.broadcast %70 : vector<8x1xf32> to vector<8x392xf32>
    %72 = arith.addf %69, %71 : vector<8x392xf32>
    %cst_87 = arith.constant 0.000000e+00 : f32
    %73 = vector.broadcast %cst_87 : f32 to vector<8x392xf32>
    %74 = arith.maximumf %72, %73 : vector<8x392xf32>
    %75 = arith.mulf %74, %7 : vector<8x392xf32>
    %c0_88 = arith.constant 0 : index
    %c128_89 = arith.constant 128 : index
    %76 = vector.load %arg22[%c0_88, %c128_89] : memref<8x648xf32, #tpu.memory_space<vmem>>, vector<8x392xf32>
    tpu.vector_store %arg22[%c0_88, %c128_89], %75 {strides = array<i32>} : memref<8x648xf32, #tpu.memory_space<vmem>>, vector<8x392xf32>,
    %77 = vector.extract_strided_slice %68 {offsets = [8, 0], sizes = [8, 392], strides = [1, 1]} : vector<16x392xf32> to vector<8x392xf32>
    %c0_90 = arith.constant 0 : index
    %c0_91 = arith.constant 0 : index
    %78 = vector.load %arg6[%c0_90, %c0_91] : memref<16x72xf32, #tpu.memory_space<vmem>>, vector<16x72xf32>
    %c0_92 = arith.constant 0 : index
    %c113_93 = arith.constant 113 : index
    %79 = vector.load %arg22[%c0_92, %c113_93] : memref<8x648xf32, #tpu.memory_space<vmem>>, vector<8x392xf32>
    %c0_94 = arith.constant 0 : index
    %c114_95 = arith.constant 114 : index
    %80 = vector.load %arg22[%c0_94, %c114_95] : memref<8x648xf32, #tpu.memory_space<vmem>>, vector<8x392xf32>
    %c0_96 = arith.constant 0 : index
    %c115_97 = arith.constant 115 : index
    %81 = vector.load %arg22[%c0_96, %c115_97] : memref<8x648xf32, #tpu.memory_space<vmem>>, vector<8x392xf32>
    %c0_98 = arith.constant 0 : index
    %c127_99 = arith.constant 127 : index
    %82 = vector.load %arg22[%c0_98, %c127_99] : memref<8x648xf32, #tpu.memory_space<vmem>>, vector<8x392xf32>
    %c0_100 = arith.constant 0 : index
    %c128_101 = arith.constant 128 : index
    %83 = vector.load %arg22[%c0_100, %c128_101] : memref<8x648xf32, #tpu.memory_space<vmem>>, vector<8x392xf32>
    %c0_102 = arith.constant 0 : index
    %c129_103 = arith.constant 129 : index
    %84 = vector.load %arg22[%c0_102, %c129_103] : memref<8x648xf32, #tpu.memory_space<vmem>>, vector<8x392xf32>
    %c0_104 = arith.constant 0 : index
    %c141_105 = arith.constant 141 : index
    %85 = vector.load %arg22[%c0_104, %c141_105] : memref<8x648xf32, #tpu.memory_space<vmem>>, vector<8x392xf32>
    %c0_106 = arith.constant 0 : index
    %c142_107 = arith.constant 142 : index
    %86 = vector.load %arg22[%c0_106, %c142_107] : memref<8x648xf32, #tpu.memory_space<vmem>>, vector<8x392xf32>
    %c0_108 = arith.constant 0 : index
    %c143_109 = arith.constant 143 : index
    %87 = vector.load %arg22[%c0_108, %c143_109] : memref<8x648xf32, #tpu.memory_space<vmem>>, vector<8x392xf32>
    %88 = tpu.concatenate %79, %80, %81, %82, %83, %84, %85, %86, %87 in 0 : vector<8x392xf32>, vector<8x392xf32>, vector<8x392xf32>, vector<8x392xf32>, vector<8x392xf32>, vector<8x392xf32>, vector<8x392xf32>, vector<8x392xf32>, vector<8x392xf32> -> vector<72x392xf32>
    %cst_110 = arith.constant dense<0.000000e+00> : vector<16x392xf32>
    %89 = tpu.matmul %78, %88, %cst_110 {dimension_numbers = #tpu.dot_dimension_numbers<[1], [0], [0], [1], [0, 0, 1, 1], [], []>} : vector<16x72xf32>, vector<72x392xf32>, vector<16x392xf32> -> vector<16x392xf32>
    %90 = vector.extract_strided_slice %89 {offsets = [0, 0], sizes = [8, 392], strides = [1, 1]} : vector<16x392xf32> to vector<8x392xf32>
    %91 = arith.addf %77, %90 : vector<8x392xf32>
    %c0_111 = arith.constant 0 : index
    %c0_112 = arith.constant 0 : index
    %92 = vector.load %arg12[%c0_111, %c0_112] : memref<8x1xf32, #tpu.memory_space<vmem>>, vector<8x1xf32>
    %93 = vector.broadcast %92 : vector<8x1xf32> to vector<8x392xf32>
    %94 = arith.addf %91, %93 : vector<8x392xf32>
    %cst_113 = arith.constant 0.000000e+00 : f32
    %95 = vector.broadcast %cst_113 : f32 to vector<8x392xf32>
    %96 = arith.maximumf %94, %95 : vector<8x392xf32>
    %c0_114 = arith.constant 0 : index
    %c0_115 = arith.constant 0 : index
    %97 = vector.load %arg20[%c0_114, %c0_115] : memref<1x10xf32, #tpu.memory_space<vmem>>, vector<1x10xf32>
    %c0_116 = arith.constant 0 : index
    %c0_117 = arith.constant 0 : index
    %98 = vector.load %arg16[%c0_116, %c0_117] : memref<196x80xf32, #tpu.memory_space<vmem>>, vector<196x80xf32>
    %99 = vector.extract_strided_slice %96 {offsets = [0, 0], sizes = [8, 196], strides = [1, 1]} : vector<8x392xf32> to vector<8x196xf32>
    %cst_118 = arith.constant dense<0.000000e+00> : vector<8x80xf32>
    %100 = tpu.matmul %99, %98, %cst_118 {dimension_numbers = #tpu.dot_dimension_numbers<[1], [0], [0], [1], [0, 0, 1, 1], [], []>} : vector<8x196xf32>, vector<196x80xf32>, vector<8x80xf32> -> vector<8x80xf32>
    %101 = arith.mulf %100, %8 : vector<8x80xf32>
    %cst_119 = arith.constant dense<0.000000e+00> : vector<80xf32>
    %102 = vector.multi_reduction <add>, %101, %cst_119 [0] : vector<8x80xf32> to vector<80xf32>
    %103 = vector.shape_cast %102 : vector<80xf32> to vector<1x80xf32>
    %cst_120 = arith.constant dense<0.000000e+00> : vector<1x10xf32>
    %104 = tpu.matmul %103, %9, %cst_120 {dimension_numbers = #tpu.dot_dimension_numbers<[1], [0], [0], [1], [0, 0, 1, 1], [], []>} : vector<1x80xf32>, vector<80x10xf32>, vector<1x10xf32> -> vector<1x10xf32>
    %105 = vector.extract_strided_slice %96 {offsets = [0, 196], sizes = [8, 196], strides = [1, 1]} : vector<8x392xf32> to vector<8x196xf32>
    %cst_121 = arith.constant dense<0.000000e+00> : vector<8x80xf32>
    %106 = tpu.matmul %105, %98, %cst_121 {dimension_numbers = #tpu.dot_dimension_numbers<[1], [0], [0], [1], [0, 0, 1, 1], [], []>} : vector<8x196xf32>, vector<196x80xf32>, vector<8x80xf32> -> vector<8x80xf32>
    %107 = arith.mulf %106, %8 : vector<8x80xf32>
    %cst_122 = arith.constant dense<0.000000e+00> : vector<80xf32>
    %108 = vector.multi_reduction <add>, %107, %cst_122 [0] : vector<8x80xf32> to vector<80xf32>
    %109 = vector.shape_cast %108 : vector<80xf32> to vector<1x80xf32>
    %cst_123 = arith.constant dense<0.000000e+00> : vector<1x10xf32>
    %110 = tpu.matmul %109, %9, %cst_123 {dimension_numbers = #tpu.dot_dimension_numbers<[1], [0], [0], [1], [0, 0, 1, 1], [], []>} : vector<1x80xf32>, vector<80x10xf32>, vector<1x10xf32> -> vector<1x10xf32>
    %111 = tpu.concatenate %104, %110 in 0 : vector<1x10xf32>, vector<1x10xf32> -> vector<2x10xf32>
    %112 = vector.broadcast %97 : vector<1x10xf32> to vector<2x10xf32>
    %113 = arith.addf %112, %111 : vector<2x10xf32>
    %114 = vector.extract_strided_slice %89 {offsets = [8, 0], sizes = [8, 392], strides = [1, 1]} : vector<16x392xf32> to vector<8x392xf32>
    %c0_124 = arith.constant 0 : index
    %c0_125 = arith.constant 0 : index
    %115 = vector.load %arg13[%c0_124, %c0_125] : memref<8x1xf32, #tpu.memory_space<vmem>>, vector<8x1xf32>
    %116 = vector.broadcast %115 : vector<8x1xf32> to vector<8x392xf32>
    %117 = arith.addf %114, %116 : vector<8x392xf32>
    %cst_126 = arith.constant 0.000000e+00 : f32
    %118 = vector.broadcast %cst_126 : f32 to vector<8x392xf32>
    %119 = arith.maximumf %117, %118 : vector<8x392xf32>
    %120 = arith.mulf %119, %7 : vector<8x392xf32>
    %c0_127 = arith.constant 0 : index
    %c128_128 = arith.constant 128 : index
    %121 = vector.load %arg23[%c0_127, %c128_128] : memref<8x648xf32, #tpu.memory_space<vmem>>, vector<8x392xf32>
    tpu.vector_store %arg23[%c0_127, %c128_128], %120 {strides = array<i32>} : memref<8x648xf32, #tpu.memory_space<vmem>>, vector<8x392xf32>,
    %c0_129 = arith.constant 0 : index
    %c0_130 = arith.constant 0 : index
    %122 = vector.load %arg7[%c0_129, %c0_130] : memref<8x72xf32, #tpu.memory_space<vmem>>, vector<8x72xf32>
    %c0_131 = arith.constant 0 : index
    %c113_132 = arith.constant 113 : index
    %123 = vector.load %arg23[%c0_131, %c113_132] : memref<8x648xf32, #tpu.memory_space<vmem>>, vector<8x392xf32>
    %c0_133 = arith.constant 0 : index
    %c114_134 = arith.constant 114 : index
    %124 = vector.load %arg23[%c0_133, %c114_134] : memref<8x648xf32, #tpu.memory_space<vmem>>, vector<8x392xf32>
    %c0_135 = arith.constant 0 : index
    %c115_136 = arith.constant 115 : index
    %125 = vector.load %arg23[%c0_135, %c115_136] : memref<8x648xf32, #tpu.memory_space<vmem>>, vector<8x392xf32>
    %c0_137 = arith.constant 0 : index
    %c127_138 = arith.constant 127 : index
    %126 = vector.load %arg23[%c0_137, %c127_138] : memref<8x648xf32, #tpu.memory_space<vmem>>, vector<8x392xf32>
    %c0_139 = arith.constant 0 : index
    %c128_140 = arith.constant 128 : index
    %127 = vector.load %arg23[%c0_139, %c128_140] : memref<8x648xf32, #tpu.memory_space<vmem>>, vector<8x392xf32>
    %c0_141 = arith.constant 0 : index
    %c129_142 = arith.constant 129 : index
    %128 = vector.load %arg23[%c0_141, %c129_142] : memref<8x648xf32, #tpu.memory_space<vmem>>, vector<8x392xf32>
    %c0_143 = arith.constant 0 : index
    %c141_144 = arith.constant 141 : index
    %129 = vector.load %arg23[%c0_143, %c141_144] : memref<8x648xf32, #tpu.memory_space<vmem>>, vector<8x392xf32>
    %c0_145 = arith.constant 0 : index
    %c142_146 = arith.constant 142 : index
    %130 = vector.load %arg23[%c0_145, %c142_146] : memref<8x648xf32, #tpu.memory_space<vmem>>, vector<8x392xf32>
    %c0_147 = arith.constant 0 : index
    %c143_148 = arith.constant 143 : index
    %131 = vector.load %arg23[%c0_147, %c143_148] : memref<8x648xf32, #tpu.memory_space<vmem>>, vector<8x392xf32>
    %132 = tpu.concatenate %123, %124, %125, %126, %127, %128, %129, %130, %131 in 0 : vector<8x392xf32>, vector<8x392xf32>, vector<8x392xf32>, vector<8x392xf32>, vector<8x392xf32>, vector<8x392xf32>, vector<8x392xf32>, vector<8x392xf32>, vector<8x392xf32> -> vector<72x392xf32>
    %cst_149 = arith.constant dense<0.000000e+00> : vector<8x392xf32>
    %133 = tpu.matmul %122, %132, %cst_149 {dimension_numbers = #tpu.dot_dimension_numbers<[1], [0], [0], [1], [0, 0, 1, 1], [], []>} : vector<8x72xf32>, vector<72x392xf32>, vector<8x392xf32> -> vector<8x392xf32>
    %c0_150 = arith.constant 0 : index
    %c0_151 = arith.constant 0 : index
    %134 = vector.load %arg14[%c0_150, %c0_151] : memref<8x1xf32, #tpu.memory_space<vmem>>, vector<8x1xf32>
    %135 = vector.broadcast %134 : vector<8x1xf32> to vector<8x392xf32>
    %136 = arith.addf %133, %135 : vector<8x392xf32>
    %cst_152 = arith.constant 0.000000e+00 : f32
    %137 = vector.broadcast %cst_152 : f32 to vector<8x392xf32>
    %138 = arith.maximumf %136, %137 : vector<8x392xf32>
    %139 = arith.mulf %138, %7 : vector<8x392xf32>
    %c0_153 = arith.constant 0 : index
    %c128_154 = arith.constant 128 : index
    %140 = vector.load %arg22[%c0_153, %c128_154] : memref<8x648xf32, #tpu.memory_space<vmem>>, vector<8x392xf32>
    tpu.vector_store %arg22[%c0_153, %c128_154], %139 {strides = array<i32>} : memref<8x648xf32, #tpu.memory_space<vmem>>, vector<8x392xf32>,
    %c0_155 = arith.constant 0 : index
    %c0_156 = arith.constant 0 : index
    %141 = vector.load %arg8[%c0_155, %c0_156] : memref<8x72xf32, #tpu.memory_space<vmem>>, vector<8x72xf32>
    %c0_157 = arith.constant 0 : index
    %c113_158 = arith.constant 113 : index
    %142 = vector.load %arg22[%c0_157, %c113_158] : memref<8x648xf32, #tpu.memory_space<vmem>>, vector<8x392xf32>
    %c0_159 = arith.constant 0 : index
    %c114_160 = arith.constant 114 : index
    %143 = vector.load %arg22[%c0_159, %c114_160] : memref<8x648xf32, #tpu.memory_space<vmem>>, vector<8x392xf32>
    %c0_161 = arith.constant 0 : index
    %c115_162 = arith.constant 115 : index
    %144 = vector.load %arg22[%c0_161, %c115_162] : memref<8x648xf32, #tpu.memory_space<vmem>>, vector<8x392xf32>
    %c0_163 = arith.constant 0 : index
    %c127_164 = arith.constant 127 : index
    %145 = vector.load %arg22[%c0_163, %c127_164] : memref<8x648xf32, #tpu.memory_space<vmem>>, vector<8x392xf32>
    %c0_165 = arith.constant 0 : index
    %c128_166 = arith.constant 128 : index
    %146 = vector.load %arg22[%c0_165, %c128_166] : memref<8x648xf32, #tpu.memory_space<vmem>>, vector<8x392xf32>
    %c0_167 = arith.constant 0 : index
    %c129_168 = arith.constant 129 : index
    %147 = vector.load %arg22[%c0_167, %c129_168] : memref<8x648xf32, #tpu.memory_space<vmem>>, vector<8x392xf32>
    %c0_169 = arith.constant 0 : index
    %c141_170 = arith.constant 141 : index
    %148 = vector.load %arg22[%c0_169, %c141_170] : memref<8x648xf32, #tpu.memory_space<vmem>>, vector<8x392xf32>
    %c0_171 = arith.constant 0 : index
    %c142_172 = arith.constant 142 : index
    %149 = vector.load %arg22[%c0_171, %c142_172] : memref<8x648xf32, #tpu.memory_space<vmem>>, vector<8x392xf32>
    %c0_173 = arith.constant 0 : index
    %c143_174 = arith.constant 143 : index
    %150 = vector.load %arg22[%c0_173, %c143_174] : memref<8x648xf32, #tpu.memory_space<vmem>>, vector<8x392xf32>
    %151 = tpu.concatenate %142, %143, %144, %145, %146, %147, %148, %149, %150 in 0 : vector<8x392xf32>, vector<8x392xf32>, vector<8x392xf32>, vector<8x392xf32>, vector<8x392xf32>, vector<8x392xf32>, vector<8x392xf32>, vector<8x392xf32>, vector<8x392xf32> -> vector<72x392xf32>
    %cst_175 = arith.constant dense<0.000000e+00> : vector<8x392xf32>
    %152 = tpu.matmul %141, %151, %cst_175 {dimension_numbers = #tpu.dot_dimension_numbers<[1], [0], [0], [1], [0, 0, 1, 1], [], []>} : vector<8x72xf32>, vector<72x392xf32>, vector<8x392xf32> -> vector<8x392xf32>
    %c0_176 = arith.constant 0 : index
    %c0_177 = arith.constant 0 : index
    %153 = vector.load %arg15[%c0_176, %c0_177] : memref<8x1xf32, #tpu.memory_space<vmem>>, vector<8x1xf32>
    %154 = vector.broadcast %153 : vector<8x1xf32> to vector<8x392xf32>
    %155 = arith.addf %152, %154 : vector<8x392xf32>
    %cst_178 = arith.constant 0.000000e+00 : f32
    %156 = vector.broadcast %cst_178 : f32 to vector<8x392xf32>
    %157 = arith.maximumf %155, %156 : vector<8x392xf32>
    %c0_179 = arith.constant 0 : index
    %c0_180 = arith.constant 0 : index
    %158 = vector.load %arg17[%c0_179, %c0_180] : memref<196x80xf32, #tpu.memory_space<vmem>>, vector<196x80xf32>
    %159 = vector.extract_strided_slice %157 {offsets = [0, 0], sizes = [8, 196], strides = [1, 1]} : vector<8x392xf32> to vector<8x196xf32>
    %cst_181 = arith.constant dense<0.000000e+00> : vector<8x80xf32>
    %160 = tpu.matmul %159, %158, %cst_181 {dimension_numbers = #tpu.dot_dimension_numbers<[1], [0], [0], [1], [0, 0, 1, 1], [], []>} : vector<8x196xf32>, vector<196x80xf32>, vector<8x80xf32> -> vector<8x80xf32>
    %161 = arith.mulf %160, %8 : vector<8x80xf32>
    %cst_182 = arith.constant dense<0.000000e+00> : vector<80xf32>
    %162 = vector.multi_reduction <add>, %161, %cst_182 [0] : vector<8x80xf32> to vector<80xf32>
    %163 = vector.shape_cast %162 : vector<80xf32> to vector<1x80xf32>
    %cst_183 = arith.constant dense<0.000000e+00> : vector<1x10xf32>
    %164 = tpu.matmul %163, %9, %cst_183 {dimension_numbers = #tpu.dot_dimension_numbers<[1], [0], [0], [1], [0, 0, 1, 1], [], []>} : vector<1x80xf32>, vector<80x10xf32>, vector<1x10xf32> -> vector<1x10xf32>
    %165 = vector.extract_strided_slice %157 {offsets = [0, 196], sizes = [8, 196], strides = [1, 1]} : vector<8x392xf32> to vector<8x196xf32>
    %cst_184 = arith.constant dense<0.000000e+00> : vector<8x80xf32>
    %166 = tpu.matmul %165, %158, %cst_184 {dimension_numbers = #tpu.dot_dimension_numbers<[1], [0], [0], [1], [0, 0, 1, 1], [], []>} : vector<8x196xf32>, vector<196x80xf32>, vector<8x80xf32> -> vector<8x80xf32>
    %167 = arith.mulf %166, %8 : vector<8x80xf32>
    %cst_185 = arith.constant dense<0.000000e+00> : vector<80xf32>
    %168 = vector.multi_reduction <add>, %167, %cst_185 [0] : vector<8x80xf32> to vector<80xf32>
    %169 = vector.shape_cast %168 : vector<80xf32> to vector<1x80xf32>
    %cst_186 = arith.constant dense<0.000000e+00> : vector<1x10xf32>
    %170 = tpu.matmul %169, %9, %cst_186 {dimension_numbers = #tpu.dot_dimension_numbers<[1], [0], [0], [1], [0, 0, 1, 1], [], []>} : vector<1x80xf32>, vector<80x10xf32>, vector<1x10xf32> -> vector<1x10xf32>
    %171 = tpu.concatenate %164, %170 in 0 : vector<1x10xf32>, vector<1x10xf32> -> vector<2x10xf32>
    %172 = arith.addf %113, %171 : vector<2x10xf32>
    %c0_187 = arith.constant 0 : index
    %c0_188 = arith.constant 0 : index
    %c0_189 = arith.constant 0 : index
    %173 = vector.load %arg21[%c0_187, %c0_188, %c0_189] : memref<1x2x10xf32, #tpu.memory_space<vmem>>, vector<1x2x10xf32>
    %174 = vector.shape_cast %173 : vector<1x2x10xf32> to vector<2x10xf32>
    %175 = vector.shape_cast %172 : vector<2x10xf32> to vector<1x2x10xf32>
    tpu.vector_store %arg21[%c0_187, %c0_188, %c0_189], %175 {strides = array<i32>} : memref<1x2x10xf32, #tpu.memory_space<vmem>>, vector<1x2x10xf32>,
    return
  }
  func.func @transform_0(%arg0: i32) -> (i32, i32, i32) {
    %c0_i32 = arith.constant 0 : i32
    %c0_i32_0 = arith.constant 0 : i32
    %c0_i32_1 = arith.constant 0 : i32
    return %arg0, %c0_i32, %c0_i32_0 : i32, i32, i32
  }
  func.func @transform_1(%arg0: i32) -> (i32, i32) {
    %c0_i32 = arith.constant 0 : i32
    %c0_i32_0 = arith.constant 0 : i32
    %c0_i32_1 = arith.constant 0 : i32
    return %c0_i32, %c0_i32_0 : i32, i32
  }
  func.func @transform_2(%arg0: i32) -> (i32, i32) {
    %c0_i32 = arith.constant 0 : i32
    %c0_i32_0 = arith.constant 0 : i32
    %c0_i32_1 = arith.constant 0 : i32
    return %c0_i32, %c0_i32_0 : i32, i32
  }
  func.func @transform_3(%arg0: i32) -> (i32, i32) {
    %c0_i32 = arith.constant 0 : i32
    %c0_i32_0 = arith.constant 0 : i32
    %c0_i32_1 = arith.constant 0 : i32
    return %c0_i32, %c0_i32_0 : i32, i32
  }
  func.func @transform_4(%arg0: i32) -> (i32, i32) {
    %c0_i32 = arith.constant 0 : i32
    %c0_i32_0 = arith.constant 0 : i32
    %c0_i32_1 = arith.constant 0 : i32
    return %c0_i32, %c0_i32_0 : i32, i32
  }
  func.func @transform_5(%arg0: i32) -> (i32, i32) {
    %c0_i32 = arith.constant 0 : i32
    %c0_i32_0 = arith.constant 0 : i32
    %c0_i32_1 = arith.constant 0 : i32
    return %c0_i32, %c0_i32_0 : i32, i32
  }
  func.func @transform_6(%arg0: i32) -> (i32, i32) {
    %c0_i32 = arith.constant 0 : i32
    %c0_i32_0 = arith.constant 0 : i32
    %c0_i32_1 = arith.constant 0 : i32
    return %c0_i32, %c0_i32_0 : i32, i32
  }
  func.func @transform_7(%arg0: i32) -> (i32, i32) {
    %c0_i32 = arith.constant 0 : i32
    %c0_i32_0 = arith.constant 0 : i32
    %c0_i32_1 = arith.constant 0 : i32
    return %c0_i32, %c0_i32_0 : i32, i32
  }
  func.func @transform_8(%arg0: i32) -> (i32, i32) {
    %c0_i32 = arith.constant 0 : i32
    %c0_i32_0 = arith.constant 0 : i32
    %c0_i32_1 = arith.constant 0 : i32
    return %c0_i32, %c0_i32_0 : i32, i32
  }
  func.func @transform_9(%arg0: i32) -> (i32, i32) {
    %c0_i32 = arith.constant 0 : i32
    %c0_i32_0 = arith.constant 0 : i32
    %c0_i32_1 = arith.constant 0 : i32
    return %c0_i32, %c0_i32_0 : i32, i32
  }
  func.func @transform_10(%arg0: i32) -> (i32, i32) {
    %c0_i32 = arith.constant 0 : i32
    %c0_i32_0 = arith.constant 0 : i32
    %c0_i32_1 = arith.constant 0 : i32
    return %c0_i32, %c0_i32_0 : i32, i32
  }
  func.func @transform_11(%arg0: i32) -> (i32, i32) {
    %c0_i32 = arith.constant 0 : i32
    %c0_i32_0 = arith.constant 0 : i32
    %c0_i32_1 = arith.constant 0 : i32
    return %c0_i32, %c0_i32_0 : i32, i32
  }
  func.func @transform_12(%arg0: i32) -> (i32, i32) {
    %c0_i32 = arith.constant 0 : i32
    %c0_i32_0 = arith.constant 0 : i32
    %c0_i32_1 = arith.constant 0 : i32
    return %c0_i32, %c0_i32_0 : i32, i32
  }
  func.func @transform_13(%arg0: i32) -> (i32, i32) {
    %c0_i32 = arith.constant 0 : i32
    %c0_i32_0 = arith.constant 0 : i32
    %c0_i32_1 = arith.constant 0 : i32
    return %c0_i32, %c0_i32_0 : i32, i32
  }
  func.func @transform_14(%arg0: i32) -> (i32, i32) {
    %c0_i32 = arith.constant 0 : i32
    %c0_i32_0 = arith.constant 0 : i32
    %c0_i32_1 = arith.constant 0 : i32
    return %c0_i32, %c0_i32_0 : i32, i32
  }
  func.func @transform_15(%arg0: i32) -> (i32, i32) {
    %c0_i32 = arith.constant 0 : i32
    %c0_i32_0 = arith.constant 0 : i32
    %c0_i32_1 = arith.constant 0 : i32
    return %c0_i32, %c0_i32_0 : i32, i32
  }
  func.func @transform_16(%arg0: i32) -> (i32, i32) {
    %c0_i32 = arith.constant 0 : i32
    %c0_i32_0 = arith.constant 0 : i32
    %c0_i32_1 = arith.constant 0 : i32
    return %c0_i32, %c0_i32_0 : i32, i32
  }
  func.func @transform_17(%arg0: i32) -> (i32, i32) {
    %c0_i32 = arith.constant 0 : i32
    %c0_i32_0 = arith.constant 0 : i32
    %c0_i32_1 = arith.constant 0 : i32
    return %c0_i32, %c0_i32_0 : i32, i32
  }
  func.func @transform_18(%arg0: i32) -> (i32, i32) {
    %c0_i32 = arith.constant 0 : i32
    %c0_i32_0 = arith.constant 0 : i32
    %c0_i32_1 = arith.constant 0 : i32
    return %c0_i32, %c0_i32_0 : i32, i32
  }
  func.func @transform_19(%arg0: i32) -> (i32, i32) {
    %c0_i32 = arith.constant 0 : i32
    %c0_i32_0 = arith.constant 0 : i32
    %c0_i32_1 = arith.constant 0 : i32
    return %c0_i32, %c0_i32_0 : i32, i32
  }
  func.func @transform_20(%arg0: i32) -> (i32, i32, i32) {
    %c0_i32 = arith.constant 0 : i32
    %c0_i32_0 = arith.constant 0 : i32
    %c0_i32_1 = arith.constant 0 : i32
    return %arg0, %c0_i32, %c0_i32_0 : i32, i32, i32
  }
}

</mosaic_0001>

<llo_original>
// kernel: mousenet_forward.1
$region0: #{mousenet_forward.1}
  #allocation0 [shape = 'u32[]', space=smem, size = 0x4, offset = 0x4, fixed_abs, tag = 'smem constant byte address 0x4 - core index']
  #allocation1 [shape = 'u32[144,128]{1,0:T(1,128)}', space=vmem, size = 0x12000, scoped, tag = 'internal scratch']
  #allocation2 [shape = 'f32[8,648]{1,0:T(8,128)}', space=vmem, size = 0x6000, scoped, tag = 'scratch operand']
  #allocation3 [shape = 'f32[8,648]{1,0:T(8,128)}', space=vmem, size = 0x6000, scoped, tag = 'scratch operand']
  %s0 = inlined_call_operand.vmem [shape: f32[1,8,648], index: 0, kind: input, shape index: {}]
  %s1 = inlined_call_operand.vmem [shape: f32[1,392], index: 1, kind: input, shape index: {}]
  %s2 = inlined_call_operand.vmem [shape: f32[8,72], index: 2, kind: input, shape index: {}]
  %s3 = inlined_call_operand.vmem [shape: f32[8,72], index: 3, kind: input, shape index: {}]
  %s4 = inlined_call_operand.vmem [shape: f32[16,72], index: 4, kind: input, shape index: {}]
  %s5 = inlined_call_operand.vmem [shape: f32[16,72], index: 5, kind: input, shape index: {}]
  %s6 = inlined_call_operand.vmem [shape: f32[8,72], index: 6, kind: input, shape index: {}]
  %s7 = inlined_call_operand.vmem [shape: f32[8,72], index: 7, kind: input, shape index: {}]
  %s8 = inlined_call_operand.vmem [shape: f32[8,1], index: 8, kind: input, shape index: {}]
  %s9 = inlined_call_operand.vmem [shape: f32[8,1], index: 9, kind: input, shape index: {}]
  %s10 = inlined_call_operand.vmem [shape: f32[8,1], index: 10, kind: input, shape index: {}]
  %s11 = inlined_call_operand.vmem [shape: f32[8,1], index: 11, kind: input, shape index: {}]
  %s12 = inlined_call_operand.vmem [shape: f32[8,1], index: 12, kind: input, shape index: {}]
  %s13 = inlined_call_operand.vmem [shape: f32[8,1], index: 13, kind: input, shape index: {}]
  %s14 = inlined_call_operand.vmem [shape: f32[8,1], index: 14, kind: input, shape index: {}]
  %s15 = inlined_call_operand.vmem [shape: f32[196,80], index: 15, kind: input, shape index: {}]
  %s16 = inlined_call_operand.vmem [shape: f32[196,80], index: 16, kind: input, shape index: {}]
  %s17 = inlined_call_operand.vmem [shape: f32[8,80], index: 17, kind: input, shape index: {}]
  %s18 = inlined_call_operand.vmem [shape: f32[80,10], index: 18, kind: input, shape index: {}]
  %s19 = inlined_call_operand.vmem [shape: f32[1,10], index: 19, kind: input, shape index: {}]
  %s20 = inlined_call_operand.hbm [shape: f32[1,2,10], index: 20, kind: output, shape index: {}]
  %s21 = sld [smem:[#allocation0]]
  $region90: #{mousenet_forward.1} parent=0
    _
  %s23 = ssub.s32 1, %s21
  %s24 = scalar_select 0, %s23, %s21
  $region1: #{mousenet_forward.1} parent=0
    #allocation4 [shape = 'u8[1024]{0}', space=vmem, size = 0x400, scoped, tag = 'output window, operand 0, single buffered']
    #allocation5 [shape = 's32[1]{0}', space=sflag, size = 0x4, scoped, tag = 'scoped memory for mousenet_forward.1']
    %25 = vsyncpa [#allocation5], 0
    // Predicated region
    $region2: #{mousenet_forward.1} parent=1 // pred_check
      _
    $region3: #{mousenet_forward.1} parent=1 // pred_check_branch
      %27 = sbr.rel (0) target = $region5
    $region4: #{mousenet_forward.1} parent=1 // pred_region
      _
    $region5: #{mousenet_forward.1} parent=1 // pred_fallthru
      _
    // Predicated region
    $region6: #{mousenet_forward.1} parent=1 // pred_check
      _
    $region7: #{mousenet_forward.1} parent=1 // pred_check_branch
      %29 = sbr.rel (0) target = $region9
    $region8: #{mousenet_forward.1} parent=1 // pred_region
      _
    $region9: #{mousenet_forward.1} parent=1 // pred_fallthru
      _
    // Predicated region
    $region10: #{mousenet_forward.1} parent=1 // pred_check
      _
    $region11: #{mousenet_forward.1} parent=1 // pred_check_branch
      %31 = sbr.rel (0) target = $region13
    $region12: #{mousenet_forward.1} parent=1 // pred_region
      _
    $region13: #{mousenet_forward.1} parent=1 // pred_fallthru
      _
    // Predicated region
    $region14: #{mousenet_forward.1} parent=1 // pred_check
      _
    $region15: #{mousenet_forward.1} parent=1 // pred_check_branch
      %33 = sbr.rel (0) target = $region17
    $region16: #{mousenet_forward.1} parent=1 // pred_region
      _
    $region17: #{mousenet_forward.1} parent=1 // pred_fallthru
      _
    // Predicated region
    $region18: #{mousenet_forward.1} parent=1 // pred_check
      _
    $region19: #{mousenet_forward.1} parent=1 // pred_check_branch
      %35 = sbr.rel (0) target = $region21
    $region20: #{mousenet_forward.1} parent=1 // pred_region
      _
    $region21: #{mousenet_forward.1} parent=1 // pred_fallthru
      _
    // Predicated region
    $region22: #{mousenet_forward.1} parent=1 // pred_check
      _
    $region23: #{mousenet_forward.1} parent=1 // pred_check_branch
      %37 = sbr.rel (0) target = $region25
    $region24: #{mousenet_forward.1} parent=1 // pred_region
      _
    $region25: #{mousenet_forward.1} parent=1 // pred_fallthru
      _
    // Predicated region
    $region26: #{mousenet_forward.1} parent=1 // pred_check
      _
    $region27: #{mousenet_forward.1} parent=1 // pred_check_branch
      %39 = sbr.rel (0) target = $region29
    $region28: #{mousenet_forward.1} parent=1 // pred_region
      _
    $region29: #{mousenet_forward.1} parent=1 // pred_fallthru
      _
    // Predicated region
    $region30: #{mousenet_forward.1} parent=1 // pred_check
      _
    $region31: #{mousenet_forward.1} parent=1 // pred_check_branch
      %41 = sbr.rel (0) target = $region33
    $region32: #{mousenet_forward.1} parent=1 // pred_region
      _
    $region33: #{mousenet_forward.1} parent=1 // pred_fallthru
      _
    // Predicated region
    $region34: #{mousenet_forward.1} parent=1 // pred_check
      _
    $region35: #{mousenet_forward.1} parent=1 // pred_check_branch
      %43 = sbr.rel (0) target = $region37
    $region36: #{mousenet_forward.1} parent=1 // pred_region
      _
    $region37: #{mousenet_forward.1} parent=1 // pred_fallthru
      _
    // Predicated region
    $region38: #{mousenet_forward.1} parent=1 // pred_check
      _
    $region39: #{mousenet_forward.1} parent=1 // pred_check_branch
      %45 = sbr.rel (0) target = $region41
    $region40: #{mousenet_forward.1} parent=1 // pred_region
      _
    $region41: #{mousenet_forward.1} parent=1 // pred_fallthru
      _
    // Predicated region
    $region42: #{mousenet_forward.1} parent=1 // pred_check
      _
    $region43: #{mousenet_forward.1} parent=1 // pred_check_branch
      %47 = sbr.rel (0) target = $region45
    $region44: #{mousenet_forward.1} parent=1 // pred_region
      _
    $region45: #{mousenet_forward.1} parent=1 // pred_fallthru
      _
    // Predicated region
    $region46: #{mousenet_forward.1} parent=1 // pred_check
      _
    $region47: #{mousenet_forward.1} parent=1 // pred_check_branch
      %49 = sbr.rel (0) target = $region49
    $region48: #{mousenet_forward.1} parent=1 // pred_region
      _
    $region49: #{mousenet_forward.1} parent=1 // pred_fallthru
      _
    // Predicated region
    $region50: #{mousenet_forward.1} parent=1 // pred_check
      _
    $region51: #{mousenet_forward.1} parent=1 // pred_check_branch
      %51 = sbr.rel (0) target = $region53
    $region52: #{mousenet_forward.1} parent=1 // pred_region
      _
    $region53: #{mousenet_forward.1} parent=1 // pred_fallthru
      _
    // Predicated region
    $region54: #{mousenet_forward.1} parent=1 // pred_check
      _
    $region55: #{mousenet_forward.1} parent=1 // pred_check_branch
      %53 = sbr.rel (0) target = $region57
    $region56: #{mousenet_forward.1} parent=1 // pred_region
      _
    $region57: #{mousenet_forward.1} parent=1 // pred_fallthru
      _
    // Predicated region
    $region58: #{mousenet_forward.1} parent=1 // pred_check
      _
    $region59: #{mousenet_forward.1} parent=1 // pred_check_branch
      %55 = sbr.rel (0) target = $region61
    $region60: #{mousenet_forward.1} parent=1 // pred_region
      _
    $region61: #{mousenet_forward.1} parent=1 // pred_fallthru
      _
    // Predicated region
    $region62: #{mousenet_forward.1} parent=1 // pred_check
      _
    $region63: #{mousenet_forward.1} parent=1 // pred_check_branch
      %57 = sbr.rel (0) target = $region65
    $region64: #{mousenet_forward.1} parent=1 // pred_region
      _
    $region65: #{mousenet_forward.1} parent=1 // pred_fallthru
      _
    // Predicated region
    $region66: #{mousenet_forward.1} parent=1 // pred_check
      _
    $region67: #{mousenet_forward.1} parent=1 // pred_check_branch
      %59 = sbr.rel (0) target = $region69
    $region68: #{mousenet_forward.1} parent=1 // pred_region
      _
    $region69: #{mousenet_forward.1} parent=1 // pred_fallthru
      _
    // Predicated region
    $region70: #{mousenet_forward.1} parent=1 // pred_check
      _
    $region71: #{mousenet_forward.1} parent=1 // pred_check_branch
      %61 = sbr.rel (0) target = $region73
    $region72: #{mousenet_forward.1} parent=1 // pred_region
      _
    $region73: #{mousenet_forward.1} parent=1 // pred_fallthru
      _
    // Predicated region
    $region74: #{mousenet_forward.1} parent=1 // pred_check
      _
    $region75: #{mousenet_forward.1} parent=1 // pred_check_branch
      %63 = sbr.rel (0) target = $region77
    $region76: #{mousenet_forward.1} parent=1 // pred_region
      _
    $region77: #{mousenet_forward.1} parent=1 // pred_fallthru
      _
    // Predicated region
    $region78: #{mousenet_forward.1} parent=1 // pred_check
      _
    $region79: #{mousenet_forward.1} parent=1 // pred_check_branch
      %65 = sbr.rel (0) target = $region81
    $region80: #{mousenet_forward.1} parent=1 // pred_region
      _
    $region81: #{mousenet_forward.1} parent=1 // pred_fallthru
      _
    %66 = vst [vmem:[#allocation2] sm:$0xff] 0.0
    %vm67 = vcmask 1047616
    %68 = vst.msk [vmem:[#allocation2 + $0x20] sm:$0xff] %vm67, 0.0
    %vm69 = vcmask 64512
    %70 = vst.msk [vmem:[#allocation2 + $0x28] sm:$0xff] %vm69, 0.0
    %71 = vst [vmem:[#allocation3] sm:$0xff] 0.0
    %72 = vst.msk [vmem:[#allocation3 + $0x20] sm:$0xff] %vm67, 0.0
    %73 = vst.msk [vmem:[#allocation3 + $0x28] sm:$0xff] %vm69, 0.0
    %v74 = vld [vmem:[%s1] sm:$0xf]
    %v76 = vlaneseq
    %v77 = vshrl.u32 %v76, 7
    %v78 = vsub.s32 0, %v77
    %v79 = vrot.slane %v74, %v78
    %v80 = vlaneseq
    %v81 = vshrl.u32 %v80, 7
    %v82 = vsub.s32 1, %v81
    %v83 = vrot.slane %v74, %v82
    %v84 = vlaneseq
    %v85 = vshrl.u32 %v84, 7
    %v86 = vsub.s32 2, %v85
    %v87 = vrot.slane %v74, %v86
    %v88 = vlaneseq
    %v89 = vshrl.u32 %v88, 7
    %v90 = vsub.s32 3, %v89
    %v91 = vrot.slane %v74, %v90
    %v96 = vld [vmem:[%s17] sm:$0xff]
    %v97 = vld [vmem:[%s18] sm:$0xff]
    %v98 = vld [vmem:[%s18 + $0x8] sm:$0xff]
    %v99 = vld [vmem:[%s18 + $0x10] sm:$0xff]
    %v100 = vld [vmem:[%s18 + $0x18] sm:$0xff]
    %v101 = vld [vmem:[%s18 + $0x20] sm:$0xff]
    %v102 = vld [vmem:[%s18 + $0x28] sm:$0xff]
    %v103 = vld [vmem:[%s18 + $0x30] sm:$0xff]
    %v104 = vld [vmem:[%s18 + $0x38] sm:$0xff]
    %v105 = vld [vmem:[%s18 + $0x40] sm:$0xff]
    %v106 = vld [vmem:[%s18 + $0x48] sm:$0xff]
    %v107 = vld [vmem:[%s2] sm:$0xff]
    %v108 = vld [vmem:[%s0] sm:$0xff]
    %v109 = vld [vmem:[%s0 + $0x8] sm:$0xff]
    %v110 = vld [vmem:[%s0 + $0x10] sm:$0xff]
    %v111 = vld [vmem:[%s0 + $0x18] sm:$0xff]
    %v112 = vld [vmem:[%s0 + $0x20] sm:$0xff]
    %117 = vrot.lane.b32.xlu0 %v108, 127
    %v118 = vpop.permute.xlu0 %117
    %119 = vrot.lane.b32.xlu0 %v109, 127
    %v120 = vpop.permute.xlu0 %119
    %121 = vrot.lane.b32.xlu0 %v110, 127
    %v122 = vpop.permute.xlu0 %121
    %123 = vrot.lane.b32.xlu0 %v111, 127
    %v124 = vpop.permute.xlu0 %123
    %vm125 = vcmask 1039360
    %v126 = vsel %vm125, %v118, %v120
    %v127 = vsel %vm125, %v120, %v122
    %v128 = vsel %vm125, %v122, %v124
    %129 = vrot.lane.b32.xlu0 %v108, 126
    %v130 = vpop.permute.xlu0 %129
    %131 = vrot.lane.b32.xlu0 %v109, 126
    %v132 = vpop.permute.xlu0 %131
    %133 = vrot.lane.b32.xlu0 %v110, 126
    %v134 = vpop.permute.xlu0 %133
    %135 = vrot.lane.b32.xlu0 %v111, 126
    %v136 = vpop.permute.xlu0 %135
    %vm137 = vcmask 1031168
    %v138 = vsel %vm137, %v130, %v132
    %v139 = vsel %vm137, %v132, %v134
    %v140 = vsel %vm137, %v134, %v136
    %142 = vrot.lane.b32.xlu0 %v108, 114
    %v143 = vpop.permute.xlu0 %142
    %144 = vrot.lane.b32.xlu0 %v109, 114
    %v145 = vpop.permute.xlu0 %144
    %146 = vrot.lane.b32.xlu0 %v110, 114
    %v147 = vpop.permute.xlu0 %146
    %148 = vrot.lane.b32.xlu0 %v111, 114
    %v149 = vpop.permute.xlu0 %148
    %150 = vrot.lane.b32.xlu0 %v112, 114
    %v151 = vpop.permute.xlu0 %150
    %vm152 = vcmask 932864
    %v153 = vsel %vm152, %v143, %v145
    %v154 = vsel %vm152, %v145, %v147
    %v155 = vsel %vm152, %v147, %v149
    %v156 = vsel %vm152, %v149, %v151
    %157 = vrot.lane.b32.xlu0 %v109, 113
    %v158 = vpop.permute.xlu0 %157
    %159 = vrot.lane.b32.xlu0 %v110, 113
    %v160 = vpop.permute.xlu0 %159
    %161 = vrot.lane.b32.xlu0 %v111, 113
    %v162 = vpop.permute.xlu0 %161
    %163 = vrot.lane.b32.xlu0 %v112, 113
    %v164 = vpop.permute.xlu0 %163
    %vm165 = vcmask 924672
    %v166 = vsel %vm165, %v158, %v160
    %v167 = vsel %vm165, %v160, %v162
    %v168 = vsel %vm165, %v162, %v164
    %169 = vrot.lane.b32.xlu0 %v109, 112
    %v170 = vpop.permute.xlu0 %169
    %171 = vrot.lane.b32.xlu0 %v110, 112
    %v172 = vpop.permute.xlu0 %171
    %173 = vrot.lane.b32.xlu0 %v111, 112
    %v174 = vpop.permute.xlu0 %173
    %175 = vrot.lane.b32.xlu0 %v112, 112
    %v176 = vpop.permute.xlu0 %175
    %vm177 = vcmask 916480
    %v178 = vsel %vm177, %v170, %v172
    %v179 = vsel %vm177, %v172, %v174
    %v180 = vsel %vm177, %v174, %v176
    %181 = vrot.lane.b32.xlu0 %v109, 100
    %v182 = vpop.permute.xlu0 %181
    %183 = vrot.lane.b32.xlu0 %v110, 100
    %v184 = vpop.permute.xlu0 %183
    %185 = vrot.lane.b32.xlu0 %v111, 100
    %v186 = vpop.permute.xlu0 %185
    %187 = vrot.lane.b32.xlu0 %v112, 100
    %v188 = vpop.permute.xlu0 %187
    %vm189 = vcmask 818176
    %v190 = vsel %vm189, %v182, %v184
    %v191 = vsel %vm189, %v184, %v186
    %v192 = vsel %vm189, %v186, %v188
    %193 = vrot.lane.b32.xlu0 %v109, 99
    %v194 = vpop.permute.xlu0 %193
    %195 = vrot.lane.b32.xlu0 %v110, 99
    %v196 = vpop.permute.xlu0 %195
    %197 = vrot.lane.b32.xlu0 %v111, 99
    %v198 = vpop.permute.xlu0 %197
    %199 = vrot.lane.b32.xlu0 %v112, 99
    %v200 = vpop.permute.xlu0 %199
    %vm201 = vcmask 809984
    %v202 = vsel %vm201, %v194, %v196
    %v203 = vsel %vm201, %v196, %v198
    %v204 = vsel %vm201, %v198, %v200
    %205 = vrot.lane.b32.xlu0 %v109, 98
    %v206 = vpop.permute.xlu0 %205
    %207 = vrot.lane.b32.xlu0 %v110, 98
    %v208 = vpop.permute.xlu0 %207
    %209 = vrot.lane.b32.xlu0 %v111, 98
    %v210 = vpop.permute.xlu0 %209
    %211 = vrot.lane.b32.xlu0 %v112, 98
    %v212 = vpop.permute.xlu0 %211
    %vm213 = vcmask 801792
    %v214 = vsel %vm213, %v206, %v208
    %v215 = vsel %vm213, %v208, %v210
    %v216 = vsel %vm213, %v210, %v212
    %v217 = vld [vmem:[%s8] sm:$0xff]
    %219 = vset.pattern.permute.xlu0 0
    %220 = vperm.xlu0 %219, %v217
    %v221 = vpop.permute.xlu0 %220
    %223 = vrot.lane.b32.xlu0 %v108, 15
    %v224 = vpop.permute.xlu0 %223
    %225 = vrot.lane.b32.xlu0 %v109, 15
    %v226 = vpop.permute.xlu0 %225
    %227 = vrot.lane.b32.xlu0 %v110, 15
    %v228 = vpop.permute.xlu0 %227
    %229 = vrot.lane.b32.xlu0 %v111, 15
    %v230 = vpop.permute.xlu0 %229
    %231 = vrot.lane.b32.xlu0 %v126, 15
    %v232 = vpop.permute.xlu0 %231
    %233 = vrot.lane.b32.xlu0 %v127, 15
    %v234 = vpop.permute.xlu0 %233
    %235 = vrot.lane.b32.xlu0 %v128, 15
    %v236 = vpop.permute.xlu0 %235
    %237 = vrot.lane.b32.xlu0 %v124, 15
    %v238 = vpop.permute.xlu0 %237
    %239 = vrot.lane.b32.xlu0 %v138, 15
    %v240 = vpop.permute.xlu0 %239
    %241 = vrot.lane.b32.xlu0 %v139, 15
    %v242 = vpop.permute.xlu0 %241
    %243 = vrot.lane.b32.xlu0 %v140, 15
    %v244 = vpop.permute.xlu0 %243
    %245 = vrot.lane.b32.xlu0 %v136, 15
    %v246 = vpop.permute.xlu0 %245
    %247 = vrot.lane.b32.xlu0 %v153, 15
    %v248 = vpop.permute.xlu0 %247
    %249 = vrot.lane.b32.xlu0 %v154, 15
    %v250 = vpop.permute.xlu0 %249
    %251 = vrot.lane.b32.xlu0 %v155, 15
    %v252 = vpop.permute.xlu0 %251
    %253 = vrot.lane.b32.xlu0 %v156, 15
    %v254 = vpop.permute.xlu0 %253
    %255 = vrot.lane.b32.xlu0 %v158, 15
    %v256 = vpop.permute.xlu0 %255
    %257 = vrot.lane.b32.xlu0 %v166, 15
    %v258 = vpop.permute.xlu0 %257
    %259 = vrot.lane.b32.xlu0 %v167, 15
    %v260 = vpop.permute.xlu0 %259
    %261 = vrot.lane.b32.xlu0 %v168, 15
    %v262 = vpop.permute.xlu0 %261
    %263 = vrot.lane.b32.xlu0 %v170, 15
    %v264 = vpop.permute.xlu0 %263
    %265 = vrot.lane.b32.xlu0 %v178, 15
    %v266 = vpop.permute.xlu0 %265
    %267 = vrot.lane.b32.xlu0 %v179, 15
    %v268 = vpop.permute.xlu0 %267
    %269 = vrot.lane.b32.xlu0 %v180, 15
    %v270 = vpop.permute.xlu0 %269
    %271 = vrot.lane.b32.xlu0 %v182, 15
    %v272 = vpop.permute.xlu0 %271
    %273 = vrot.lane.b32.xlu0 %v190, 15
    %v274 = vpop.permute.xlu0 %273
    %275 = vrot.lane.b32.xlu0 %v191, 15
    %v276 = vpop.permute.xlu0 %275
    %277 = vrot.lane.b32.xlu0 %v192, 15
    %v278 = vpop.permute.xlu0 %277
    %279 = vrot.lane.b32.xlu0 %v194, 15
    %v280 = vpop.permute.xlu0 %279
    %281 = vrot.lane.b32.xlu0 %v202, 15
    %v282 = vpop.permute.xlu0 %281
    %283 = vrot.lane.b32.xlu0 %v203, 15
    %v284 = vpop.permute.xlu0 %283
    %285 = vrot.lane.b32.xlu0 %v204, 15
    %v286 = vpop.permute.xlu0 %285
    %287 = vrot.lane.b32.xlu0 %v206, 15
    %v288 = vpop.permute.xlu0 %287
    %289 = vrot.lane.b32.xlu0 %v214, 15
    %v290 = vpop.permute.xlu0 %289
    %291 = vrot.lane.b32.xlu0 %v215, 15
    %v292 = vpop.permute.xlu0 %291
    %293 = vrot.lane.b32.xlu0 %v216, 15
    %v294 = vpop.permute.xlu0 %293
    %vm295 = vcmask 121856
    %v296 = vsel %vm295, %v224, %v226
    %v297 = vsel %vm295, %v226, %v228
    %v298 = vsel %vm295, %v228, %v230
    %v299 = vsel %vm295, %v232, %v234
    %v300 = vsel %vm295, %v234, %v236
    %v301 = vsel %vm295, %v236, %v238
    %v302 = vsel %vm295, %v240, %v242
    %v303 = vsel %vm295, %v242, %v244
    %v304 = vsel %vm295, %v244, %v246
    %v305 = vsel %vm295, %v248, %v250
    %v306 = vsel %vm295, %v250, %v252
    %v307 = vsel %vm295, %v252, %v254
    %v308 = vsel %vm295, %v256, %v258
    %v309 = vsel %vm295, %v258, %v260
    %v310 = vsel %vm295, %v260, %v262
    %v311 = vsel %vm295, %v264, %v266
    %v312 = vsel %vm295, %v266, %v268
    %v313 = vsel %vm295, %v268, %v270
    %v314 = vsel %vm295, %v272, %v274
    %v315 = vsel %vm295, %v274, %v276
    %v316 = vsel %vm295, %v276, %v278
    %v317 = vsel %vm295, %v280, %v282
    %v318 = vsel %vm295, %v282, %v284
    %v319 = vsel %vm295, %v284, %v286
    %v320 = vsel %vm295, %v288, %v290
    %v321 = vsel %vm295, %v290, %v292
    %v322 = vsel %vm295, %v292, %v294
    %vm359 = vcmask 588800
    %v361 = vsel %vm359, %v107, 0
    %363 = vmatprep.subr.mxu0 %v297
    %364 = vmatpush1.msra.mxu0 %v296
    %365 = vmatprep.subr.mxu0 %v300
    %366 = vmatpush1.msra.mxu0 %v299
    %367 = vmatprep.subr.mxu0 %v303
    %368 = vmatpush1.msra.mxu0 %v302
    %369 = vmatprep.subr.mxu0 %v306
    %370 = vmatpush1.msra.mxu0 %v305
    %371 = vmatprep.subr.mxu0 %v309
    %372 = vmatpush1.msra.mxu0 %v308
    %373 = vmatprep.subr.mxu0 %v312
    %374 = vmatpush1.msra.mxu0 %v311
    %375 = vmatprep.subr.mxu0 %v315
    %376 = vmatpush1.msra.mxu0 %v314
    %377 = vmatprep.subr.mxu0 %v318
    %378 = vmatpush1.msra.mxu0 %v317
    %379 = vmatprep.subr.mxu0 %v321
    %380 = vmatpush1.msra.mxu0 %v320
    %381 = vmatprep.subr.mxu0 0.0
    %382 = vmatpush1.msra.mxu0 0.0
    %383 = vmatprep.subr.mxu0 0.0
    %384 = vmatpush1.msra.mxu0 0.0
    %385 = vmatprep.subr.mxu0 0.0
    %386 = vmatpush1.msra.mxu0 0.0
    %387 = vmatprep.subr.mxu0 0.0
    %388 = vmatpush1.msra.mxu0 0.0
    %389 = vmatprep.subr.mxu0 0.0
    %390 = vmatpush1.msra.mxu0 0.0
    %391 = vmatprep.subr.mxu0 0.0
    %392 = vmatpush1.msra.mxu0 0.0
    %393 = vmatprep.subr.mxu0 0.0
    %394 = vmatpush1.msra.mxu0 0.0
    %395 = vmatprep.subr.mxu0 0.0
    %396 = vmatpush1.msra.mxu0 0.0
    %397 = vmatprep.subr.mxu0 0.0
    %398 = vmatpush1.msra.mxu0 0.0
    %399 = vmatprep.subr.mxu0 0.0
    %400 = vmatpush1.msra.mxu0 0.0
    %401 = vmatprep.subr.mxu0 0.0
    %402 = vmatpush1.msra.mxu0 0.0
    %403 = vmatprep.subr.mxu0 0.0
    %404 = vmatpush1.msra.mxu0 0.0
    %405 = vmatprep.subr.mxu0 0.0
    %406 = vmatpush1.msra.mxu0 0.0
    %407 = vmatprep.subr.mxu0 0.0
    %408 = vmatpush1.msra.mxu0 0.0
    %409 = vmatprep.subr.mxu0 0.0
    %410 = vmatpush1.msra.mxu0 0.0
    %411 = vmatprep.subr.mxu0 0.0
    %412 = vmatpush1.msra.mxu0 0.0
    %413 = vmatprep.subr.mxu0 0.0
    %414 = vmatpush1.msra.mxu0 0.0
    %415 = vmatprep.subr.mxu0 0.0
    %416 = vmatpush1.msra.mxu0 0.0
    %417 = vmatprep.subr.mxu0 0.0
    %418 = vmatpush1.msra.mxu0 0.0
    %419 = vmatprep.subr.mxu0 0.0
    %420 = vmatpush1.msra.mxu0 0.0
    %421 = vmatprep.subr.mxu0 0.0
    %422 = vmatpush1.msra.mxu0 0.0
    %423 = vmatprep.subr.mxu0 0.0
    %424 = vmatpush1.msra.mxu0 0.0
    %425 = vmatprep.subr.mxu0 0.0
    %426 = vmatpush1.msra.mxu0 0.0
    %427 = vmatprep.mubr.f32.mxu0 0.0
    %428 = vmatmul.mubr.f32.gmra.mrb[0].mxu0 %v361
    %v429 = vpop.f32.mrb[0].mxu0
    %v430 = vadd.f32 %v221, %v429
    %v431 = vpop.f32.mrb[0].mxu0
    %v432 = vadd.f32 %v221, %v431
    %433 = vdwg.mxu0
    %434 = vmatprep.subr.mxu0 %v230
    %435 = vmatpush1.msra.mxu0 %v298
    %436 = vmatprep.subr.mxu0 %v238
    %437 = vmatpush1.msra.mxu0 %v301
    %438 = vmatprep.subr.mxu0 %v246
    %439 = vmatpush1.msra.mxu0 %v304
    %440 = vmatprep.subr.mxu0 %v254
    %441 = vmatpush1.msra.mxu0 %v307
    %442 = vmatprep.subr.mxu0 %v262
    %443 = vmatpush1.msra.mxu0 %v310
    %444 = vmatprep.subr.mxu0 %v270
    %445 = vmatpush1.msra.mxu0 %v313
    %446 = vmatprep.subr.mxu0 %v278
    %447 = vmatpush1.msra.mxu0 %v316
    %448 = vmatprep.subr.mxu0 %v286
    %449 = vmatpush1.msra.mxu0 %v319
    %450 = vmatprep.subr.mxu0 %v294
    %451 = vmatpush1.msra.mxu0 %v322
    %452 = vmatprep.subr.mxu0 0.0
    %453 = vmatpush1.msra.mxu0 0.0
    %454 = vmatprep.subr.mxu0 0.0
    %455 = vmatpush1.msra.mxu0 0.0
    %456 = vmatprep.subr.mxu0 0.0
    %457 = vmatpush1.msra.mxu0 0.0
    %458 = vmatprep.subr.mxu0 0.0
    %459 = vmatpush1.msra.mxu0 0.0
    %460 = vmatprep.subr.mxu0 0.0
    %461 = vmatpush1.msra.mxu0 0.0
    %462 = vmatprep.subr.mxu0 0.0
    %463 = vmatpush1.msra.mxu0 0.0
    %464 = vmatprep.subr.mxu0 0.0
    %465 = vmatpush1.msra.mxu0 0.0
    %466 = vmatprep.subr.mxu0 0.0
    %467 = vmatpush1.msra.mxu0 0.0
    %468 = vmatprep.subr.mxu0 0.0
    %469 = vmatpush1.msra.mxu0 0.0
    %470 = vmatprep.subr.mxu0 0.0
    %471 = vmatpush1.msra.mxu0 0.0
    %472 = vmatprep.subr.mxu0 0.0
    %473 = vmatpush1.msra.mxu0 0.0
    %474 = vmatprep.subr.mxu0 0.0
    %475 = vmatpush1.msra.mxu0 0.0
    %476 = vmatprep.subr.mxu0 0.0
    %477 = vmatpush1.msra.mxu0 0.0
    %478 = vmatprep.subr.mxu0 0.0
    %479 = vmatpush1.msra.mxu0 0.0
    %480 = vmatprep.subr.mxu0 0.0
    %481 = vmatpush1.msra.mxu0 0.0
    %482 = vmatprep.subr.mxu0 0.0
    %483 = vmatpush1.msra.mxu0 0.0
    %484 = vmatprep.subr.mxu0 0.0
    %485 = vmatpush1.msra.mxu0 0.0
    %486 = vmatprep.subr.mxu0 0.0
    %487 = vmatpush1.msra.mxu0 0.0
    %488 = vmatprep.subr.mxu0 0.0
    %489 = vmatpush1.msra.mxu0 0.0
    %490 = vmatprep.subr.mxu0 0.0
    %491 = vmatpush1.msra.mxu0 0.0
    %492 = vmatprep.subr.mxu0 0.0
    %493 = vmatpush1.msra.mxu0 0.0
    %494 = vmatprep.subr.mxu0 0.0
    %495 = vmatpush1.msra.mxu0 0.0
    %496 = vmatprep.subr.mxu0 0.0
    %497 = vmatpush1.msra.mxu0 0.0
    %498 = vmatprep.mubr.f32.mxu0 0.0
    %499 = vmatmul.mubr.f32.gmra.mrb[0].mxu0 %v361
    %v500 = vpop.f32.mrb[0].mxu0
    %v501 = vadd.f32 %v221, %v500
    %v502 = vpop.f32.mrb[0].mxu0
    %v503 = vadd.f32 %v221, %v502
    %504 = vdwg.mxu0
    %v505 = vmax.f32 %v430, 0.0
    %v506 = vmax.f32 %v432, 0.0
    %v507 = vmax.f32 %v501, 0.0
    %v508 = vmax.f32 %v503, 0.0
    %v509 = vmul.f32 %v505, %v79
    %v510 = vmul.f32 %v506, %v83
    %v511 = vmul.f32 %v507, %v87
    %v512 = vmul.f32 %v508, %v91
    %513 = vst [vmem:[#allocation2 + $0x8] sm:$0xff] %v509
    %514 = vst [vmem:[#allocation2 + $0x10] sm:$0xff] %v510
    %515 = vst [vmem:[#allocation2 + $0x18] sm:$0xff] %v511
    %516 = vst.msk [vmem:[#allocation2 + $0x20] sm:$0xff] %vm69, %v512
    %v517 = vld [vmem:[%s3] sm:$0xff]
    %v518 = vld [vmem:[#allocation2] sm:$0xff]
    %v519 = vld [vmem:[#allocation2 + $0x8] sm:$0xff]
    %v520 = vld [vmem:[#allocation2 + $0x10] sm:$0xff]
    %v521 = vld [vmem:[#allocation2 + $0x18] sm:$0xff]
    %v522 = vld [vmem:[#allocation2 + $0x20] sm:$0xff]
    %527 = vrot.lane.b32.xlu0 %v518, 127
    %v528 = vpop.permute.xlu0 %527
    %529 = vrot.lane.b32.xlu0 %v519, 127
    %v530 = vpop.permute.xlu0 %529
    %531 = vrot.lane.b32.xlu0 %v520, 127
    %v532 = vpop.permute.xlu0 %531
    %533 = vrot.lane.b32.xlu0 %v521, 127
    %v534 = vpop.permute.xlu0 %533
    %v535 = vsel %vm125, %v528, %v530
    %v536 = vsel %vm125, %v530, %v532
    %v537 = vsel %vm125, %v532, %v534
    %538 = vrot.lane.b32.xlu0 %v518, 126
    %v539 = vpop.permute.xlu0 %538
    %540 = vrot.lane.b32.xlu0 %v519, 126
    %v541 = vpop.permute.xlu0 %540
    %542 = vrot.lane.b32.xlu0 %v520, 126
    %v543 = vpop.permute.xlu0 %542
    %544 = vrot.lane.b32.xlu0 %v521, 126
    %v545 = vpop.permute.xlu0 %544
    %v546 = vsel %vm137, %v539, %v541
    %v547 = vsel %vm137, %v541, %v543
    %v548 = vsel %vm137, %v543, %v545
    %550 = vrot.lane.b32.xlu0 %v518, 114
    %v551 = vpop.permute.xlu0 %550
    %552 = vrot.lane.b32.xlu0 %v519, 114
    %v553 = vpop.permute.xlu0 %552
    %554 = vrot.lane.b32.xlu0 %v520, 114
    %v555 = vpop.permute.xlu0 %554
    %556 = vrot.lane.b32.xlu0 %v521, 114
    %v557 = vpop.permute.xlu0 %556
    %558 = vrot.lane.b32.xlu0 %v522, 114
    %v559 = vpop.permute.xlu0 %558
    %v560 = vsel %vm152, %v551, %v553
    %v561 = vsel %vm152, %v553, %v555
    %v562 = vsel %vm152, %v555, %v557
    %v563 = vsel %vm152, %v557, %v559
    %564 = vrot.lane.b32.xlu0 %v519, 113
    %v565 = vpop.permute.xlu0 %564
    %566 = vrot.lane.b32.xlu0 %v520, 113
    %v567 = vpop.permute.xlu0 %566
    %568 = vrot.lane.b32.xlu0 %v521, 113
    %v569 = vpop.permute.xlu0 %568
    %570 = vrot.lane.b32.xlu0 %v522, 113
    %v571 = vpop.permute.xlu0 %570
    %v572 = vsel %vm165, %v565, %v567
    %v573 = vsel %vm165, %v567, %v569
    %v574 = vsel %vm165, %v569, %v571
    %575 = vrot.lane.b32.xlu0 %v519, 112
    %v576 = vpop.permute.xlu0 %575
    %577 = vrot.lane.b32.xlu0 %v520, 112
    %v578 = vpop.permute.xlu0 %577
    %579 = vrot.lane.b32.xlu0 %v521, 112
    %v580 = vpop.permute.xlu0 %579
    %581 = vrot.lane.b32.xlu0 %v522, 112
    %v582 = vpop.permute.xlu0 %581
    %v583 = vsel %vm177, %v576, %v578
    %v584 = vsel %vm177, %v578, %v580
    %v585 = vsel %vm177, %v580, %v582
    %586 = vrot.lane.b32.xlu0 %v519, 100
    %v587 = vpop.permute.xlu0 %586
    %588 = vrot.lane.b32.xlu0 %v520, 100
    %v589 = vpop.permute.xlu0 %588
    %590 = vrot.lane.b32.xlu0 %v521, 100
    %v591 = vpop.permute.xlu0 %590
    %592 = vrot.lane.b32.xlu0 %v522, 100
    %v593 = vpop.permute.xlu0 %592
    %v594 = vsel %vm189, %v587, %v589
    %v595 = vsel %vm189, %v589, %v591
    %v596 = vsel %vm189, %v591, %v593
    %597 = vrot.lane.b32.xlu0 %v519, 99
    %v598 = vpop.permute.xlu0 %597
    %599 = vrot.lane.b32.xlu0 %v520, 99
    %v600 = vpop.permute.xlu0 %599
    %601 = vrot.lane.b32.xlu0 %v521, 99
    %v602 = vpop.permute.xlu0 %601
    %603 = vrot.lane.b32.xlu0 %v522, 99
    %v604 = vpop.permute.xlu0 %603
    %v605 = vsel %vm201, %v598, %v600
    %v606 = vsel %vm201, %v600, %v602
    %v607 = vsel %vm201, %v602, %v604
    %608 = vrot.lane.b32.xlu0 %v519, 98
    %v609 = vpop.permute.xlu0 %608
    %610 = vrot.lane.b32.xlu0 %v520, 98
    %v611 = vpop.permute.xlu0 %610
    %612 = vrot.lane.b32.xlu0 %v521, 98
    %v613 = vpop.permute.xlu0 %612
    %614 = vrot.lane.b32.xlu0 %v522, 98
    %v615 = vpop.permute.xlu0 %614
    %v616 = vsel %vm213, %v609, %v611
    %v617 = vsel %vm213, %v611, %v613
    %v618 = vsel %vm213, %v613, %v615
    %v619 = vld [vmem:[%s9] sm:$0xff]
    %621 = vset.pattern.permute.xlu0 0
    %622 = vperm.xlu0 %621, %v619
    %v623 = vpop.permute.xlu0 %622
    %625 = vrot.lane.b32.xlu0 %v518, 15
    %v626 = vpop.permute.xlu0 %625
    %627 = vrot.lane.b32.xlu0 %v519, 15
    %v628 = vpop.permute.xlu0 %627
    %629 = vrot.lane.b32.xlu0 %v520, 15
    %v630 = vpop.permute.xlu0 %629
    %631 = vrot.lane.b32.xlu0 %v521, 15
    %v632 = vpop.permute.xlu0 %631
    %633 = vrot.lane.b32.xlu0 %v535, 15
    %v634 = vpop.permute.xlu0 %633
    %635 = vrot.lane.b32.xlu0 %v536, 15
    %v636 = vpop.permute.xlu0 %635
    %637 = vrot.lane.b32.xlu0 %v537, 15
    %v638 = vpop.permute.xlu0 %637
    %639 = vrot.lane.b32.xlu0 %v534, 15
    %v640 = vpop.permute.xlu0 %639
    %641 = vrot.lane.b32.xlu0 %v546, 15
    %v642 = vpop.permute.xlu0 %641
    %643 = vrot.lane.b32.xlu0 %v547, 15
    %v644 = vpop.permute.xlu0 %643
    %645 = vrot.lane.b32.xlu0 %v548, 15
    %v646 = vpop.permute.xlu0 %645
    %647 = vrot.lane.b32.xlu0 %v545, 15
    %v648 = vpop.permute.xlu0 %647
    %649 = vrot.lane.b32.xlu0 %v560, 15
    %v650 = vpop.permute.xlu0 %649
    %651 = vrot.lane.b32.xlu0 %v561, 15
    %v652 = vpop.permute.xlu0 %651
    %653 = vrot.lane.b32.xlu0 %v562, 15
    %v654 = vpop.permute.xlu0 %653
    %655 = vrot.lane.b32.xlu0 %v563, 15
    %v656 = vpop.permute.xlu0 %655
    %657 = vrot.lane.b32.xlu0 %v565, 15
    %v658 = vpop.permute.xlu0 %657
    %659 = vrot.lane.b32.xlu0 %v572, 15
    %v660 = vpop.permute.xlu0 %659
    %661 = vrot.lane.b32.xlu0 %v573, 15
    %v662 = vpop.permute.xlu0 %661
    %663 = vrot.lane.b32.xlu0 %v574, 15
    %v664 = vpop.permute.xlu0 %663
    %665 = vrot.lane.b32.xlu0 %v576, 15
    %v666 = vpop.permute.xlu0 %665
    %667 = vrot.lane.b32.xlu0 %v583, 15
    %v668 = vpop.permute.xlu0 %667
    %669 = vrot.lane.b32.xlu0 %v584, 15
    %v670 = vpop.permute.xlu0 %669
    %671 = vrot.lane.b32.xlu0 %v585, 15
    %v672 = vpop.permute.xlu0 %671
    %673 = vrot.lane.b32.xlu0 %v587, 15
    %v674 = vpop.permute.xlu0 %673
    %675 = vrot.lane.b32.xlu0 %v594, 15
    %v676 = vpop.permute.xlu0 %675
    %677 = vrot.lane.b32.xlu0 %v595, 15
    %v678 = vpop.permute.xlu0 %677
    %679 = vrot.lane.b32.xlu0 %v596, 15
    %v680 = vpop.permute.xlu0 %679
    %681 = vrot.lane.b32.xlu0 %v598, 15
    %v682 = vpop.permute.xlu0 %681
    %683 = vrot.lane.b32.xlu0 %v605, 15
    %v684 = vpop.permute.xlu0 %683
    %685 = vrot.lane.b32.xlu0 %v606, 15
    %v686 = vpop.permute.xlu0 %685
    %687 = vrot.lane.b32.xlu0 %v607, 15
    %v688 = vpop.permute.xlu0 %687
    %689 = vrot.lane.b32.xlu0 %v609, 15
    %v690 = vpop.permute.xlu0 %689
    %691 = vrot.lane.b32.xlu0 %v616, 15
    %v692 = vpop.permute.xlu0 %691
    %693 = vrot.lane.b32.xlu0 %v617, 15
    %v694 = vpop.permute.xlu0 %693
    %695 = vrot.lane.b32.xlu0 %v618, 15
    %v696 = vpop.permute.xlu0 %695
    %v697 = vsel %vm295, %v626, %v628
    %v698 = vsel %vm295, %v628, %v630
    %v699 = vsel %vm295, %v630, %v632
    %v700 = vsel %vm295, %v634, %v636
    %v701 = vsel %vm295, %v636, %v638
    %v702 = vsel %vm295, %v638, %v640
    %v703 = vsel %vm295, %v642, %v644
    %v704 = vsel %vm295, %v644, %v646
    %v705 = vsel %vm295, %v646, %v648
    %v706 = vsel %vm295, %v650, %v652
    %v707 = vsel %vm295, %v652, %v654
    %v708 = vsel %vm295, %v654, %v656
    %v709 = vsel %vm295, %v658, %v660
    %v710 = vsel %vm295, %v660, %v662
    %v711 = vsel %vm295, %v662, %v664
    %v712 = vsel %vm295, %v666, %v668
    %v713 = vsel %vm295, %v668, %v670
    %v714 = vsel %vm295, %v670, %v672
    %v715 = vsel %vm295, %v674, %v676
    %v716 = vsel %vm295, %v676, %v678
    %v717 = vsel %vm295, %v678, %v680
    %v718 = vsel %vm295, %v682, %v684
    %v719 = vsel %vm295, %v684, %v686
    %v720 = vsel %vm295, %v686, %v688
    %v721 = vsel %vm295, %v690, %v692
    %v722 = vsel %vm295, %v692, %v694
    %v723 = vsel %vm295, %v694, %v696
    %v761 = vsel %vm359, %v517, 0
    %763 = vmatprep.subr.mxu0 %v698
    %764 = vmatpush1.msra.mxu0 %v697
    %765 = vmatprep.subr.mxu0 %v701
    %766 = vmatpush1.msra.mxu0 %v700
    %767 = vmatprep.subr.mxu0 %v704
    %768 = vmatpush1.msra.mxu0 %v703
    %769 = vmatprep.subr.mxu0 %v707
    %770 = vmatpush1.msra.mxu0 %v706
    %771 = vmatprep.subr.mxu0 %v710
    %772 = vmatpush1.msra.mxu0 %v709
    %773 = vmatprep.subr.mxu0 %v713
    %774 = vmatpush1.msra.mxu0 %v712
    %775 = vmatprep.subr.mxu0 %v716
    %776 = vmatpush1.msra.mxu0 %v715
    %777 = vmatprep.subr.mxu0 %v719
    %778 = vmatpush1.msra.mxu0 %v718
    %779 = vmatprep.subr.mxu0 %v722
    %780 = vmatpush1.msra.mxu0 %v721
    %781 = vmatprep.subr.mxu0 0.0
    %782 = vmatpush1.msra.mxu0 0.0
    %783 = vmatprep.subr.mxu0 0.0
    %784 = vmatpush1.msra.mxu0 0.0
    %785 = vmatprep.subr.mxu0 0.0
    %786 = vmatpush1.msra.mxu0 0.0
    %787 = vmatprep.subr.mxu0 0.0
    %788 = vmatpush1.msra.mxu0 0.0
    %789 = vmatprep.subr.mxu0 0.0
    %790 = vmatpush1.msra.mxu0 0.0
    %791 = vmatprep.subr.mxu0 0.0
    %792 = vmatpush1.msra.mxu0 0.0
    %793 = vmatprep.subr.mxu0 0.0
    %794 = vmatpush1.msra.mxu0 0.0
    %795 = vmatprep.subr.mxu0 0.0
    %796 = vmatpush1.msra.mxu0 0.0
    %797 = vmatprep.subr.mxu0 0.0
    %798 = vmatpush1.msra.mxu0 0.0
    %799 = vmatprep.subr.mxu0 0.0
    %800 = vmatpush1.msra.mxu0 0.0
    %801 = vmatprep.subr.mxu0 0.0
    %802 = vmatpush1.msra.mxu0 0.0
    %803 = vmatprep.subr.mxu0 0.0
    %804 = vmatpush1.msra.mxu0 0.0
    %805 = vmatprep.subr.mxu0 0.0
    %806 = vmatpush1.msra.mxu0 0.0
    %807 = vmatprep.subr.mxu0 0.0
    %808 = vmatpush1.msra.mxu0 0.0
    %809 = vmatprep.subr.mxu0 0.0
    %810 = vmatpush1.msra.mxu0 0.0
    %811 = vmatprep.subr.mxu0 0.0
    %812 = vmatpush1.msra.mxu0 0.0
    %813 = vmatprep.subr.mxu0 0.0
    %814 = vmatpush1.msra.mxu0 0.0
    %815 = vmatprep.subr.mxu0 0.0
    %816 = vmatpush1.msra.mxu0 0.0
    %817 = vmatprep.subr.mxu0 0.0
    %818 = vmatpush1.msra.mxu0 0.0
    %819 = vmatprep.subr.mxu0 0.0
    %820 = vmatpush1.msra.mxu0 0.0
    %821 = vmatprep.subr.mxu0 0.0
    %822 = vmatpush1.msra.mxu0 0.0
    %823 = vmatprep.subr.mxu0 0.0
    %824 = vmatpush1.msra.mxu0 0.0
    %825 = vmatprep.subr.mxu0 0.0
    %826 = vmatpush1.msra.mxu0 0.0
    %827 = vmatprep.mubr.f32.mxu0 0.0
    %828 = vmatmul.mubr.f32.gmra.mrb[0].mxu0 %v761
    %v829 = vpop.f32.mrb[0].mxu0
    %v830 = vadd.f32 %v623, %v829
    %v831 = vpop.f32.mrb[0].mxu0
    %v832 = vadd.f32 %v623, %v831
    %833 = vdwg.mxu0
    %834 = vmatprep.subr.mxu0 %v632
    %835 = vmatpush1.msra.mxu0 %v699
    %836 = vmatprep.subr.mxu0 %v640
    %837 = vmatpush1.msra.mxu0 %v702
    %838 = vmatprep.subr.mxu0 %v648
    %839 = vmatpush1.msra.mxu0 %v705
    %840 = vmatprep.subr.mxu0 %v656
    %841 = vmatpush1.msra.mxu0 %v708
    %842 = vmatprep.subr.mxu0 %v664
    %843 = vmatpush1.msra.mxu0 %v711
    %844 = vmatprep.subr.mxu0 %v672
    %845 = vmatpush1.msra.mxu0 %v714
    %846 = vmatprep.subr.mxu0 %v680
    %847 = vmatpush1.msra.mxu0 %v717
    %848 = vmatprep.subr.mxu0 %v688
    %849 = vmatpush1.msra.mxu0 %v720
    %850 = vmatprep.subr.mxu0 %v696
    %851 = vmatpush1.msra.mxu0 %v723
    %852 = vmatprep.subr.mxu0 0.0
    %853 = vmatpush1.msra.mxu0 0.0
    %854 = vmatprep.subr.mxu0 0.0
    %855 = vmatpush1.msra.mxu0 0.0
    %856 = vmatprep.subr.mxu0 0.0
    %857 = vmatpush1.msra.mxu0 0.0
    %858 = vmatprep.subr.mxu0 0.0
    %859 = vmatpush1.msra.mxu0 0.0
    %860 = vmatprep.subr.mxu0 0.0
    %861 = vmatpush1.msra.mxu0 0.0
    %862 = vmatprep.subr.mxu0 0.0
    %863 = vmatpush1.msra.mxu0 0.0
    %864 = vmatprep.subr.mxu0 0.0
    %865 = vmatpush1.msra.mxu0 0.0
    %866 = vmatprep.subr.mxu0 0.0
    %867 = vmatpush1.msra.mxu0 0.0
    %868 = vmatprep.subr.mxu0 0.0
    %869 = vmatpush1.msra.mxu0 0.0
    %870 = vmatprep.subr.mxu0 0.0
    %871 = vmatpush1.msra.mxu0 0.0
    %872 = vmatprep.subr.mxu0 0.0
    %873 = vmatpush1.msra.mxu0 0.0
    %874 = vmatprep.subr.mxu0 0.0
    %875 = vmatpush1.msra.mxu0 0.0
    %876 = vmatprep.subr.mxu0 0.0
    %877 = vmatpush1.msra.mxu0 0.0
    %878 = vmatprep.subr.mxu0 0.0
    %879 = vmatpush1.msra.mxu0 0.0
    %880 = vmatprep.subr.mxu0 0.0
    %881 = vmatpush1.msra.mxu0 0.0
    %882 = vmatprep.subr.mxu0 0.0
    %883 = vmatpush1.msra.mxu0 0.0
    %884 = vmatprep.subr.mxu0 0.0
    %885 = vmatpush1.msra.mxu0 0.0
    %886 = vmatprep.subr.mxu0 0.0
    %887 = vmatpush1.msra.mxu0 0.0
    %888 = vmatprep.subr.mxu0 0.0
    %889 = vmatpush1.msra.mxu0 0.0
    %890 = vmatprep.subr.mxu0 0.0
    %891 = vmatpush1.msra.mxu0 0.0
    %892 = vmatprep.subr.mxu0 0.0
    %893 = vmatpush1.msra.mxu0 0.0
    %894 = vmatprep.subr.mxu0 0.0
    %895 = vmatpush1.msra.mxu0 0.0
    %896 = vmatprep.subr.mxu0 0.0
    %897 = vmatpush1.msra.mxu0 0.0
    %898 = vmatprep.mubr.f32.mxu0 0.0
    %899 = vmatmul.mubr.f32.gmra.mrb[0].mxu0 %v761
    %v900 = vpop.f32.mrb[0].mxu0
    %v901 = vadd.f32 %v623, %v900
    %v902 = vpop.f32.mrb[0].mxu0
    %v903 = vadd.f32 %v623, %v902
    %904 = vdwg.mxu0
    %v905 = vmax.f32 %v830, 0.0
    %v906 = vmax.f32 %v832, 0.0
    %v907 = vmax.f32 %v901, 0.0
    %v908 = vmax.f32 %v903, 0.0
    %v909 = vmul.f32 %v905, %v79
    %v910 = vmul.f32 %v906, %v83
    %v911 = vmul.f32 %v907, %v87
    %v912 = vmul.f32 %v908, %v91
    %913 = vst [vmem:[#allocation3 + $0x8] sm:$0xff] %v909
    %914 = vst [vmem:[#allocation3 + $0x10] sm:$0xff] %v910
    %915 = vst [vmem:[#allocation3 + $0x18] sm:$0xff] %v911
    %916 = vst.msk [vmem:[#allocation3 + $0x20] sm:$0xff] %vm69, %v912
    %v917 = vld [vmem:[%s4] sm:$0xff]
    %v918 = vld [vmem:[%s4 + $0x8] sm:$0xff]
    %v919 = vld [vmem:[#allocation3] sm:$0xff]
    %v920 = vld [vmem:[#allocation3 + $0x8] sm:$0xff]
    %v921 = vld [vmem:[#allocation3 + $0x10] sm:$0xff]
    %v922 = vld [vmem:[#allocation3 + $0x18] sm:$0xff]
    %v923 = vld [vmem:[#allocation3 + $0x20] sm:$0xff]
    %928 = vrot.lane.b32.xlu0 %v919, 127
    %v929 = vpop.permute.xlu0 %928
    %930 = vrot.lane.b32.xlu0 %v920, 127
    %v931 = vpop.permute.xlu0 %930
    %932 = vrot.lane.b32.xlu0 %v921, 127
    %v933 = vpop.permute.xlu0 %932
    %934 = vrot.lane.b32.xlu0 %v922, 127
    %v935 = vpop.permute.xlu0 %934
    %v936 = vsel %vm125, %v929, %v931
    %v937 = vsel %vm125, %v931, %v933
    %v938 = vsel %vm125, %v933, %v935
    %939 = vrot.lane.b32.xlu0 %v919, 126
    %v940 = vpop.permute.xlu0 %939
    %941 = vrot.lane.b32.xlu0 %v920, 126
    %v942 = vpop.permute.xlu0 %941
    %943 = vrot.lane.b32.xlu0 %v921, 126
    %v944 = vpop.permute.xlu0 %943
    %945 = vrot.lane.b32.xlu0 %v922, 126
    %v946 = vpop.permute.xlu0 %945
    %v947 = vsel %vm137, %v940, %v942
    %v948 = vsel %vm137, %v942, %v944
    %v949 = vsel %vm137, %v944, %v946
    %951 = vrot.lane.b32.xlu0 %v919, 114
    %v952 = vpop.permute.xlu0 %951
    %953 = vrot.lane.b32.xlu0 %v920, 114
    %v954 = vpop.permute.xlu0 %953
    %955 = vrot.lane.b32.xlu0 %v921, 114
    %v956 = vpop.permute.xlu0 %955
    %957 = vrot.lane.b32.xlu0 %v922, 114
    %v958 = vpop.permute.xlu0 %957
    %959 = vrot.lane.b32.xlu0 %v923, 114
    %v960 = vpop.permute.xlu0 %959
    %v961 = vsel %vm152, %v952, %v954
    %v962 = vsel %vm152, %v954, %v956
    %v963 = vsel %vm152, %v956, %v958
    %v964 = vsel %vm152, %v958, %v960
    %965 = vrot.lane.b32.xlu0 %v920, 113
    %v966 = vpop.permute.xlu0 %965
    %967 = vrot.lane.b32.xlu0 %v921, 113
    %v968 = vpop.permute.xlu0 %967
    %969 = vrot.lane.b32.xlu0 %v922, 113
    %v970 = vpop.permute.xlu0 %969
    %971 = vrot.lane.b32.xlu0 %v923, 113
    %v972 = vpop.permute.xlu0 %971
    %v973 = vsel %vm165, %v966, %v968
    %v974 = vsel %vm165, %v968, %v970
    %v975 = vsel %vm165, %v970, %v972
    %976 = vrot.lane.b32.xlu0 %v920, 112
    %v977 = vpop.permute.xlu0 %976
    %978 = vrot.lane.b32.xlu0 %v921, 112
    %v979 = vpop.permute.xlu0 %978
    %980 = vrot.lane.b32.xlu0 %v922, 112
    %v981 = vpop.permute.xlu0 %980
    %982 = vrot.lane.b32.xlu0 %v923, 112
    %v983 = vpop.permute.xlu0 %982
    %v984 = vsel %vm177, %v977, %v979
    %v985 = vsel %vm177, %v979, %v981
    %v986 = vsel %vm177, %v981, %v983
    %987 = vrot.lane.b32.xlu0 %v920, 100
    %v988 = vpop.permute.xlu0 %987
    %989 = vrot.lane.b32.xlu0 %v921, 100
    %v990 = vpop.permute.xlu0 %989
    %991 = vrot.lane.b32.xlu0 %v922, 100
    %v992 = vpop.permute.xlu0 %991
    %993 = vrot.lane.b32.xlu0 %v923, 100
    %v994 = vpop.permute.xlu0 %993
    %v995 = vsel %vm189, %v988, %v990
    %v996 = vsel %vm189, %v990, %v992
    %v997 = vsel %vm189, %v992, %v994
    %998 = vrot.lane.b32.xlu0 %v920, 99
    %v999 = vpop.permute.xlu0 %998
    %1000 = vrot.lane.b32.xlu0 %v921, 99
    %v1001 = vpop.permute.xlu0 %1000
    %1002 = vrot.lane.b32.xlu0 %v922, 99
    %v1003 = vpop.permute.xlu0 %1002
    %1004 = vrot.lane.b32.xlu0 %v923, 99
    %v1005 = vpop.permute.xlu0 %1004
    %v1006 = vsel %vm201, %v999, %v1001
    %v1007 = vsel %vm201, %v1001, %v1003
    %v1008 = vsel %vm201, %v1003, %v1005
    %1009 = vrot.lane.b32.xlu0 %v920, 98
    %v1010 = vpop.permute.xlu0 %1009
    %1011 = vrot.lane.b32.xlu0 %v921, 98
    %v1012 = vpop.permute.xlu0 %1011
    %1013 = vrot.lane.b32.xlu0 %v922, 98
    %v1014 = vpop.permute.xlu0 %1013
    %1015 = vrot.lane.b32.xlu0 %v923, 98
    %v1016 = vpop.permute.xlu0 %1015
    %v1017 = vsel %vm213, %v1010, %v1012
    %v1018 = vsel %vm213, %v1012, %v1014
    %v1019 = vsel %vm213, %v1014, %v1016
    %1020 = vrot.lane.b32.xlu0 %v919, 15
    %v1021 = vpop.permute.xlu0 %1020
    %1022 = vrot.lane.b32.xlu0 %v920, 15
    %v1023 = vpop.permute.xlu0 %1022
    %1024 = vrot.lane.b32.xlu0 %v921, 15
    %v1025 = vpop.permute.xlu0 %1024
    %1026 = vrot.lane.b32.xlu0 %v922, 15
    %v1027 = vpop.permute.xlu0 %1026
    %1028 = vrot.lane.b32.xlu0 %v936, 15
    %v1029 = vpop.permute.xlu0 %1028
    %1030 = vrot.lane.b32.xlu0 %v937, 15
    %v1031 = vpop.permute.xlu0 %1030
    %1032 = vrot.lane.b32.xlu0 %v938, 15
    %v1033 = vpop.permute.xlu0 %1032
    %1034 = vrot.lane.b32.xlu0 %v935, 15
    %v1035 = vpop.permute.xlu0 %1034
    %1036 = vrot.lane.b32.xlu0 %v947, 15
    %v1037 = vpop.permute.xlu0 %1036
    %1038 = vrot.lane.b32.xlu0 %v948, 15
    %v1039 = vpop.permute.xlu0 %1038
    %1040 = vrot.lane.b32.xlu0 %v949, 15
    %v1041 = vpop.permute.xlu0 %1040
    %1042 = vrot.lane.b32.xlu0 %v946, 15
    %v1043 = vpop.permute.xlu0 %1042
    %1044 = vrot.lane.b32.xlu0 %v961, 15
    %v1045 = vpop.permute.xlu0 %1044
    %1046 = vrot.lane.b32.xlu0 %v962, 15
    %v1047 = vpop.permute.xlu0 %1046
    %1048 = vrot.lane.b32.xlu0 %v963, 15
    %v1049 = vpop.permute.xlu0 %1048
    %1050 = vrot.lane.b32.xlu0 %v964, 15
    %v1051 = vpop.permute.xlu0 %1050
    %1052 = vrot.lane.b32.xlu0 %v966, 15
    %v1053 = vpop.permute.xlu0 %1052
    %1054 = vrot.lane.b32.xlu0 %v973, 15
    %v1055 = vpop.permute.xlu0 %1054
    %1056 = vrot.lane.b32.xlu0 %v974, 15
    %v1057 = vpop.permute.xlu0 %1056
    %1058 = vrot.lane.b32.xlu0 %v975, 15
    %v1059 = vpop.permute.xlu0 %1058
    %1060 = vrot.lane.b32.xlu0 %v977, 15
    %v1061 = vpop.permute.xlu0 %1060
    %1062 = vrot.lane.b32.xlu0 %v984, 15
    %v1063 = vpop.permute.xlu0 %1062
    %1064 = vrot.lane.b32.xlu0 %v985, 15
    %v1065 = vpop.permute.xlu0 %1064
    %1066 = vrot.lane.b32.xlu0 %v986, 15
    %v1067 = vpop.permute.xlu0 %1066
    %1068 = vrot.lane.b32.xlu0 %v988, 15
    %v1069 = vpop.permute.xlu0 %1068
    %1070 = vrot.lane.b32.xlu0 %v995, 15
    %v1071 = vpop.permute.xlu0 %1070
    %1072 = vrot.lane.b32.xlu0 %v996, 15
    %v1073 = vpop.permute.xlu0 %1072
    %1074 = vrot.lane.b32.xlu0 %v997, 15
    %v1075 = vpop.permute.xlu0 %1074
    %1076 = vrot.lane.b32.xlu0 %v999, 15
    %v1077 = vpop.permute.xlu0 %1076
    %1078 = vrot.lane.b32.xlu0 %v1006, 15
    %v1079 = vpop.permute.xlu0 %1078
    %1080 = vrot.lane.b32.xlu0 %v1007, 15
    %v1081 = vpop.permute.xlu0 %1080
    %1082 = vrot.lane.b32.xlu0 %v1008, 15
    %v1083 = vpop.permute.xlu0 %1082
    %1084 = vrot.lane.b32.xlu0 %v1010, 15
    %v1085 = vpop.permute.xlu0 %1084
    %1086 = vrot.lane.b32.xlu0 %v1017, 15
    %v1087 = vpop.permute.xlu0 %1086
    %1088 = vrot.lane.b32.xlu0 %v1018, 15
    %v1089 = vpop.permute.xlu0 %1088
    %1090 = vrot.lane.b32.xlu0 %v1019, 15
    %v1091 = vpop.permute.xlu0 %1090
    %v1092 = vsel %vm295, %v1021, %v1023
    %v1093 = vsel %vm295, %v1023, %v1025
    %v1094 = vsel %vm295, %v1025, %v1027
    %v1095 = vsel %vm295, %v1029, %v1031
    %v1096 = vsel %vm295, %v1031, %v1033
    %v1097 = vsel %vm295, %v1033, %v1035
    %v1098 = vsel %vm295, %v1037, %v1039
    %v1099 = vsel %vm295, %v1039, %v1041
    %v1100 = vsel %vm295, %v1041, %v1043
    %v1101 = vsel %vm295, %v1045, %v1047
    %v1102 = vsel %vm295, %v1047, %v1049
    %v1103 = vsel %vm295, %v1049, %v1051
    %v1104 = vsel %vm295, %v1053, %v1055
    %v1105 = vsel %vm295, %v1055, %v1057
    %v1106 = vsel %vm295, %v1057, %v1059
    %v1107 = vsel %vm295, %v1061, %v1063
    %v1108 = vsel %vm295, %v1063, %v1065
    %v1109 = vsel %vm295, %v1065, %v1067
    %v1110 = vsel %vm295, %v1069, %v1071
    %v1111 = vsel %vm295, %v1071, %v1073
    %v1112 = vsel %vm295, %v1073, %v1075
    %v1113 = vsel %vm295, %v1077, %v1079
    %v1114 = vsel %vm295, %v1079, %v1081
    %v1115 = vsel %vm295, %v1081, %v1083
    %v1116 = vsel %vm295, %v1085, %v1087
    %v1117 = vsel %vm295, %v1087, %v1089
    %v1118 = vsel %vm295, %v1089, %v1091
    %v1156 = vsel %vm359, %v917, 0
    %v1159 = vsel %vm359, %v918, 0
    %1161 = vmatprep.subr.mxu0 %v1093
    %1162 = vmatpush1.msra.mxu0 %v1092
    %1163 = vmatprep.subr.mxu0 %v1096
    %1164 = vmatpush1.msra.mxu0 %v1095
    %1165 = vmatprep.subr.mxu0 %v1099
    %1166 = vmatpush1.msra.mxu0 %v1098
    %1167 = vmatprep.subr.mxu0 %v1102
    %1168 = vmatpush1.msra.mxu0 %v1101
    %1169 = vmatprep.subr.mxu0 %v1105
    %1170 = vmatpush1.msra.mxu0 %v1104
    %1171 = vmatprep.subr.mxu0 %v1108
    %1172 = vmatpush1.msra.mxu0 %v1107
    %1173 = vmatprep.subr.mxu0 %v1111
    %1174 = vmatpush1.msra.mxu0 %v1110
    %1175 = vmatprep.subr.mxu0 %v1114
    %1176 = vmatpush1.msra.mxu0 %v1113
    %1177 = vmatprep.subr.mxu0 %v1117
    %1178 = vmatpush1.msra.mxu0 %v1116
    %1179 = vmatprep.subr.mxu0 0.0
    %1180 = vmatpush1.msra.mxu0 0.0
    %1181 = vmatprep.subr.mxu0 0.0
    %1182 = vmatpush1.msra.mxu0 0.0
    %1183 = vmatprep.subr.mxu0 0.0
    %1184 = vmatpush1.msra.mxu0 0.0
    %1185 = vmatprep.subr.mxu0 0.0
    %1186 = vmatpush1.msra.mxu0 0.0
    %1187 = vmatprep.subr.mxu0 0.0
    %1188 = vmatpush1.msra.mxu0 0.0
    %1189 = vmatprep.subr.mxu0 0.0
    %1190 = vmatpush1.msra.mxu0 0.0
    %1191 = vmatprep.subr.mxu0 0.0
    %1192 = vmatpush1.msra.mxu0 0.0
    %1193 = vmatprep.subr.mxu0 0.0
    %1194 = vmatpush1.msra.mxu0 0.0
    %1195 = vmatprep.subr.mxu0 0.0
    %1196 = vmatpush1.msra.mxu0 0.0
    %1197 = vmatprep.subr.mxu0 0.0
    %1198 = vmatpush1.msra.mxu0 0.0
    %1199 = vmatprep.subr.mxu0 0.0
    %1200 = vmatpush1.msra.mxu0 0.0
    %1201 = vmatprep.subr.mxu0 0.0
    %1202 = vmatpush1.msra.mxu0 0.0
    %1203 = vmatprep.subr.mxu0 0.0
    %1204 = vmatpush1.msra.mxu0 0.0
    %1205 = vmatprep.subr.mxu0 0.0
    %1206 = vmatpush1.msra.mxu0 0.0
    %1207 = vmatprep.subr.mxu0 0.0
    %1208 = vmatpush1.msra.mxu0 0.0
    %1209 = vmatprep.subr.mxu0 0.0
    %1210 = vmatpush1.msra.mxu0 0.0
    %1211 = vmatprep.subr.mxu0 0.0
    %1212 = vmatpush1.msra.mxu0 0.0
    %1213 = vmatprep.subr.mxu0 0.0
    %1214 = vmatpush1.msra.mxu0 0.0
    %1215 = vmatprep.subr.mxu0 0.0
    %1216 = vmatpush1.msra.mxu0 0.0
    %1217 = vmatprep.subr.mxu0 0.0
    %1218 = vmatpush1.msra.mxu0 0.0
    %1219 = vmatprep.subr.mxu0 0.0
    %1220 = vmatpush1.msra.mxu0 0.0
    %1221 = vmatprep.subr.mxu0 0.0
    %1222 = vmatpush1.msra.mxu0 0.0
    %1223 = vmatprep.subr.mxu0 0.0
    %1224 = vmatpush1.msra.mxu0 0.0
    %1225 = vmatprep.mubr.f32.mxu0 0.0
    %1226 = vmatmul.mubr.f32.gmra.mrb[0].mxu0 %v1156
    %v1227 = vpop.f32.mrb[0].mxu0
    %v1228 = vadd.f32 0.0, %v1227
    %v1229 = vpop.f32.mrb[0].mxu0
    %v1230 = vadd.f32 0.0, %v1229
    %1231 = vmatprep.mubr.f32.mxu0 0.0
    %1232 = vmatmul.mubr.f32.gmra.mrb[0].mxu0 %v1159
    %v1233 = vpop.f32.mrb[0].mxu0
    %v1234 = vadd.f32 0.0, %v1233
    %v1235 = vpop.f32.mrb[0].mxu0
    %v1236 = vadd.f32 0.0, %v1235
    %1237 = vdwg.mxu0
    %1238 = vmatprep.subr.mxu0 %v1027
    %1239 = vmatpush1.msra.mxu0 %v1094
    %1240 = vmatprep.subr.mxu0 %v1035
    %1241 = vmatpush1.msra.mxu0 %v1097
    %1242 = vmatprep.subr.mxu0 %v1043
    %1243 = vmatpush1.msra.mxu0 %v1100
    %1244 = vmatprep.subr.mxu0 %v1051
    %1245 = vmatpush1.msra.mxu0 %v1103
    %1246 = vmatprep.subr.mxu0 %v1059
    %1247 = vmatpush1.msra.mxu0 %v1106
    %1248 = vmatprep.subr.mxu0 %v1067
    %1249 = vmatpush1.msra.mxu0 %v1109
    %1250 = vmatprep.subr.mxu0 %v1075
    %1251 = vmatpush1.msra.mxu0 %v1112
    %1252 = vmatprep.subr.mxu0 %v1083
    %1253 = vmatpush1.msra.mxu0 %v1115
    %1254 = vmatprep.subr.mxu0 %v1091
    %1255 = vmatpush1.msra.mxu0 %v1118
    %1256 = vmatprep.subr.mxu0 0.0
    %1257 = vmatpush1.msra.mxu0 0.0
    %1258 = vmatprep.subr.mxu0 0.0
    %1259 = vmatpush1.msra.mxu0 0.0
    %1260 = vmatprep.subr.mxu0 0.0
    %1261 = vmatpush1.msra.mxu0 0.0
    %1262 = vmatprep.subr.mxu0 0.0
    %1263 = vmatpush1.msra.mxu0 0.0
    %1264 = vmatprep.subr.mxu0 0.0
    %1265 = vmatpush1.msra.mxu0 0.0
    %1266 = vmatprep.subr.mxu0 0.0
    %1267 = vmatpush1.msra.mxu0 0.0
    %1268 = vmatprep.subr.mxu0 0.0
    %1269 = vmatpush1.msra.mxu0 0.0
    %1270 = vmatprep.subr.mxu0 0.0
    %1271 = vmatpush1.msra.mxu0 0.0
    %1272 = vmatprep.subr.mxu0 0.0
    %1273 = vmatpush1.msra.mxu0 0.0
    %1274 = vmatprep.subr.mxu0 0.0
    %1275 = vmatpush1.msra.mxu0 0.0
    %1276 = vmatprep.subr.mxu0 0.0
    %1277 = vmatpush1.msra.mxu0 0.0
    %1278 = vmatprep.subr.mxu0 0.0
    %1279 = vmatpush1.msra.mxu0 0.0
    %1280 = vmatprep.subr.mxu0 0.0
    %1281 = vmatpush1.msra.mxu0 0.0
    %1282 = vmatprep.subr.mxu0 0.0
    %1283 = vmatpush1.msra.mxu0 0.0
    %1284 = vmatprep.subr.mxu0 0.0
    %1285 = vmatpush1.msra.mxu0 0.0
    %1286 = vmatprep.subr.mxu0 0.0
    %1287 = vmatpush1.msra.mxu0 0.0
    %1288 = vmatprep.subr.mxu0 0.0
    %1289 = vmatpush1.msra.mxu0 0.0
    %1290 = vmatprep.subr.mxu0 0.0
    %1291 = vmatpush1.msra.mxu0 0.0
    %1292 = vmatprep.subr.mxu0 0.0
    %1293 = vmatpush1.msra.mxu0 0.0
    %1294 = vmatprep.subr.mxu0 0.0
    %1295 = vmatpush1.msra.mxu0 0.0
    %1296 = vmatprep.subr.mxu0 0.0
    %1297 = vmatpush1.msra.mxu0 0.0
    %1298 = vmatprep.subr.mxu0 0.0
    %1299 = vmatpush1.msra.mxu0 0.0
    %1300 = vmatprep.subr.mxu0 0.0
    %1301 = vmatpush1.msra.mxu0 0.0
    %1302 = vmatprep.mubr.f32.mxu0 0.0
    %1303 = vmatmul.mubr.f32.gmra.mrb[0].mxu0 %v1156
    %v1304 = vpop.f32.mrb[0].mxu0
    %v1305 = vadd.f32 0.0, %v1304
    %v1306 = vpop.f32.mrb[0].mxu0
    %v1307 = vadd.f32 0.0, %v1306
    %1308 = vmatprep.mubr.f32.mxu0 0.0
    %1309 = vmatmul.mubr.f32.gmra.mrb[0].mxu0 %v1159
    %v1310 = vpop.f32.mrb[0].mxu0
    %v1311 = vadd.f32 0.0, %v1310
    %v1312 = vpop.f32.mrb[0].mxu0
    %v1313 = vadd.f32 0.0, %v1312
    %1314 = vdwg.mxu0
    %v1315 = vld [vmem:[%s10] sm:$0xff]
    %1317 = vset.pattern.permute.xlu0 0
    %1318 = vperm.xlu0 %1317, %v1315
    %v1319 = vpop.permute.xlu0 %1318
    %v1321 = vadd.f32 %v1228, %v1319
    %v1322 = vadd.f32 %v1230, %v1319
    %v1323 = vadd.f32 %v1305, %v1319
    %v1324 = vadd.f32 %v1307, %v1319
    %v1325 = vmax.f32 %v1321, 0.0
    %v1326 = vmax.f32 %v1322, 0.0
    %v1327 = vmax.f32 %v1323, 0.0
    %v1328 = vmax.f32 %v1324, 0.0
    %v1329 = vmul.f32 %v1325, %v79
    %v1330 = vmul.f32 %v1326, %v83
    %v1331 = vmul.f32 %v1327, %v87
    %v1332 = vmul.f32 %v1328, %v91
    %1333 = vst [vmem:[#allocation2 + $0x8] sm:$0xff] %v1329
    %1334 = vst [vmem:[#allocation2 + $0x10] sm:$0xff] %v1330
    %1335 = vst [vmem:[#allocation2 + $0x18] sm:$0xff] %v1331
    %1336 = vst.msk [vmem:[#allocation2 + $0x20] sm:$0xff] %vm69, %v1332
    %v1337 = vld [vmem:[%s5] sm:$0xff]
    %v1338 = vld [vmem:[%s5 + $0x8] sm:$0xff]
    %v1339 = vld [vmem:[#allocation2] sm:$0xff]
    %v1340 = vld [vmem:[#allocation2 + $0x8] sm:$0xff]
    %v1341 = vld [vmem:[#allocation2 + $0x10] sm:$0xff]
    %v1342 = vld [vmem:[#allocation2 + $0x18] sm:$0xff]
    %v1343 = vld [vmem:[#allocation2 + $0x20] sm:$0xff]
    %1348 = vrot.lane.b32.xlu0 %v1339, 127
    %v1349 = vpop.permute.xlu0 %1348
    %1350 = vrot.lane.b32.xlu0 %v1340, 127
    %v1351 = vpop.permute.xlu0 %1350
    %1352 = vrot.lane.b32.xlu0 %v1341, 127
    %v1353 = vpop.permute.xlu0 %1352
    %1354 = vrot.lane.b32.xlu0 %v1342, 127
    %v1355 = vpop.permute.xlu0 %1354
    %v1356 = vsel %vm125, %v1349, %v1351
    %v1357 = vsel %vm125, %v1351, %v1353
    %v1358 = vsel %vm125, %v1353, %v1355
    %1359 = vrot.lane.b32.xlu0 %v1339, 126
    %v1360 = vpop.permute.xlu0 %1359
    %1361 = vrot.lane.b32.xlu0 %v1340, 126
    %v1362 = vpop.permute.xlu0 %1361
    %1363 = vrot.lane.b32.xlu0 %v1341, 126
    %v1364 = vpop.permute.xlu0 %1363
    %1365 = vrot.lane.b32.xlu0 %v1342, 126
    %v1366 = vpop.permute.xlu0 %1365
    %v1367 = vsel %vm137, %v1360, %v1362
    %v1368 = vsel %vm137, %v1362, %v1364
    %v1369 = vsel %vm137, %v1364, %v1366
    %1371 = vrot.lane.b32.xlu0 %v1339, 114
    %v1372 = vpop.permute.xlu0 %1371
    %1373 = vrot.lane.b32.xlu0 %v1340, 114
    %v1374 = vpop.permute.xlu0 %1373
    %1375 = vrot.lane.b32.xlu0 %v1341, 114
    %v1376 = vpop.permute.xlu0 %1375
    %1377 = vrot.lane.b32.xlu0 %v1342, 114
    %v1378 = vpop.permute.xlu0 %1377
    %1379 = vrot.lane.b32.xlu0 %v1343, 114
    %v1380 = vpop.permute.xlu0 %1379
    %v1381 = vsel %vm152, %v1372, %v1374
    %v1382 = vsel %vm152, %v1374, %v1376
    %v1383 = vsel %vm152, %v1376, %v1378
    %v1384 = vsel %vm152, %v1378, %v1380
    %1385 = vrot.lane.b32.xlu0 %v1340, 113
    %v1386 = vpop.permute.xlu0 %1385
    %1387 = vrot.lane.b32.xlu0 %v1341, 113
    %v1388 = vpop.permute.xlu0 %1387
    %1389 = vrot.lane.b32.xlu0 %v1342, 113
    %v1390 = vpop.permute.xlu0 %1389
    %1391 = vrot.lane.b32.xlu0 %v1343, 113
    %v1392 = vpop.permute.xlu0 %1391
    %v1393 = vsel %vm165, %v1386, %v1388
    %v1394 = vsel %vm165, %v1388, %v1390
    %v1395 = vsel %vm165, %v1390, %v1392
    %1396 = vrot.lane.b32.xlu0 %v1340, 112
    %v1397 = vpop.permute.xlu0 %1396
    %1398 = vrot.lane.b32.xlu0 %v1341, 112
    %v1399 = vpop.permute.xlu0 %1398
    %1400 = vrot.lane.b32.xlu0 %v1342, 112
    %v1401 = vpop.permute.xlu0 %1400
    %1402 = vrot.lane.b32.xlu0 %v1343, 112
    %v1403 = vpop.permute.xlu0 %1402
    %v1404 = vsel %vm177, %v1397, %v1399
    %v1405 = vsel %vm177, %v1399, %v1401
    %v1406 = vsel %vm177, %v1401, %v1403
    %1407 = vrot.lane.b32.xlu0 %v1340, 100
    %v1408 = vpop.permute.xlu0 %1407
    %1409 = vrot.lane.b32.xlu0 %v1341, 100
    %v1410 = vpop.permute.xlu0 %1409
    %1411 = vrot.lane.b32.xlu0 %v1342, 100
    %v1412 = vpop.permute.xlu0 %1411
    %1413 = vrot.lane.b32.xlu0 %v1343, 100
    %v1414 = vpop.permute.xlu0 %1413
    %v1415 = vsel %vm189, %v1408, %v1410
    %v1416 = vsel %vm189, %v1410, %v1412
    %v1417 = vsel %vm189, %v1412, %v1414
    %1418 = vrot.lane.b32.xlu0 %v1340, 99
    %v1419 = vpop.permute.xlu0 %1418
    %1420 = vrot.lane.b32.xlu0 %v1341, 99
    %v1421 = vpop.permute.xlu0 %1420
    %1422 = vrot.lane.b32.xlu0 %v1342, 99
    %v1423 = vpop.permute.xlu0 %1422
    %1424 = vrot.lane.b32.xlu0 %v1343, 99
    %v1425 = vpop.permute.xlu0 %1424
    %v1426 = vsel %vm201, %v1419, %v1421
    %v1427 = vsel %vm201, %v1421, %v1423
    %v1428 = vsel %vm201, %v1423, %v1425
    %1429 = vrot.lane.b32.xlu0 %v1340, 98
    %v1430 = vpop.permute.xlu0 %1429
    %1431 = vrot.lane.b32.xlu0 %v1341, 98
    %v1432 = vpop.permute.xlu0 %1431
    %1433 = vrot.lane.b32.xlu0 %v1342, 98
    %v1434 = vpop.permute.xlu0 %1433
    %1435 = vrot.lane.b32.xlu0 %v1343, 98
    %v1436 = vpop.permute.xlu0 %1435
    %v1437 = vsel %vm213, %v1430, %v1432
    %v1438 = vsel %vm213, %v1432, %v1434
    %v1439 = vsel %vm213, %v1434, %v1436
    %1440 = vrot.lane.b32.xlu0 %v1339, 15
    %v1441 = vpop.permute.xlu0 %1440
    %1442 = vrot.lane.b32.xlu0 %v1340, 15
    %v1443 = vpop.permute.xlu0 %1442
    %1444 = vrot.lane.b32.xlu0 %v1341, 15
    %v1445 = vpop.permute.xlu0 %1444
    %1446 = vrot.lane.b32.xlu0 %v1342, 15
    %v1447 = vpop.permute.xlu0 %1446
    %1448 = vrot.lane.b32.xlu0 %v1356, 15
    %v1449 = vpop.permute.xlu0 %1448
    %1450 = vrot.lane.b32.xlu0 %v1357, 15
    %v1451 = vpop.permute.xlu0 %1450
    %1452 = vrot.lane.b32.xlu0 %v1358, 15
    %v1453 = vpop.permute.xlu0 %1452
    %1454 = vrot.lane.b32.xlu0 %v1355, 15
    %v1455 = vpop.permute.xlu0 %1454
    %1456 = vrot.lane.b32.xlu0 %v1367, 15
    %v1457 = vpop.permute.xlu0 %1456
    %1458 = vrot.lane.b32.xlu0 %v1368, 15
    %v1459 = vpop.permute.xlu0 %1458
    %1460 = vrot.lane.b32.xlu0 %v1369, 15
    %v1461 = vpop.permute.xlu0 %1460
    %1462 = vrot.lane.b32.xlu0 %v1366, 15
    %v1463 = vpop.permute.xlu0 %1462
    %1464 = vrot.lane.b32.xlu0 %v1381, 15
    %v1465 = vpop.permute.xlu0 %1464
    %1466 = vrot.lane.b32.xlu0 %v1382, 15
    %v1467 = vpop.permute.xlu0 %1466
    %1468 = vrot.lane.b32.xlu0 %v1383, 15
    %v1469 = vpop.permute.xlu0 %1468
    %1470 = vrot.lane.b32.xlu0 %v1384, 15
    %v1471 = vpop.permute.xlu0 %1470
    %1472 = vrot.lane.b32.xlu0 %v1386, 15
    %v1473 = vpop.permute.xlu0 %1472
    %1474 = vrot.lane.b32.xlu0 %v1393, 15
    %v1475 = vpop.permute.xlu0 %1474
    %1476 = vrot.lane.b32.xlu0 %v1394, 15
    %v1477 = vpop.permute.xlu0 %1476
    %1478 = vrot.lane.b32.xlu0 %v1395, 15
    %v1479 = vpop.permute.xlu0 %1478
    %1480 = vrot.lane.b32.xlu0 %v1397, 15
    %v1481 = vpop.permute.xlu0 %1480
    %1482 = vrot.lane.b32.xlu0 %v1404, 15
    %v1483 = vpop.permute.xlu0 %1482
    %1484 = vrot.lane.b32.xlu0 %v1405, 15
    %v1485 = vpop.permute.xlu0 %1484
    %1486 = vrot.lane.b32.xlu0 %v1406, 15
    %v1487 = vpop.permute.xlu0 %1486
    %1488 = vrot.lane.b32.xlu0 %v1408, 15
    %v1489 = vpop.permute.xlu0 %1488
    %1490 = vrot.lane.b32.xlu0 %v1415, 15
    %v1491 = vpop.permute.xlu0 %1490
    %1492 = vrot.lane.b32.xlu0 %v1416, 15
    %v1493 = vpop.permute.xlu0 %1492
    %1494 = vrot.lane.b32.xlu0 %v1417, 15
    %v1495 = vpop.permute.xlu0 %1494
    %1496 = vrot.lane.b32.xlu0 %v1419, 15
    %v1497 = vpop.permute.xlu0 %1496
    %1498 = vrot.lane.b32.xlu0 %v1426, 15
    %v1499 = vpop.permute.xlu0 %1498
    %1500 = vrot.lane.b32.xlu0 %v1427, 15
    %v1501 = vpop.permute.xlu0 %1500
    %1502 = vrot.lane.b32.xlu0 %v1428, 15
    %v1503 = vpop.permute.xlu0 %1502
    %1504 = vrot.lane.b32.xlu0 %v1430, 15
    %v1505 = vpop.permute.xlu0 %1504
    %1506 = vrot.lane.b32.xlu0 %v1437, 15
    %v1507 = vpop.permute.xlu0 %1506
    %1508 = vrot.lane.b32.xlu0 %v1438, 15
    %v1509 = vpop.permute.xlu0 %1508
    %1510 = vrot.lane.b32.xlu0 %v1439, 15
    %v1511 = vpop.permute.xlu0 %1510
    %v1512 = vsel %vm295, %v1441, %v1443
    %v1513 = vsel %vm295, %v1443, %v1445
    %v1514 = vsel %vm295, %v1445, %v1447
    %v1515 = vsel %vm295, %v1449, %v1451
    %v1516 = vsel %vm295, %v1451, %v1453
    %v1517 = vsel %vm295, %v1453, %v1455
    %v1518 = vsel %vm295, %v1457, %v1459
    %v1519 = vsel %vm295, %v1459, %v1461
    %v1520 = vsel %vm295, %v1461, %v1463
    %v1521 = vsel %vm295, %v1465, %v1467
    %v1522 = vsel %vm295, %v1467, %v1469
    %v1523 = vsel %vm295, %v1469, %v1471
    %v1524 = vsel %vm295, %v1473, %v1475
    %v1525 = vsel %vm295, %v1475, %v1477
    %v1526 = vsel %vm295, %v1477, %v1479
    %v1527 = vsel %vm295, %v1481, %v1483
    %v1528 = vsel %vm295, %v1483, %v1485
    %v1529 = vsel %vm295, %v1485, %v1487
    %v1530 = vsel %vm295, %v1489, %v1491
    %v1531 = vsel %vm295, %v1491, %v1493
    %v1532 = vsel %vm295, %v1493, %v1495
    %v1533 = vsel %vm295, %v1497, %v1499
    %v1534 = vsel %vm295, %v1499, %v1501
    %v1535 = vsel %vm295, %v1501, %v1503
    %v1536 = vsel %vm295, %v1505, %v1507
    %v1537 = vsel %vm295, %v1507, %v1509
    %v1538 = vsel %vm295, %v1509, %v1511
    %v1576 = vsel %vm359, %v1337, 0
    %v1579 = vsel %vm359, %v1338, 0
    %1581 = vmatprep.subr.mxu0 %v1513
    %1582 = vmatpush1.msra.mxu0 %v1512
    %1583 = vmatprep.subr.mxu0 %v1516
    %1584 = vmatpush1.msra.mxu0 %v1515
    %1585 = vmatprep.subr.mxu0 %v1519
    %1586 = vmatpush1.msra.mxu0 %v1518
    %1587 = vmatprep.subr.mxu0 %v1522
    %1588 = vmatpush1.msra.mxu0 %v1521
    %1589 = vmatprep.subr.mxu0 %v1525
    %1590 = vmatpush1.msra.mxu0 %v1524
    %1591 = vmatprep.subr.mxu0 %v1528
    %1592 = vmatpush1.msra.mxu0 %v1527
    %1593 = vmatprep.subr.mxu0 %v1531
    %1594 = vmatpush1.msra.mxu0 %v1530
    %1595 = vmatprep.subr.mxu0 %v1534
    %1596 = vmatpush1.msra.mxu0 %v1533
    %1597 = vmatprep.subr.mxu0 %v1537
    %1598 = vmatpush1.msra.mxu0 %v1536
    %1599 = vmatprep.subr.mxu0 0.0
    %1600 = vmatpush1.msra.mxu0 0.0
    %1601 = vmatprep.subr.mxu0 0.0
    %1602 = vmatpush1.msra.mxu0 0.0
    %1603 = vmatprep.subr.mxu0 0.0
    %1604 = vmatpush1.msra.mxu0 0.0
    %1605 = vmatprep.subr.mxu0 0.0
    %1606 = vmatpush1.msra.mxu0 0.0
    %1607 = vmatprep.subr.mxu0 0.0
    %1608 = vmatpush1.msra.mxu0 0.0
    %1609 = vmatprep.subr.mxu0 0.0
    %1610 = vmatpush1.msra.mxu0 0.0
    %1611 = vmatprep.subr.mxu0 0.0
    %1612 = vmatpush1.msra.mxu0 0.0
    %1613 = vmatprep.subr.mxu0 0.0
    %1614 = vmatpush1.msra.mxu0 0.0
    %1615 = vmatprep.subr.mxu0 0.0
    %1616 = vmatpush1.msra.mxu0 0.0
    %1617 = vmatprep.subr.mxu0 0.0
    %1618 = vmatpush1.msra.mxu0 0.0
    %1619 = vmatprep.subr.mxu0 0.0
    %1620 = vmatpush1.msra.mxu0 0.0
    %1621 = vmatprep.subr.mxu0 0.0
    %1622 = vmatpush1.msra.mxu0 0.0
    %1623 = vmatprep.subr.mxu0 0.0
    %1624 = vmatpush1.msra.mxu0 0.0
    %1625 = vmatprep.subr.mxu0 0.0
    %1626 = vmatpush1.msra.mxu0 0.0
    %1627 = vmatprep.subr.mxu0 0.0
    %1628 = vmatpush1.msra.mxu0 0.0
    %1629 = vmatprep.subr.mxu0 0.0
    %1630 = vmatpush1.msra.mxu0 0.0
    %1631 = vmatprep.subr.mxu0 0.0
    %1632 = vmatpush1.msra.mxu0 0.0
    %1633 = vmatprep.subr.mxu0 0.0
    %1634 = vmatpush1.msra.mxu0 0.0
    %1635 = vmatprep.subr.mxu0 0.0
    %1636 = vmatpush1.msra.mxu0 0.0
    %1637 = vmatprep.subr.mxu0 0.0
    %1638 = vmatpush1.msra.mxu0 0.0
    %1639 = vmatprep.subr.mxu0 0.0
    %1640 = vmatpush1.msra.mxu0 0.0
    %1641 = vmatprep.subr.mxu0 0.0
    %1642 = vmatpush1.msra.mxu0 0.0
    %1643 = vmatprep.subr.mxu0 0.0
    %1644 = vmatpush1.msra.mxu0 0.0
    %1645 = vmatprep.mubr.f32.mxu0 0.0
    %1646 = vmatmul.mubr.f32.gmra.mrb[0].mxu0 %v1576
    %v1647 = vpop.f32.mrb[0].mxu0
    %v1648 = vadd.f32 0.0, %v1647
    %v1649 = vpop.f32.mrb[0].mxu0
    %v1650 = vadd.f32 0.0, %v1649
    %1651 = vmatprep.mubr.f32.mxu0 0.0
    %1652 = vmatmul.mubr.f32.gmra.mrb[0].mxu0 %v1579
    %v1653 = vpop.f32.mrb[0].mxu0
    %v1654 = vadd.f32 0.0, %v1653
    %v1655 = vpop.f32.mrb[0].mxu0
    %v1656 = vadd.f32 0.0, %v1655
    %1657 = vdwg.mxu0
    %1658 = vmatprep.subr.mxu0 %v1447
    %1659 = vmatpush1.msra.mxu0 %v1514
    %1660 = vmatprep.subr.mxu0 %v1455
    %1661 = vmatpush1.msra.mxu0 %v1517
    %1662 = vmatprep.subr.mxu0 %v1463
    %1663 = vmatpush1.msra.mxu0 %v1520
    %1664 = vmatprep.subr.mxu0 %v1471
    %1665 = vmatpush1.msra.mxu0 %v1523
    %1666 = vmatprep.subr.mxu0 %v1479
    %1667 = vmatpush1.msra.mxu0 %v1526
    %1668 = vmatprep.subr.mxu0 %v1487
    %1669 = vmatpush1.msra.mxu0 %v1529
    %1670 = vmatprep.subr.mxu0 %v1495
    %1671 = vmatpush1.msra.mxu0 %v1532
    %1672 = vmatprep.subr.mxu0 %v1503
    %1673 = vmatpush1.msra.mxu0 %v1535
    %1674 = vmatprep.subr.mxu0 %v1511
    %1675 = vmatpush1.msra.mxu0 %v1538
    %1676 = vmatprep.subr.mxu0 0.0
    %1677 = vmatpush1.msra.mxu0 0.0
    %1678 = vmatprep.subr.mxu0 0.0
    %1679 = vmatpush1.msra.mxu0 0.0
    %1680 = vmatprep.subr.mxu0 0.0
    %1681 = vmatpush1.msra.mxu0 0.0
    %1682 = vmatprep.subr.mxu0 0.0
    %1683 = vmatpush1.msra.mxu0 0.0
    %1684 = vmatprep.subr.mxu0 0.0
    %1685 = vmatpush1.msra.mxu0 0.0
    %1686 = vmatprep.subr.mxu0 0.0
    %1687 = vmatpush1.msra.mxu0 0.0
    %1688 = vmatprep.subr.mxu0 0.0
    %1689 = vmatpush1.msra.mxu0 0.0
    %1690 = vmatprep.subr.mxu0 0.0
    %1691 = vmatpush1.msra.mxu0 0.0
    %1692 = vmatprep.subr.mxu0 0.0
    %1693 = vmatpush1.msra.mxu0 0.0
    %1694 = vmatprep.subr.mxu0 0.0
    %1695 = vmatpush1.msra.mxu0 0.0
    %1696 = vmatprep.subr.mxu0 0.0
    %1697 = vmatpush1.msra.mxu0 0.0
    %1698 = vmatprep.subr.mxu0 0.0
    %1699 = vmatpush1.msra.mxu0 0.0
    %1700 = vmatprep.subr.mxu0 0.0
    %1701 = vmatpush1.msra.mxu0 0.0
    %1702 = vmatprep.subr.mxu0 0.0
    %1703 = vmatpush1.msra.mxu0 0.0
    %1704 = vmatprep.subr.mxu0 0.0
    %1705 = vmatpush1.msra.mxu0 0.0
    %1706 = vmatprep.subr.mxu0 0.0
    %1707 = vmatpush1.msra.mxu0 0.0
    %1708 = vmatprep.subr.mxu0 0.0
    %1709 = vmatpush1.msra.mxu0 0.0
    %1710 = vmatprep.subr.mxu0 0.0
    %1711 = vmatpush1.msra.mxu0 0.0
    %1712 = vmatprep.subr.mxu0 0.0
    %1713 = vmatpush1.msra.mxu0 0.0
    %1714 = vmatprep.subr.mxu0 0.0
    %1715 = vmatpush1.msra.mxu0 0.0
    %1716 = vmatprep.subr.mxu0 0.0
    %1717 = vmatpush1.msra.mxu0 0.0
    %1718 = vmatprep.subr.mxu0 0.0
    %1719 = vmatpush1.msra.mxu0 0.0
    %1720 = vmatprep.subr.mxu0 0.0
    %1721 = vmatpush1.msra.mxu0 0.0
    %1722 = vmatprep.mubr.f32.mxu0 0.0
    %1723 = vmatmul.mubr.f32.gmra.mrb[0].mxu0 %v1576
    %v1724 = vpop.f32.mrb[0].mxu0
    %v1725 = vadd.f32 0.0, %v1724
    %v1726 = vpop.f32.mrb[0].mxu0
    %v1727 = vadd.f32 0.0, %v1726
    %1728 = vmatprep.mubr.f32.mxu0 0.0
    %1729 = vmatmul.mubr.f32.gmra.mrb[0].mxu0 %v1579
    %v1730 = vpop.f32.mrb[0].mxu0
    %v1731 = vadd.f32 0.0, %v1730
    %v1732 = vpop.f32.mrb[0].mxu0
    %v1733 = vadd.f32 0.0, %v1732
    %1734 = vdwg.mxu0
    %v1735 = vadd.f32 %v1234, %v1648
    %v1736 = vadd.f32 %v1236, %v1650
    %v1737 = vadd.f32 %v1311, %v1725
    %v1738 = vadd.f32 %v1313, %v1727
    %v1739 = vld [vmem:[%s11] sm:$0xff]
    %1741 = vset.pattern.permute.xlu0 0
    %1742 = vperm.xlu0 %1741, %v1739
    %v1743 = vpop.permute.xlu0 %1742
    %v1745 = vadd.f32 %v1735, %v1743
    %v1746 = vadd.f32 %v1736, %v1743
    %v1747 = vadd.f32 %v1737, %v1743
    %v1748 = vadd.f32 %v1738, %v1743
    %v1749 = vmax.f32 %v1745, 0.0
    %v1750 = vmax.f32 %v1746, 0.0
    %v1751 = vmax.f32 %v1747, 0.0
    %v1752 = vmax.f32 %v1748, 0.0
    %v1753 = vld [vmem:[%s19] sm:$0x1]
    %v1754 = vld [vmem:[%s15] sm:$0xff]
    %v1755 = vld [vmem:[%s15 + $0x8] sm:$0xff]
    %v1756 = vld [vmem:[%s15 + $0x10] sm:$0xff]
    %v1757 = vld [vmem:[%s15 + $0x18] sm:$0xff]
    %v1758 = vld [vmem:[%s15 + $0x20] sm:$0xff]
    %v1759 = vld [vmem:[%s15 + $0x28] sm:$0xff]
    %v1760 = vld [vmem:[%s15 + $0x30] sm:$0xff]
    %v1761 = vld [vmem:[%s15 + $0x38] sm:$0xff]
    %v1762 = vld [vmem:[%s15 + $0x40] sm:$0xff]
    %v1763 = vld [vmem:[%s15 + $0x48] sm:$0xff]
    %v1764 = vld [vmem:[%s15 + $0x50] sm:$0xff]
    %v1765 = vld [vmem:[%s15 + $0x58] sm:$0xff]
    %v1766 = vld [vmem:[%s15 + $0x60] sm:$0xff]
    %v1767 = vld [vmem:[%s15 + $0x68] sm:$0xff]
    %v1768 = vld [vmem:[%s15 + $0x70] sm:$0xff]
    %v1769 = vld [vmem:[%s15 + $0x78] sm:$0xff]
    %v1770 = vld [vmem:[%s15 + $0x80] sm:$0xff]
    %v1771 = vld [vmem:[%s15 + $0x88] sm:$0xff]
    %v1772 = vld [vmem:[%s15 + $0x90] sm:$0xff]
    %v1773 = vld [vmem:[%s15 + $0x98] sm:$0xff]
    %v1774 = vld [vmem:[%s15 + $0xa0] sm:$0xff]
    %v1775 = vld [vmem:[%s15 + $0xa8] sm:$0xff]
    %v1776 = vld [vmem:[%s15 + $0xb0] sm:$0xff]
    %v1777 = vld [vmem:[%s15 + $0xb8] sm:$0xff]
    %v1778 = vld [vmem:[%s15 + $0xc0] sm:$0xf]
    %vm1779 = vcmask 556032
    %v1781 = vsel %vm1779, %v1750, 0
    %vm1783 = vcmask 1043456
    %v1785 = vsel %vm1783, %v1778, 0
    %1787 = vmatprep.subr.mxu0 0.0
    %1788 = vmatpush1.msra.mxu0 %v1754
    %1789 = vmatprep.subr.mxu0 0.0
    %1790 = vmatpush1.msra.mxu0 %v1755
    %1791 = vmatprep.subr.mxu0 0.0
    %1792 = vmatpush1.msra.mxu0 %v1756
    %1793 = vmatprep.subr.mxu0 0.0
    %1794 = vmatpush1.msra.mxu0 %v1757
    %1795 = vmatprep.subr.mxu0 0.0
    %1796 = vmatpush1.msra.mxu0 %v1758
    %1797 = vmatprep.subr.mxu0 0.0
    %1798 = vmatpush1.msra.mxu0 %v1759
    %1799 = vmatprep.subr.mxu0 0.0
    %1800 = vmatpush1.msra.mxu0 %v1760
    %1801 = vmatprep.subr.mxu0 0.0
    %1802 = vmatpush1.msra.mxu0 %v1761
    %1803 = vmatprep.subr.mxu0 0.0
    %1804 = vmatpush1.msra.mxu0 %v1762
    %1805 = vmatprep.subr.mxu0 0.0
    %1806 = vmatpush1.msra.mxu0 %v1763
    %1807 = vmatprep.subr.mxu0 0.0
    %1808 = vmatpush1.msra.mxu0 %v1764
    %1809 = vmatprep.subr.mxu0 0.0
    %1810 = vmatpush1.msra.mxu0 %v1765
    %1811 = vmatprep.subr.mxu0 0.0
    %1812 = vmatpush1.msra.mxu0 %v1766
    %1813 = vmatprep.subr.mxu0 0.0
    %1814 = vmatpush1.msra.mxu0 %v1767
    %1815 = vmatprep.subr.mxu0 0.0
    %1816 = vmatpush1.msra.mxu0 %v1768
    %1817 = vmatprep.subr.mxu0 0.0
    %1818 = vmatpush1.msra.mxu0 %v1769
    %1819 = vmatprep.subr.mxu0 0.0
    %1820 = vmatpush1.msra.mxu0 %v1770
    %1821 = vmatprep.subr.mxu0 0.0
    %1822 = vmatpush1.msra.mxu0 %v1771
    %1823 = vmatprep.subr.mxu0 0.0
    %1824 = vmatpush1.msra.mxu0 %v1772
    %1825 = vmatprep.subr.mxu0 0.0
    %1826 = vmatpush1.msra.mxu0 %v1773
    %1827 = vmatprep.subr.mxu0 0.0
    %1828 = vmatpush1.msra.mxu0 %v1774
    %1829 = vmatprep.subr.mxu0 0.0
    %1830 = vmatpush1.msra.mxu0 %v1775
    %1831 = vmatprep.subr.mxu0 0.0
    %1832 = vmatpush1.msra.mxu0 %v1776
    %1833 = vmatprep.subr.mxu0 0.0
    %1834 = vmatpush1.msra.mxu0 %v1777
    %1835 = vmatprep.subr.mxu0 0.0
    %1836 = vmatpush1.msra.mxu0 %v1785
    %1837 = vmatprep.subr.mxu0 0.0
    %1838 = vmatpush1.msra.mxu0 0.0
    %1839 = vmatprep.subr.mxu0 0.0
    %1840 = vmatpush1.msra.mxu0 0.0
    %1841 = vmatprep.subr.mxu0 0.0
    %1842 = vmatpush1.msra.mxu0 0.0
    %1843 = vmatprep.subr.mxu0 0.0
    %1844 = vmatpush1.msra.mxu0 0.0
    %1845 = vmatprep.subr.mxu0 0.0
    %1846 = vmatpush1.msra.mxu0 0.0
    %1847 = vmatprep.subr.mxu0 0.0
    %1848 = vmatpush1.msra.mxu0 0.0
    %1849 = vmatprep.subr.mxu0 0.0
    %1850 = vmatpush1.msra.mxu0 0.0
    %1851 = vmatprep.mubr.f32.mxu0 %v1781
    %1852 = vmatmul.mubr.f32.gmra.mrb[0].mxu0 %v1749
    %v1853 = vpop.f32.mrb[0].mxu0
    %v1854 = vadd.f32 0.0, %v1853
    %v1855 = vpop.f32.mrb[0].mxu0
    %1856 = vdwg.mxu0
    %v1857 = vmul.f32 %v1854, %v96
    %vm1858 = vcmask 654336
    %v1859 = vsel %vm1858, %v1857, 0.0
    %v1860 = vrot.slane %v1859, 4
    %v1861 = vadd.f32 %v1859, %v1860
    %v1862 = vrot.slane %v1861, 2
    %v1863 = vadd.f32 %v1861, %v1862
    %v1864 = vrot.slane %v1863, 1
    %v1865 = vadd.f32 %v1863, %v1864
    %v1867 = vsel %vm1858, %v1865, 0
    %1869 = vmatprep.subr.mxu0 0.0
    %1870 = vmatpush1.msra.mxu0 %v97
    %1871 = vmatprep.subr.mxu0 0.0
    %1872 = vmatpush1.msra.mxu0 %v98
    %1873 = vmatprep.subr.mxu0 0.0
    %1874 = vmatpush1.msra.mxu0 %v99
    %1875 = vmatprep.subr.mxu0 0.0
    %1876 = vmatpush1.msra.mxu0 %v100
    %1877 = vmatprep.subr.mxu0 0.0
    %1878 = vmatpush1.msra.mxu0 %v101
    %1879 = vmatprep.subr.mxu0 0.0
    %1880 = vmatpush1.msra.mxu0 %v102
    %1881 = vmatprep.subr.mxu0 0.0
    %1882 = vmatpush1.msra.mxu0 %v103
    %1883 = vmatprep.subr.mxu0 0.0
    %1884 = vmatpush1.msra.mxu0 %v104
    %1885 = vmatprep.subr.mxu0 0.0
    %1886 = vmatpush1.msra.mxu0 %v105
    %1887 = vmatprep.subr.mxu0 0.0
    %1888 = vmatpush1.msra.mxu0 %v106
    %1889 = vmatprep.subr.mxu0 0.0
    %1890 = vmatpush1.msra.mxu0 0.0
    %1891 = vmatprep.subr.mxu0 0.0
    %1892 = vmatpush1.msra.mxu0 0.0
    %1893 = vmatprep.subr.mxu0 0.0
    %1894 = vmatpush1.msra.mxu0 0.0
    %1895 = vmatprep.subr.mxu0 0.0
    %1896 = vmatpush1.msra.mxu0 0.0
    %1897 = vmatprep.subr.mxu0 0.0
    %1898 = vmatpush1.msra.mxu0 0.0
    %1899 = vmatprep.subr.mxu0 0.0
    %1900 = vmatpush1.msra.mxu0 0.0
    %1901 = vmatprep.subr.mxu0 0.0
    %1902 = vmatpush1.msra.mxu0 0.0
    %1903 = vmatprep.subr.mxu0 0.0
    %1904 = vmatpush1.msra.mxu0 0.0
    %1905 = vmatprep.subr.mxu0 0.0
    %1906 = vmatpush1.msra.mxu0 0.0
    %1907 = vmatprep.subr.mxu0 0.0
    %1908 = vmatpush1.msra.mxu0 0.0
    %1909 = vmatprep.subr.mxu0 0.0
    %1910 = vmatpush1.msra.mxu0 0.0
    %1911 = vmatprep.subr.mxu0 0.0
    %1912 = vmatpush1.msra.mxu0 0.0
    %1913 = vmatprep.subr.mxu0 0.0
    %1914 = vmatpush1.msra.mxu0 0.0
    %1915 = vmatprep.subr.mxu0 0.0
    %1916 = vmatpush1.msra.mxu0 0.0
    %1917 = vmatprep.subr.mxu0 0.0
    %1918 = vmatpush1.msra.mxu0 0.0
    %1919 = vmatprep.subr.mxu0 0.0
    %1920 = vmatpush1.msra.mxu0 0.0
    %1921 = vmatprep.subr.mxu0 0.0
    %1922 = vmatpush1.msra.mxu0 0.0
    %1923 = vmatprep.subr.mxu0 0.0
    %1924 = vmatpush1.msra.mxu0 0.0
    %1925 = vmatprep.subr.mxu0 0.0
    %1926 = vmatpush1.msra.mxu0 0.0
    %1927 = vmatprep.subr.mxu0 0.0
    %1928 = vmatpush1.msra.mxu0 0.0
    %1929 = vmatprep.subr.mxu0 0.0
    %1930 = vmatpush1.msra.mxu0 0.0
    %1931 = vmatprep.subr.mxu0 0.0
    %1932 = vmatpush1.msra.mxu0 0.0
    %1933 = vmatprep.mubr.f32.mxu0 0.0
    %1934 = vmatmul.mubr.f32.gmra.mrb[0].mxu0 %v1867
    %v1935 = vpop.f32.mrb[0].mxu0
    %v1936 = vadd.f32 0.0, %v1935
    %v1937 = vpop.f32.mrb[0].mxu0
    %1938 = vdwg.mxu0
    %1941 = vrot.lane.b32.xlu0 %v1750, 60
    %v1942 = vpop.permute.xlu0 %1941
    %1943 = vrot.lane.b32.xlu0 %v1751, 60
    %v1944 = vpop.permute.xlu0 %1943
    %1945 = vrot.lane.b32.xlu0 %v1752, 60
    %v1946 = vpop.permute.xlu0 %1945
    %vm1947 = vcmask 490496
    %v1948 = vsel %vm1947, %v1942, %v1944
    %v1949 = vsel %vm1947, %v1944, %v1946
    %v1951 = vsel %vm1779, %v1949, 0
    %1953 = vmatprep.subr.mxu0 0.0
    %1954 = vmatpush1.msra.mxu0 %v1754
    %1955 = vmatprep.subr.mxu0 0.0
    %1956 = vmatpush1.msra.mxu0 %v1755
    %1957 = vmatprep.subr.mxu0 0.0
    %1958 = vmatpush1.msra.mxu0 %v1756
    %1959 = vmatprep.subr.mxu0 0.0
    %1960 = vmatpush1.msra.mxu0 %v1757
    %1961 = vmatprep.subr.mxu0 0.0
    %1962 = vmatpush1.msra.mxu0 %v1758
    %1963 = vmatprep.subr.mxu0 0.0
    %1964 = vmatpush1.msra.mxu0 %v1759
    %1965 = vmatprep.subr.mxu0 0.0
    %1966 = vmatpush1.msra.mxu0 %v1760
    %1967 = vmatprep.subr.mxu0 0.0
    %1968 = vmatpush1.msra.mxu0 %v1761
    %1969 = vmatprep.subr.mxu0 0.0
    %1970 = vmatpush1.msra.mxu0 %v1762
    %1971 = vmatprep.subr.mxu0 0.0
    %1972 = vmatpush1.msra.mxu0 %v1763
    %1973 = vmatprep.subr.mxu0 0.0
    %1974 = vmatpush1.msra.mxu0 %v1764
    %1975 = vmatprep.subr.mxu0 0.0
    %1976 = vmatpush1.msra.mxu0 %v1765
    %1977 = vmatprep.subr.mxu0 0.0
    %1978 = vmatpush1.msra.mxu0 %v1766
    %1979 = vmatprep.subr.mxu0 0.0
    %1980 = vmatpush1.msra.mxu0 %v1767
    %1981 = vmatprep.subr.mxu0 0.0
    %1982 = vmatpush1.msra.mxu0 %v1768
    %1983 = vmatprep.subr.mxu0 0.0
    %1984 = vmatpush1.msra.mxu0 %v1769
    %1985 = vmatprep.subr.mxu0 0.0
    %1986 = vmatpush1.msra.mxu0 %v1770
    %1987 = vmatprep.subr.mxu0 0.0
    %1988 = vmatpush1.msra.mxu0 %v1771
    %1989 = vmatprep.subr.mxu0 0.0
    %1990 = vmatpush1.msra.mxu0 %v1772
    %1991 = vmatprep.subr.mxu0 0.0
    %1992 = vmatpush1.msra.mxu0 %v1773
    %1993 = vmatprep.subr.mxu0 0.0
    %1994 = vmatpush1.msra.mxu0 %v1774
    %1995 = vmatprep.subr.mxu0 0.0
    %1996 = vmatpush1.msra.mxu0 %v1775
    %1997 = vmatprep.subr.mxu0 0.0
    %1998 = vmatpush1.msra.mxu0 %v1776
    %1999 = vmatprep.subr.mxu0 0.0
    %2000 = vmatpush1.msra.mxu0 %v1777
    %2001 = vmatprep.subr.mxu0 0.0
    %2002 = vmatpush1.msra.mxu0 %v1785
    %2003 = vmatprep.subr.mxu0 0.0
    %2004 = vmatpush1.msra.mxu0 0.0
    %2005 = vmatprep.subr.mxu0 0.0
    %2006 = vmatpush1.msra.mxu0 0.0
    %2007 = vmatprep.subr.mxu0 0.0
    %2008 = vmatpush1.msra.mxu0 0.0
    %2009 = vmatprep.subr.mxu0 0.0
    %2010 = vmatpush1.msra.mxu0 0.0
    %2011 = vmatprep.subr.mxu0 0.0
    %2012 = vmatpush1.msra.mxu0 0.0
    %2013 = vmatprep.subr.mxu0 0.0
    %2014 = vmatpush1.msra.mxu0 0.0
    %2015 = vmatprep.subr.mxu0 0.0
    %2016 = vmatpush1.msra.mxu0 0.0
    %2017 = vmatprep.mubr.f32.mxu0 %v1951
    %2018 = vmatmul.mubr.f32.gmra.mrb[0].mxu0 %v1948
    %v2019 = vpop.f32.mrb[0].mxu0
    %v2020 = vadd.f32 0.0, %v2019
    %v2021 = vpop.f32.mrb[0].mxu0
    %2022 = vdwg.mxu0
    %v2023 = vmul.f32 %v2020, %v96
    %v2024 = vsel %vm1858, %v2023, 0.0
    %v2025 = vrot.slane %v2024, 4
    %v2026 = vadd.f32 %v2024, %v2025
    %v2027 = vrot.slane %v2026, 2
    %v2028 = vadd.f32 %v2026, %v2027
    %v2029 = vrot.slane %v2028, 1
    %v2030 = vadd.f32 %v2028, %v2029
    %v2032 = vsel %vm1858, %v2030, 0
    %2034 = vmatprep.subr.mxu0 0.0
    %2035 = vmatpush1.msra.mxu0 %v97
    %2036 = vmatprep.subr.mxu0 0.0
    %2037 = vmatpush1.msra.mxu0 %v98
    %2038 = vmatprep.subr.mxu0 0.0
    %2039 = vmatpush1.msra.mxu0 %v99
    %2040 = vmatprep.subr.mxu0 0.0
    %2041 = vmatpush1.msra.mxu0 %v100
    %2042 = vmatprep.subr.mxu0 0.0
    %2043 = vmatpush1.msra.mxu0 %v101
    %2044 = vmatprep.subr.mxu0 0.0
    %2045 = vmatpush1.msra.mxu0 %v102
    %2046 = vmatprep.subr.mxu0 0.0
    %2047 = vmatpush1.msra.mxu0 %v103
    %2048 = vmatprep.subr.mxu0 0.0
    %2049 = vmatpush1.msra.mxu0 %v104
    %2050 = vmatprep.subr.mxu0 0.0
    %2051 = vmatpush1.msra.mxu0 %v105
    %2052 = vmatprep.subr.mxu0 0.0
    %2053 = vmatpush1.msra.mxu0 %v106
    %2054 = vmatprep.subr.mxu0 0.0
    %2055 = vmatpush1.msra.mxu0 0.0
    %2056 = vmatprep.subr.mxu0 0.0
    %2057 = vmatpush1.msra.mxu0 0.0
    %2058 = vmatprep.subr.mxu0 0.0
    %2059 = vmatpush1.msra.mxu0 0.0
    %2060 = vmatprep.subr.mxu0 0.0
    %2061 = vmatpush1.msra.mxu0 0.0
    %2062 = vmatprep.subr.mxu0 0.0
    %2063 = vmatpush1.msra.mxu0 0.0
    %2064 = vmatprep.subr.mxu0 0.0
    %2065 = vmatpush1.msra.mxu0 0.0
    %2066 = vmatprep.subr.mxu0 0.0
    %2067 = vmatpush1.msra.mxu0 0.0
    %2068 = vmatprep.subr.mxu0 0.0
    %2069 = vmatpush1.msra.mxu0 0.0
    %2070 = vmatprep.subr.mxu0 0.0
    %2071 = vmatpush1.msra.mxu0 0.0
    %2072 = vmatprep.subr.mxu0 0.0
    %2073 = vmatpush1.msra.mxu0 0.0
    %2074 = vmatprep.subr.mxu0 0.0
    %2075 = vmatpush1.msra.mxu0 0.0
    %2076 = vmatprep.subr.mxu0 0.0
    %2077 = vmatpush1.msra.mxu0 0.0
    %2078 = vmatprep.subr.mxu0 0.0
    %2079 = vmatpush1.msra.mxu0 0.0
    %2080 = vmatprep.subr.mxu0 0.0
    %2081 = vmatpush1.msra.mxu0 0.0
    %2082 = vmatprep.subr.mxu0 0.0
    %2083 = vmatpush1.msra.mxu0 0.0
    %2084 = vmatprep.subr.mxu0 0.0
    %2085 = vmatpush1.msra.mxu0 0.0
    %2086 = vmatprep.subr.mxu0 0.0
    %2087 = vmatpush1.msra.mxu0 0.0
    %2088 = vmatprep.subr.mxu0 0.0
    %2089 = vmatpush1.msra.mxu0 0.0
    %2090 = vmatprep.subr.mxu0 0.0
    %2091 = vmatpush1.msra.mxu0 0.0
    %2092 = vmatprep.subr.mxu0 0.0
    %2093 = vmatpush1.msra.mxu0 0.0
    %2094 = vmatprep.subr.mxu0 0.0
    %2095 = vmatpush1.msra.mxu0 0.0
    %2096 = vmatprep.subr.mxu0 0.0
    %2097 = vmatpush1.msra.mxu0 0.0
    %2098 = vmatprep.mubr.f32.mxu0 0.0
    %2099 = vmatmul.mubr.f32.gmra.mrb[0].mxu0 %v2032
    %v2100 = vpop.f32.mrb[0].mxu0
    %v2101 = vadd.f32 0.0, %v2100
    %v2102 = vpop.f32.mrb[0].mxu0
    %2103 = vdwg.mxu0
    %v2105 = vrot.slane %v2101, 7
    %vm2107 = vcmask 1040384
    %v2108 = vsel %vm2107, %v1936, %v2105
    %v2110 = vlaneseq
    %v2111 = vshrl.u32 %v2110, 7
    %v2112 = vsub.s32 0, %v2111
    %v2113 = vrot.slane %v1753, %v2112
    %v2115 = vadd.f32 %v2113, %v2108
    %v2116 = vld [vmem:[%s12] sm:$0xff]
    %2118 = vset.pattern.permute.xlu0 0
    %2119 = vperm.xlu0 %2118, %v2116
    %v2120 = vpop.permute.xlu0 %2119
    %v2122 = vadd.f32 %v1654, %v2120
    %v2123 = vadd.f32 %v1656, %v2120
    %v2124 = vadd.f32 %v1731, %v2120
    %v2125 = vadd.f32 %v1733, %v2120
    %v2126 = vmax.f32 %v2122, 0.0
    %v2127 = vmax.f32 %v2123, 0.0
    %v2128 = vmax.f32 %v2124, 0.0
    %v2129 = vmax.f32 %v2125, 0.0
    %v2130 = vmul.f32 %v2126, %v79
    %v2131 = vmul.f32 %v2127, %v83
    %v2132 = vmul.f32 %v2128, %v87
    %v2133 = vmul.f32 %v2129, %v91
    %2134 = vst [vmem:[#allocation3 + $0x8] sm:$0xff] %v2130
    %2135 = vst [vmem:[#allocation3 + $0x10] sm:$0xff] %v2131
    %2136 = vst [vmem:[#allocation3 + $0x18] sm:$0xff] %v2132
    %2137 = vst.msk [vmem:[#allocation3 + $0x20] sm:$0xff] %vm69, %v2133
    %v2138 = vld [vmem:[%s6] sm:$0xff]
    %v2139 = vld [vmem:[#allocation3] sm:$0xff]
    %v2140 = vld [vmem:[#allocation3 + $0x8] sm:$0xff]
    %v2141 = vld [vmem:[#allocation3 + $0x10] sm:$0xff]
    %v2142 = vld [vmem:[#allocation3 + $0x18] sm:$0xff]
    %v2143 = vld [vmem:[#allocation3 + $0x20] sm:$0xff]
    %2148 = vrot.lane.b32.xlu0 %v2139, 127
    %v2149 = vpop.permute.xlu0 %2148
    %2150 = vrot.lane.b32.xlu0 %v2140, 127
    %v2151 = vpop.permute.xlu0 %2150
    %2152 = vrot.lane.b32.xlu0 %v2141, 127
    %v2153 = vpop.permute.xlu0 %2152
    %2154 = vrot.lane.b32.xlu0 %v2142, 127
    %v2155 = vpop.permute.xlu0 %2154
    %v2156 = vsel %vm125, %v2149, %v2151
    %v2157 = vsel %vm125, %v2151, %v2153
    %v2158 = vsel %vm125, %v2153, %v2155
    %2159 = vrot.lane.b32.xlu0 %v2139, 126
    %v2160 = vpop.permute.xlu0 %2159
    %2161 = vrot.lane.b32.xlu0 %v2140, 126
    %v2162 = vpop.permute.xlu0 %2161
    %2163 = vrot.lane.b32.xlu0 %v2141, 126
    %v2164 = vpop.permute.xlu0 %2163
    %2165 = vrot.lane.b32.xlu0 %v2142, 126
    %v2166 = vpop.permute.xlu0 %2165
    %v2167 = vsel %vm137, %v2160, %v2162
    %v2168 = vsel %vm137, %v2162, %v2164
    %v2169 = vsel %vm137, %v2164, %v2166
    %2171 = vrot.lane.b32.xlu0 %v2139, 114
    %v2172 = vpop.permute.xlu0 %2171
    %2173 = vrot.lane.b32.xlu0 %v2140, 114
    %v2174 = vpop.permute.xlu0 %2173
    %2175 = vrot.lane.b32.xlu0 %v2141, 114
    %v2176 = vpop.permute.xlu0 %2175
    %2177 = vrot.lane.b32.xlu0 %v2142, 114
    %v2178 = vpop.permute.xlu0 %2177
    %2179 = vrot.lane.b32.xlu0 %v2143, 114
    %v2180 = vpop.permute.xlu0 %2179
    %v2181 = vsel %vm152, %v2172, %v2174
    %v2182 = vsel %vm152, %v2174, %v2176
    %v2183 = vsel %vm152, %v2176, %v2178
    %v2184 = vsel %vm152, %v2178, %v2180
    %2185 = vrot.lane.b32.xlu0 %v2140, 113
    %v2186 = vpop.permute.xlu0 %2185
    %2187 = vrot.lane.b32.xlu0 %v2141, 113
    %v2188 = vpop.permute.xlu0 %2187
    %2189 = vrot.lane.b32.xlu0 %v2142, 113
    %v2190 = vpop.permute.xlu0 %2189
    %2191 = vrot.lane.b32.xlu0 %v2143, 113
    %v2192 = vpop.permute.xlu0 %2191
    %v2193 = vsel %vm165, %v2186, %v2188
    %v2194 = vsel %vm165, %v2188, %v2190
    %v2195 = vsel %vm165, %v2190, %v2192
    %2196 = vrot.lane.b32.xlu0 %v2140, 112
    %v2197 = vpop.permute.xlu0 %2196
    %2198 = vrot.lane.b32.xlu0 %v2141, 112
    %v2199 = vpop.permute.xlu0 %2198
    %2200 = vrot.lane.b32.xlu0 %v2142, 112
    %v2201 = vpop.permute.xlu0 %2200
    %2202 = vrot.lane.b32.xlu0 %v2143, 112
    %v2203 = vpop.permute.xlu0 %2202
    %v2204 = vsel %vm177, %v2197, %v2199
    %v2205 = vsel %vm177, %v2199, %v2201
    %v2206 = vsel %vm177, %v2201, %v2203
    %2207 = vrot.lane.b32.xlu0 %v2140, 100
    %v2208 = vpop.permute.xlu0 %2207
    %2209 = vrot.lane.b32.xlu0 %v2141, 100
    %v2210 = vpop.permute.xlu0 %2209
    %2211 = vrot.lane.b32.xlu0 %v2142, 100
    %v2212 = vpop.permute.xlu0 %2211
    %2213 = vrot.lane.b32.xlu0 %v2143, 100
    %v2214 = vpop.permute.xlu0 %2213
    %v2215 = vsel %vm189, %v2208, %v2210
    %v2216 = vsel %vm189, %v2210, %v2212
    %v2217 = vsel %vm189, %v2212, %v2214
    %2218 = vrot.lane.b32.xlu0 %v2140, 99
    %v2219 = vpop.permute.xlu0 %2218
    %2220 = vrot.lane.b32.xlu0 %v2141, 99
    %v2221 = vpop.permute.xlu0 %2220
    %2222 = vrot.lane.b32.xlu0 %v2142, 99
    %v2223 = vpop.permute.xlu0 %2222
    %2224 = vrot.lane.b32.xlu0 %v2143, 99
    %v2225 = vpop.permute.xlu0 %2224
    %v2226 = vsel %vm201, %v2219, %v2221
    %v2227 = vsel %vm201, %v2221, %v2223
    %v2228 = vsel %vm201, %v2223, %v2225
    %2229 = vrot.lane.b32.xlu0 %v2140, 98
    %v2230 = vpop.permute.xlu0 %2229
    %2231 = vrot.lane.b32.xlu0 %v2141, 98
    %v2232 = vpop.permute.xlu0 %2231
    %2233 = vrot.lane.b32.xlu0 %v2142, 98
    %v2234 = vpop.permute.xlu0 %2233
    %2235 = vrot.lane.b32.xlu0 %v2143, 98
    %v2236 = vpop.permute.xlu0 %2235
    %v2237 = vsel %vm213, %v2230, %v2232
    %v2238 = vsel %vm213, %v2232, %v2234
    %v2239 = vsel %vm213, %v2234, %v2236
    %v2240 = vld [vmem:[%s13] sm:$0xff]
    %2242 = vset.pattern.permute.xlu0 0
    %2243 = vperm.xlu0 %2242, %v2240
    %v2244 = vpop.permute.xlu0 %2243
    %2246 = vrot.lane.b32.xlu0 %v2139, 15
    %v2247 = vpop.permute.xlu0 %2246
    %2248 = vrot.lane.b32.xlu0 %v2140, 15
    %v2249 = vpop.permute.xlu0 %2248
    %2250 = vrot.lane.b32.xlu0 %v2141, 15
    %v2251 = vpop.permute.xlu0 %2250
    %2252 = vrot.lane.b32.xlu0 %v2142, 15
    %v2253 = vpop.permute.xlu0 %2252
    %2254 = vrot.lane.b32.xlu0 %v2156, 15
    %v2255 = vpop.permute.xlu0 %2254
    %2256 = vrot.lane.b32.xlu0 %v2157, 15
    %v2257 = vpop.permute.xlu0 %2256
    %2258 = vrot.lane.b32.xlu0 %v2158, 15
    %v2259 = vpop.permute.xlu0 %2258
    %2260 = vrot.lane.b32.xlu0 %v2155, 15
    %v2261 = vpop.permute.xlu0 %2260
    %2262 = vrot.lane.b32.xlu0 %v2167, 15
    %v2263 = vpop.permute.xlu0 %2262
    %2264 = vrot.lane.b32.xlu0 %v2168, 15
    %v2265 = vpop.permute.xlu0 %2264
    %2266 = vrot.lane.b32.xlu0 %v2169, 15
    %v2267 = vpop.permute.xlu0 %2266
    %2268 = vrot.lane.b32.xlu0 %v2166, 15
    %v2269 = vpop.permute.xlu0 %2268
    %2270 = vrot.lane.b32.xlu0 %v2181, 15
    %v2271 = vpop.permute.xlu0 %2270
    %2272 = vrot.lane.b32.xlu0 %v2182, 15
    %v2273 = vpop.permute.xlu0 %2272
    %2274 = vrot.lane.b32.xlu0 %v2183, 15
    %v2275 = vpop.permute.xlu0 %2274
    %2276 = vrot.lane.b32.xlu0 %v2184, 15
    %v2277 = vpop.permute.xlu0 %2276
    %2278 = vrot.lane.b32.xlu0 %v2186, 15
    %v2279 = vpop.permute.xlu0 %2278
    %2280 = vrot.lane.b32.xlu0 %v2193, 15
    %v2281 = vpop.permute.xlu0 %2280
    %2282 = vrot.lane.b32.xlu0 %v2194, 15
    %v2283 = vpop.permute.xlu0 %2282
    %2284 = vrot.lane.b32.xlu0 %v2195, 15
    %v2285 = vpop.permute.xlu0 %2284
    %2286 = vrot.lane.b32.xlu0 %v2197, 15
    %v2287 = vpop.permute.xlu0 %2286
    %2288 = vrot.lane.b32.xlu0 %v2204, 15
    %v2289 = vpop.permute.xlu0 %2288
    %2290 = vrot.lane.b32.xlu0 %v2205, 15
    %v2291 = vpop.permute.xlu0 %2290
    %2292 = vrot.lane.b32.xlu0 %v2206, 15
    %v2293 = vpop.permute.xlu0 %2292
    %2294 = vrot.lane.b32.xlu0 %v2208, 15
    %v2295 = vpop.permute.xlu0 %2294
    %2296 = vrot.lane.b32.xlu0 %v2215, 15
    %v2297 = vpop.permute.xlu0 %2296
    %2298 = vrot.lane.b32.xlu0 %v2216, 15
    %v2299 = vpop.permute.xlu0 %2298
    %2300 = vrot.lane.b32.xlu0 %v2217, 15
    %v2301 = vpop.permute.xlu0 %2300
    %2302 = vrot.lane.b32.xlu0 %v2219, 15
    %v2303 = vpop.permute.xlu0 %2302
    %2304 = vrot.lane.b32.xlu0 %v2226, 15
    %v2305 = vpop.permute.xlu0 %2304
    %2306 = vrot.lane.b32.xlu0 %v2227, 15
    %v2307 = vpop.permute.xlu0 %2306
    %2308 = vrot.lane.b32.xlu0 %v2228, 15
    %v2309 = vpop.permute.xlu0 %2308
    %2310 = vrot.lane.b32.xlu0 %v2230, 15
    %v2311 = vpop.permute.xlu0 %2310
    %2312 = vrot.lane.b32.xlu0 %v2237, 15
    %v2313 = vpop.permute.xlu0 %2312
    %2314 = vrot.lane.b32.xlu0 %v2238, 15
    %v2315 = vpop.permute.xlu0 %2314
    %2316 = vrot.lane.b32.xlu0 %v2239, 15
    %v2317 = vpop.permute.xlu0 %2316
    %v2318 = vsel %vm295, %v2247, %v2249
    %v2319 = vsel %vm295, %v2249, %v2251
    %v2320 = vsel %vm295, %v2251, %v2253
    %v2321 = vsel %vm295, %v2255, %v2257
    %v2322 = vsel %vm295, %v2257, %v2259
    %v2323 = vsel %vm295, %v2259, %v2261
    %v2324 = vsel %vm295, %v2263, %v2265
    %v2325 = vsel %vm295, %v2265, %v2267
    %v2326 = vsel %vm295, %v2267, %v2269
    %v2327 = vsel %vm295, %v2271, %v2273
    %v2328 = vsel %vm295, %v2273, %v2275
    %v2329 = vsel %vm295, %v2275, %v2277
    %v2330 = vsel %vm295, %v2279, %v2281
    %v2331 = vsel %vm295, %v2281, %v2283
    %v2332 = vsel %vm295, %v2283, %v2285
    %v2333 = vsel %vm295, %v2287, %v2289
    %v2334 = vsel %vm295, %v2289, %v2291
    %v2335 = vsel %vm295, %v2291, %v2293
    %v2336 = vsel %vm295, %v2295, %v2297
    %v2337 = vsel %vm295, %v2297, %v2299
    %v2338 = vsel %vm295, %v2299, %v2301
    %v2339 = vsel %vm295, %v2303, %v2305
    %v2340 = vsel %vm295, %v2305, %v2307
    %v2341 = vsel %vm295, %v2307, %v2309
    %v2342 = vsel %vm295, %v2311, %v2313
    %v2343 = vsel %vm295, %v2313, %v2315
    %v2344 = vsel %vm295, %v2315, %v2317
    %v2382 = vsel %vm359, %v2138, 0
    %2384 = vmatprep.subr.mxu0 %v2319
    %2385 = vmatpush1.msra.mxu0 %v2318
    %2386 = vmatprep.subr.mxu0 %v2322
    %2387 = vmatpush1.msra.mxu0 %v2321
    %2388 = vmatprep.subr.mxu0 %v2325
    %2389 = vmatpush1.msra.mxu0 %v2324
    %2390 = vmatprep.subr.mxu0 %v2328
    %2391 = vmatpush1.msra.mxu0 %v2327
    %2392 = vmatprep.subr.mxu0 %v2331
    %2393 = vmatpush1.msra.mxu0 %v2330
    %2394 = vmatprep.subr.mxu0 %v2334
    %2395 = vmatpush1.msra.mxu0 %v2333
    %2396 = vmatprep.subr.mxu0 %v2337
    %2397 = vmatpush1.msra.mxu0 %v2336
    %2398 = vmatprep.subr.mxu0 %v2340
    %2399 = vmatpush1.msra.mxu0 %v2339
    %2400 = vmatprep.subr.mxu0 %v2343
    %2401 = vmatpush1.msra.mxu0 %v2342
    %2402 = vmatprep.subr.mxu0 0.0
    %2403 = vmatpush1.msra.mxu0 0.0
    %2404 = vmatprep.subr.mxu0 0.0
    %2405 = vmatpush1.msra.mxu0 0.0
    %2406 = vmatprep.subr.mxu0 0.0
    %2407 = vmatpush1.msra.mxu0 0.0
    %2408 = vmatprep.subr.mxu0 0.0
    %2409 = vmatpush1.msra.mxu0 0.0
    %2410 = vmatprep.subr.mxu0 0.0
    %2411 = vmatpush1.msra.mxu0 0.0
    %2412 = vmatprep.subr.mxu0 0.0
    %2413 = vmatpush1.msra.mxu0 0.0
    %2414 = vmatprep.subr.mxu0 0.0
    %2415 = vmatpush1.msra.mxu0 0.0
    %2416 = vmatprep.subr.mxu0 0.0
    %2417 = vmatpush1.msra.mxu0 0.0
    %2418 = vmatprep.subr.mxu0 0.0
    %2419 = vmatpush1.msra.mxu0 0.0
    %2420 = vmatprep.subr.mxu0 0.0
    %2421 = vmatpush1.msra.mxu0 0.0
    %2422 = vmatprep.subr.mxu0 0.0
    %2423 = vmatpush1.msra.mxu0 0.0
    %2424 = vmatprep.subr.mxu0 0.0
    %2425 = vmatpush1.msra.mxu0 0.0
    %2426 = vmatprep.subr.mxu0 0.0
    %2427 = vmatpush1.msra.mxu0 0.0
    %2428 = vmatprep.subr.mxu0 0.0
    %2429 = vmatpush1.msra.mxu0 0.0
    %2430 = vmatprep.subr.mxu0 0.0
    %2431 = vmatpush1.msra.mxu0 0.0
    %2432 = vmatprep.subr.mxu0 0.0
    %2433 = vmatpush1.msra.mxu0 0.0
    %2434 = vmatprep.subr.mxu0 0.0
    %2435 = vmatpush1.msra.mxu0 0.0
    %2436 = vmatprep.subr.mxu0 0.0
    %2437 = vmatpush1.msra.mxu0 0.0
    %2438 = vmatprep.subr.mxu0 0.0
    %2439 = vmatpush1.msra.mxu0 0.0
    %2440 = vmatprep.subr.mxu0 0.0
    %2441 = vmatpush1.msra.mxu0 0.0
    %2442 = vmatprep.subr.mxu0 0.0
    %2443 = vmatpush1.msra.mxu0 0.0
    %2444 = vmatprep.subr.mxu0 0.0
    %2445 = vmatpush1.msra.mxu0 0.0
    %2446 = vmatprep.subr.mxu0 0.0
    %2447 = vmatpush1.msra.mxu0 0.0
    %2448 = vmatprep.mubr.f32.mxu0 0.0
    %2449 = vmatmul.mubr.f32.gmra.mrb[0].mxu0 %v2382
    %v2450 = vpop.f32.mrb[0].mxu0
    %v2451 = vadd.f32 %v2244, %v2450
    %v2452 = vpop.f32.mrb[0].mxu0
    %v2453 = vadd.f32 %v2244, %v2452
    %2454 = vdwg.mxu0
    %2455 = vmatprep.subr.mxu0 %v2253
    %2456 = vmatpush1.msra.mxu0 %v2320
    %2457 = vmatprep.subr.mxu0 %v2261
    %2458 = vmatpush1.msra.mxu0 %v2323
    %2459 = vmatprep.subr.mxu0 %v2269
    %2460 = vmatpush1.msra.mxu0 %v2326
    %2461 = vmatprep.subr.mxu0 %v2277
    %2462 = vmatpush1.msra.mxu0 %v2329
    %2463 = vmatprep.subr.mxu0 %v2285
    %2464 = vmatpush1.msra.mxu0 %v2332
    %2465 = vmatprep.subr.mxu0 %v2293
    %2466 = vmatpush1.msra.mxu0 %v2335
    %2467 = vmatprep.subr.mxu0 %v2301
    %2468 = vmatpush1.msra.mxu0 %v2338
    %2469 = vmatprep.subr.mxu0 %v2309
    %2470 = vmatpush1.msra.mxu0 %v2341
    %2471 = vmatprep.subr.mxu0 %v2317
    %2472 = vmatpush1.msra.mxu0 %v2344
    %2473 = vmatprep.subr.mxu0 0.0
    %2474 = vmatpush1.msra.mxu0 0.0
    %2475 = vmatprep.subr.mxu0 0.0
    %2476 = vmatpush1.msra.mxu0 0.0
    %2477 = vmatprep.subr.mxu0 0.0
    %2478 = vmatpush1.msra.mxu0 0.0
    %2479 = vmatprep.subr.mxu0 0.0
    %2480 = vmatpush1.msra.mxu0 0.0
    %2481 = vmatprep.subr.mxu0 0.0
    %2482 = vmatpush1.msra.mxu0 0.0
    %2483 = vmatprep.subr.mxu0 0.0
    %2484 = vmatpush1.msra.mxu0 0.0
    %2485 = vmatprep.subr.mxu0 0.0
    %2486 = vmatpush1.msra.mxu0 0.0
    %2487 = vmatprep.subr.mxu0 0.0
    %2488 = vmatpush1.msra.mxu0 0.0
    %2489 = vmatprep.subr.mxu0 0.0
    %2490 = vmatpush1.msra.mxu0 0.0
    %2491 = vmatprep.subr.mxu0 0.0
    %2492 = vmatpush1.msra.mxu0 0.0
    %2493 = vmatprep.subr.mxu0 0.0
    %2494 = vmatpush1.msra.mxu0 0.0
    %2495 = vmatprep.subr.mxu0 0.0
    %2496 = vmatpush1.msra.mxu0 0.0
    %2497 = vmatprep.subr.mxu0 0.0
    %2498 = vmatpush1.msra.mxu0 0.0
    %2499 = vmatprep.subr.mxu0 0.0
    %2500 = vmatpush1.msra.mxu0 0.0
    %2501 = vmatprep.subr.mxu0 0.0
    %2502 = vmatpush1.msra.mxu0 0.0
    %2503 = vmatprep.subr.mxu0 0.0
    %2504 = vmatpush1.msra.mxu0 0.0
    %2505 = vmatprep.subr.mxu0 0.0
    %2506 = vmatpush1.msra.mxu0 0.0
    %2507 = vmatprep.subr.mxu0 0.0
    %2508 = vmatpush1.msra.mxu0 0.0
    %2509 = vmatprep.subr.mxu0 0.0
    %2510 = vmatpush1.msra.mxu0 0.0
    %2511 = vmatprep.subr.mxu0 0.0
    %2512 = vmatpush1.msra.mxu0 0.0
    %2513 = vmatprep.subr.mxu0 0.0
    %2514 = vmatpush1.msra.mxu0 0.0
    %2515 = vmatprep.subr.mxu0 0.0
    %2516 = vmatpush1.msra.mxu0 0.0
    %2517 = vmatprep.subr.mxu0 0.0
    %2518 = vmatpush1.msra.mxu0 0.0
    %2519 = vmatprep.mubr.f32.mxu0 0.0
    %2520 = vmatmul.mubr.f32.gmra.mrb[0].mxu0 %v2382
    %v2521 = vpop.f32.mrb[0].mxu0
    %v2522 = vadd.f32 %v2244, %v2521
    %v2523 = vpop.f32.mrb[0].mxu0
    %v2524 = vadd.f32 %v2244, %v2523
    %2525 = vdwg.mxu0
    %v2526 = vmax.f32 %v2451, 0.0
    %v2527 = vmax.f32 %v2453, 0.0
    %v2528 = vmax.f32 %v2522, 0.0
    %v2529 = vmax.f32 %v2524, 0.0
    %v2530 = vmul.f32 %v2526, %v79
    %v2531 = vmul.f32 %v2527, %v83
    %v2532 = vmul.f32 %v2528, %v87
    %v2533 = vmul.f32 %v2529, %v91
    %2534 = vst [vmem:[#allocation2 + $0x8] sm:$0xff] %v2530
    %2535 = vst [vmem:[#allocation2 + $0x10] sm:$0xff] %v2531
    %2536 = vst [vmem:[#allocation2 + $0x18] sm:$0xff] %v2532
    %2537 = vst.msk [vmem:[#allocation2 + $0x20] sm:$0xff] %vm69, %v2533
    %v2538 = vld [vmem:[%s7] sm:$0xff]
    %v2539 = vld [vmem:[#allocation2] sm:$0xff]
    %v2540 = vld [vmem:[#allocation2 + $0x8] sm:$0xff]
    %v2541 = vld [vmem:[#allocation2 + $0x10] sm:$0xff]
    %v2542 = vld [vmem:[#allocation2 + $0x18] sm:$0xff]
    %v2543 = vld [vmem:[#allocation2 + $0x20] sm:$0xff]
    %2548 = vrot.lane.b32.xlu0 %v2539, 127
    %v2549 = vpop.permute.xlu0 %2548
    %2550 = vrot.lane.b32.xlu0 %v2540, 127
    %v2551 = vpop.permute.xlu0 %2550
    %2552 = vrot.lane.b32.xlu0 %v2541, 127
    %v2553 = vpop.permute.xlu0 %2552
    %2554 = vrot.lane.b32.xlu0 %v2542, 127
    %v2555 = vpop.permute.xlu0 %2554
    %v2556 = vsel %vm125, %v2549, %v2551
    %v2557 = vsel %vm125, %v2551, %v2553
    %v2558 = vsel %vm125, %v2553, %v2555
    %2559 = vrot.lane.b32.xlu0 %v2539, 126
    %v2560 = vpop.permute.xlu0 %2559
    %2561 = vrot.lane.b32.xlu0 %v2540, 126
    %v2562 = vpop.permute.xlu0 %2561
    %2563 = vrot.lane.b32.xlu0 %v2541, 126
    %v2564 = vpop.permute.xlu0 %2563
    %2565 = vrot.lane.b32.xlu0 %v2542, 126
    %v2566 = vpop.permute.xlu0 %2565
    %v2567 = vsel %vm137, %v2560, %v2562
    %v2568 = vsel %vm137, %v2562, %v2564
    %v2569 = vsel %vm137, %v2564, %v2566
    %2571 = vrot.lane.b32.xlu0 %v2539, 114
    %v2572 = vpop.permute.xlu0 %2571
    %2573 = vrot.lane.b32.xlu0 %v2540, 114
    %v2574 = vpop.permute.xlu0 %2573
    %2575 = vrot.lane.b32.xlu0 %v2541, 114
    %v2576 = vpop.permute.xlu0 %2575
    %2577 = vrot.lane.b32.xlu0 %v2542, 114
    %v2578 = vpop.permute.xlu0 %2577
    %2579 = vrot.lane.b32.xlu0 %v2543, 114
    %v2580 = vpop.permute.xlu0 %2579
    %v2581 = vsel %vm152, %v2572, %v2574
    %v2582 = vsel %vm152, %v2574, %v2576
    %v2583 = vsel %vm152, %v2576, %v2578
    %v2584 = vsel %vm152, %v2578, %v2580
    %2585 = vrot.lane.b32.xlu0 %v2540, 113
    %v2586 = vpop.permute.xlu0 %2585
    %2587 = vrot.lane.b32.xlu0 %v2541, 113
    %v2588 = vpop.permute.xlu0 %2587
    %2589 = vrot.lane.b32.xlu0 %v2542, 113
    %v2590 = vpop.permute.xlu0 %2589
    %2591 = vrot.lane.b32.xlu0 %v2543, 113
    %v2592 = vpop.permute.xlu0 %2591
    %v2593 = vsel %vm165, %v2586, %v2588
    %v2594 = vsel %vm165, %v2588, %v2590
    %v2595 = vsel %vm165, %v2590, %v2592
    %2596 = vrot.lane.b32.xlu0 %v2540, 112
    %v2597 = vpop.permute.xlu0 %2596
    %2598 = vrot.lane.b32.xlu0 %v2541, 112
    %v2599 = vpop.permute.xlu0 %2598
    %2600 = vrot.lane.b32.xlu0 %v2542, 112
    %v2601 = vpop.permute.xlu0 %2600
    %2602 = vrot.lane.b32.xlu0 %v2543, 112
    %v2603 = vpop.permute.xlu0 %2602
    %v2604 = vsel %vm177, %v2597, %v2599
    %v2605 = vsel %vm177, %v2599, %v2601
    %v2606 = vsel %vm177, %v2601, %v2603
    %2607 = vrot.lane.b32.xlu0 %v2540, 100
    %v2608 = vpop.permute.xlu0 %2607
    %2609 = vrot.lane.b32.xlu0 %v2541, 100
    %v2610 = vpop.permute.xlu0 %2609
    %2611 = vrot.lane.b32.xlu0 %v2542, 100
    %v2612 = vpop.permute.xlu0 %2611
    %2613 = vrot.lane.b32.xlu0 %v2543, 100
    %v2614 = vpop.permute.xlu0 %2613
    %v2615 = vsel %vm189, %v2608, %v2610
    %v2616 = vsel %vm189, %v2610, %v2612
    %v2617 = vsel %vm189, %v2612, %v2614
    %2618 = vrot.lane.b32.xlu0 %v2540, 99
    %v2619 = vpop.permute.xlu0 %2618
    %2620 = vrot.lane.b32.xlu0 %v2541, 99
    %v2621 = vpop.permute.xlu0 %2620
    %2622 = vrot.lane.b32.xlu0 %v2542, 99
    %v2623 = vpop.permute.xlu0 %2622
    %2624 = vrot.lane.b32.xlu0 %v2543, 99
    %v2625 = vpop.permute.xlu0 %2624
    %v2626 = vsel %vm201, %v2619, %v2621
    %v2627 = vsel %vm201, %v2621, %v2623
    %v2628 = vsel %vm201, %v2623, %v2625
    %2629 = vrot.lane.b32.xlu0 %v2540, 98
    %v2630 = vpop.permute.xlu0 %2629
    %2631 = vrot.lane.b32.xlu0 %v2541, 98
    %v2632 = vpop.permute.xlu0 %2631
    %2633 = vrot.lane.b32.xlu0 %v2542, 98
    %v2634 = vpop.permute.xlu0 %2633
    %2635 = vrot.lane.b32.xlu0 %v2543, 98
    %v2636 = vpop.permute.xlu0 %2635
    %v2637 = vsel %vm213, %v2630, %v2632
    %v2638 = vsel %vm213, %v2632, %v2634
    %v2639 = vsel %vm213, %v2634, %v2636
    %v2640 = vld [vmem:[%s14] sm:$0xff]
    %2642 = vset.pattern.permute.xlu0 0
    %2643 = vperm.xlu0 %2642, %v2640
    %v2644 = vpop.permute.xlu0 %2643
    %2646 = vrot.lane.b32.xlu0 %v2539, 15
    %v2647 = vpop.permute.xlu0 %2646
    %2648 = vrot.lane.b32.xlu0 %v2540, 15
    %v2649 = vpop.permute.xlu0 %2648
    %2650 = vrot.lane.b32.xlu0 %v2541, 15
    %v2651 = vpop.permute.xlu0 %2650
    %2652 = vrot.lane.b32.xlu0 %v2542, 15
    %v2653 = vpop.permute.xlu0 %2652
    %2654 = vrot.lane.b32.xlu0 %v2556, 15
    %v2655 = vpop.permute.xlu0 %2654
    %2656 = vrot.lane.b32.xlu0 %v2557, 15
    %v2657 = vpop.permute.xlu0 %2656
    %2658 = vrot.lane.b32.xlu0 %v2558, 15
    %v2659 = vpop.permute.xlu0 %2658
    %2660 = vrot.lane.b32.xlu0 %v2555, 15
    %v2661 = vpop.permute.xlu0 %2660
    %2662 = vrot.lane.b32.xlu0 %v2567, 15
    %v2663 = vpop.permute.xlu0 %2662
    %2664 = vrot.lane.b32.xlu0 %v2568, 15
    %v2665 = vpop.permute.xlu0 %2664
    %2666 = vrot.lane.b32.xlu0 %v2569, 15
    %v2667 = vpop.permute.xlu0 %2666
    %2668 = vrot.lane.b32.xlu0 %v2566, 15
    %v2669 = vpop.permute.xlu0 %2668
    %2670 = vrot.lane.b32.xlu0 %v2581, 15
    %v2671 = vpop.permute.xlu0 %2670
    %2672 = vrot.lane.b32.xlu0 %v2582, 15
    %v2673 = vpop.permute.xlu0 %2672
    %2674 = vrot.lane.b32.xlu0 %v2583, 15
    %v2675 = vpop.permute.xlu0 %2674
    %2676 = vrot.lane.b32.xlu0 %v2584, 15
    %v2677 = vpop.permute.xlu0 %2676
    %2678 = vrot.lane.b32.xlu0 %v2586, 15
    %v2679 = vpop.permute.xlu0 %2678
    %2680 = vrot.lane.b32.xlu0 %v2593, 15
    %v2681 = vpop.permute.xlu0 %2680
    %2682 = vrot.lane.b32.xlu0 %v2594, 15
    %v2683 = vpop.permute.xlu0 %2682
    %2684 = vrot.lane.b32.xlu0 %v2595, 15
    %v2685 = vpop.permute.xlu0 %2684
    %2686 = vrot.lane.b32.xlu0 %v2597, 15
    %v2687 = vpop.permute.xlu0 %2686
    %2688 = vrot.lane.b32.xlu0 %v2604, 15
    %v2689 = vpop.permute.xlu0 %2688
    %2690 = vrot.lane.b32.xlu0 %v2605, 15
    %v2691 = vpop.permute.xlu0 %2690
    %2692 = vrot.lane.b32.xlu0 %v2606, 15
    %v2693 = vpop.permute.xlu0 %2692
    %2694 = vrot.lane.b32.xlu0 %v2608, 15
    %v2695 = vpop.permute.xlu0 %2694
    %2696 = vrot.lane.b32.xlu0 %v2615, 15
    %v2697 = vpop.permute.xlu0 %2696
    %2698 = vrot.lane.b32.xlu0 %v2616, 15
    %v2699 = vpop.permute.xlu0 %2698
    %2700 = vrot.lane.b32.xlu0 %v2617, 15
    %v2701 = vpop.permute.xlu0 %2700
    %2702 = vrot.lane.b32.xlu0 %v2619, 15
    %v2703 = vpop.permute.xlu0 %2702
    %2704 = vrot.lane.b32.xlu0 %v2626, 15
    %v2705 = vpop.permute.xlu0 %2704
    %2706 = vrot.lane.b32.xlu0 %v2627, 15
    %v2707 = vpop.permute.xlu0 %2706
    %2708 = vrot.lane.b32.xlu0 %v2628, 15
    %v2709 = vpop.permute.xlu0 %2708
    %2710 = vrot.lane.b32.xlu0 %v2630, 15
    %v2711 = vpop.permute.xlu0 %2710
    %2712 = vrot.lane.b32.xlu0 %v2637, 15
    %v2713 = vpop.permute.xlu0 %2712
    %2714 = vrot.lane.b32.xlu0 %v2638, 15
    %v2715 = vpop.permute.xlu0 %2714
    %2716 = vrot.lane.b32.xlu0 %v2639, 15
    %v2717 = vpop.permute.xlu0 %2716
    %v2718 = vsel %vm295, %v2647, %v2649
    %v2719 = vsel %vm295, %v2649, %v2651
    %v2720 = vsel %vm295, %v2651, %v2653
    %v2721 = vsel %vm295, %v2655, %v2657
    %v2722 = vsel %vm295, %v2657, %v2659
    %v2723 = vsel %vm295, %v2659, %v2661
    %v2724 = vsel %vm295, %v2663, %v2665
    %v2725 = vsel %vm295, %v2665, %v2667
    %v2726 = vsel %vm295, %v2667, %v2669
    %v2727 = vsel %vm295, %v2671, %v2673
    %v2728 = vsel %vm295, %v2673, %v2675
    %v2729 = vsel %vm295, %v2675, %v2677
    %v2730 = vsel %vm295, %v2679, %v2681
    %v2731 = vsel %vm295, %v2681, %v2683
    %v2732 = vsel %vm295, %v2683, %v2685
    %v2733 = vsel %vm295, %v2687, %v2689
    %v2734 = vsel %vm295, %v2689, %v2691
    %v2735 = vsel %vm295, %v2691, %v2693
    %v2736 = vsel %vm295, %v2695, %v2697
    %v2737 = vsel %vm295, %v2697, %v2699
    %v2738 = vsel %vm295, %v2699, %v2701
    %v2739 = vsel %vm295, %v2703, %v2705
    %v2740 = vsel %vm295, %v2705, %v2707
    %v2741 = vsel %vm295, %v2707, %v2709
    %v2742 = vsel %vm295, %v2711, %v2713
    %v2743 = vsel %vm295, %v2713, %v2715
    %v2744 = vsel %vm295, %v2715, %v2717
    %v2782 = vsel %vm359, %v2538, 0
    %2784 = vmatprep.subr.mxu0 %v2719
    %2785 = vmatpush1.msra.mxu0 %v2718
    %2786 = vmatprep.subr.mxu0 %v2722
    %2787 = vmatpush1.msra.mxu0 %v2721
    %2788 = vmatprep.subr.mxu0 %v2725
    %2789 = vmatpush1.msra.mxu0 %v2724
    %2790 = vmatprep.subr.mxu0 %v2728
    %2791 = vmatpush1.msra.mxu0 %v2727
    %2792 = vmatprep.subr.mxu0 %v2731
    %2793 = vmatpush1.msra.mxu0 %v2730
    %2794 = vmatprep.subr.mxu0 %v2734
    %2795 = vmatpush1.msra.mxu0 %v2733
    %2796 = vmatprep.subr.mxu0 %v2737
    %2797 = vmatpush1.msra.mxu0 %v2736
    %2798 = vmatprep.subr.mxu0 %v2740
    %2799 = vmatpush1.msra.mxu0 %v2739
    %2800 = vmatprep.subr.mxu0 %v2743
    %2801 = vmatpush1.msra.mxu0 %v2742
    %2802 = vmatprep.subr.mxu0 0.0
    %2803 = vmatpush1.msra.mxu0 0.0
    %2804 = vmatprep.subr.mxu0 0.0
    %2805 = vmatpush1.msra.mxu0 0.0
    %2806 = vmatprep.subr.mxu0 0.0
    %2807 = vmatpush1.msra.mxu0 0.0
    %2808 = vmatprep.subr.mxu0 0.0
    %2809 = vmatpush1.msra.mxu0 0.0
    %2810 = vmatprep.subr.mxu0 0.0
    %2811 = vmatpush1.msra.mxu0 0.0
    %2812 = vmatprep.subr.mxu0 0.0
    %2813 = vmatpush1.msra.mxu0 0.0
    %2814 = vmatprep.subr.mxu0 0.0
    %2815 = vmatpush1.msra.mxu0 0.0
    %2816 = vmatprep.subr.mxu0 0.0
    %2817 = vmatpush1.msra.mxu0 0.0
    %2818 = vmatprep.subr.mxu0 0.0
    %2819 = vmatpush1.msra.mxu0 0.0
    %2820 = vmatprep.subr.mxu0 0.0
    %2821 = vmatpush1.msra.mxu0 0.0
    %2822 = vmatprep.subr.mxu0 0.0
    %2823 = vmatpush1.msra.mxu0 0.0
    %2824 = vmatprep.subr.mxu0 0.0
    %2825 = vmatpush1.msra.mxu0 0.0
    %2826 = vmatprep.subr.mxu0 0.0
    %2827 = vmatpush1.msra.mxu0 0.0
    %2828 = vmatprep.subr.mxu0 0.0
    %2829 = vmatpush1.msra.mxu0 0.0
    %2830 = vmatprep.subr.mxu0 0.0
    %2831 = vmatpush1.msra.mxu0 0.0
    %2832 = vmatprep.subr.mxu0 0.0
    %2833 = vmatpush1.msra.mxu0 0.0
    %2834 = vmatprep.subr.mxu0 0.0
    %2835 = vmatpush1.msra.mxu0 0.0
    %2836 = vmatprep.subr.mxu0 0.0
    %2837 = vmatpush1.msra.mxu0 0.0
    %2838 = vmatprep.subr.mxu0 0.0
    %2839 = vmatpush1.msra.mxu0 0.0
    %2840 = vmatprep.subr.mxu0 0.0
    %2841 = vmatpush1.msra.mxu0 0.0
    %2842 = vmatprep.subr.mxu0 0.0
    %2843 = vmatpush1.msra.mxu0 0.0
    %2844 = vmatprep.subr.mxu0 0.0
    %2845 = vmatpush1.msra.mxu0 0.0
    %2846 = vmatprep.subr.mxu0 0.0
    %2847 = vmatpush1.msra.mxu0 0.0
    %2848 = vmatprep.mubr.f32.mxu0 0.0
    %2849 = vmatmul.mubr.f32.gmra.mrb[0].mxu0 %v2782
    %v2850 = vpop.f32.mrb[0].mxu0
    %v2851 = vadd.f32 %v2644, %v2850
    %v2852 = vpop.f32.mrb[0].mxu0
    %v2853 = vadd.f32 %v2644, %v2852
    %2854 = vdwg.mxu0
    %2855 = vmatprep.subr.mxu0 %v2653
    %2856 = vmatpush1.msra.mxu0 %v2720
    %2857 = vmatprep.subr.mxu0 %v2661
    %2858 = vmatpush1.msra.mxu0 %v2723
    %2859 = vmatprep.subr.mxu0 %v2669
    %2860 = vmatpush1.msra.mxu0 %v2726
    %2861 = vmatprep.subr.mxu0 %v2677
    %2862 = vmatpush1.msra.mxu0 %v2729
    %2863 = vmatprep.subr.mxu0 %v2685
    %2864 = vmatpush1.msra.mxu0 %v2732
    %2865 = vmatprep.subr.mxu0 %v2693
    %2866 = vmatpush1.msra.mxu0 %v2735
    %2867 = vmatprep.subr.mxu0 %v2701
    %2868 = vmatpush1.msra.mxu0 %v2738
    %2869 = vmatprep.subr.mxu0 %v2709
    %2870 = vmatpush1.msra.mxu0 %v2741
    %2871 = vmatprep.subr.mxu0 %v2717
    %2872 = vmatpush1.msra.mxu0 %v2744
    %2873 = vmatprep.subr.mxu0 0.0
    %2874 = vmatpush1.msra.mxu0 0.0
    %2875 = vmatprep.subr.mxu0 0.0
    %2876 = vmatpush1.msra.mxu0 0.0
    %2877 = vmatprep.subr.mxu0 0.0
    %2878 = vmatpush1.msra.mxu0 0.0
    %2879 = vmatprep.subr.mxu0 0.0
    %2880 = vmatpush1.msra.mxu0 0.0
    %2881 = vmatprep.subr.mxu0 0.0
    %2882 = vmatpush1.msra.mxu0 0.0
    %2883 = vmatprep.subr.mxu0 0.0
    %2884 = vmatpush1.msra.mxu0 0.0
    %2885 = vmatprep.subr.mxu0 0.0
    %2886 = vmatpush1.msra.mxu0 0.0
    %2887 = vmatprep.subr.mxu0 0.0
    %2888 = vmatpush1.msra.mxu0 0.0
    %2889 = vmatprep.subr.mxu0 0.0
    %2890 = vmatpush1.msra.mxu0 0.0
    %2891 = vmatprep.subr.mxu0 0.0
    %2892 = vmatpush1.msra.mxu0 0.0
    %2893 = vmatprep.subr.mxu0 0.0
    %2894 = vmatpush1.msra.mxu0 0.0
    %2895 = vmatprep.subr.mxu0 0.0
    %2896 = vmatpush1.msra.mxu0 0.0
    %2897 = vmatprep.subr.mxu0 0.0
    %2898 = vmatpush1.msra.mxu0 0.0
    %2899 = vmatprep.subr.mxu0 0.0
    %2900 = vmatpush1.msra.mxu0 0.0
    %2901 = vmatprep.subr.mxu0 0.0
    %2902 = vmatpush1.msra.mxu0 0.0
    %2903 = vmatprep.subr.mxu0 0.0
    %2904 = vmatpush1.msra.mxu0 0.0
    %2905 = vmatprep.subr.mxu0 0.0
    %2906 = vmatpush1.msra.mxu0 0.0
    %2907 = vmatprep.subr.mxu0 0.0
    %2908 = vmatpush1.msra.mxu0 0.0
    %2909 = vmatprep.subr.mxu0 0.0
    %2910 = vmatpush1.msra.mxu0 0.0
    %2911 = vmatprep.subr.mxu0 0.0
    %2912 = vmatpush1.msra.mxu0 0.0
    %2913 = vmatprep.subr.mxu0 0.0
    %2914 = vmatpush1.msra.mxu0 0.0
    %2915 = vmatprep.subr.mxu0 0.0
    %2916 = vmatpush1.msra.mxu0 0.0
    %2917 = vmatprep.subr.mxu0 0.0
    %2918 = vmatpush1.msra.mxu0 0.0
    %2919 = vmatprep.mubr.f32.mxu0 0.0
    %2920 = vmatmul.mubr.f32.gmra.mrb[0].mxu0 %v2782
    %v2921 = vpop.f32.mrb[0].mxu0
    %v2922 = vadd.f32 %v2644, %v2921
    %v2923 = vpop.f32.mrb[0].mxu0
    %v2924 = vadd.f32 %v2644, %v2923
    %2925 = vdwg.mxu0
    %v2926 = vmax.f32 %v2851, 0.0
    %v2927 = vmax.f32 %v2853, 0.0
    %v2928 = vmax.f32 %v2922, 0.0
    %v2929 = vmax.f32 %v2924, 0.0
    %v2930 = vld [vmem:[%s16] sm:$0xff]
    %v2931 = vld [vmem:[%s16 + $0x8] sm:$0xff]
    %v2932 = vld [vmem:[%s16 + $0x10] sm:$0xff]
    %v2933 = vld [vmem:[%s16 + $0x18] sm:$0xff]
    %v2934 = vld [vmem:[%s16 + $0x20] sm:$0xff]
    %v2935 = vld [vmem:[%s16 + $0x28] sm:$0xff]
    %v2936 = vld [vmem:[%s16 + $0x30] sm:$0xff]
    %v2937 = vld [vmem:[%s16 + $0x38] sm:$0xff]
    %v2938 = vld [vmem:[%s16 + $0x40] sm:$0xff]
    %v2939 = vld [vmem:[%s16 + $0x48] sm:$0xff]
    %v2940 = vld [vmem:[%s16 + $0x50] sm:$0xff]
    %v2941 = vld [vmem:[%s16 + $0x58] sm:$0xff]
    %v2942 = vld [vmem:[%s16 + $0x60] sm:$0xff]
    %v2943 = vld [vmem:[%s16 + $0x68] sm:$0xff]
    %v2944 = vld [vmem:[%s16 + $0x70] sm:$0xff]
    %v2945 = vld [vmem:[%s16 + $0x78] sm:$0xff]
    %v2946 = vld [vmem:[%s16 + $0x80] sm:$0xff]
    %v2947 = vld [vmem:[%s16 + $0x88] sm:$0xff]
    %v2948 = vld [vmem:[%s16 + $0x90] sm:$0xff]
    %v2949 = vld [vmem:[%s16 + $0x98] sm:$0xff]
    %v2950 = vld [vmem:[%s16 + $0xa0] sm:$0xff]
    %v2951 = vld [vmem:[%s16 + $0xa8] sm:$0xff]
    %v2952 = vld [vmem:[%s16 + $0xb0] sm:$0xff]
    %v2953 = vld [vmem:[%s16 + $0xb8] sm:$0xff]
    %v2954 = vld [vmem:[%s16 + $0xc0] sm:$0xf]
    %v2956 = vsel %vm1779, %v2927, 0
    %v2959 = vsel %vm1783, %v2954, 0
    %2961 = vmatprep.subr.mxu0 0.0
    %2962 = vmatpush1.msra.mxu0 %v2930
    %2963 = vmatprep.subr.mxu0 0.0
    %2964 = vmatpush1.msra.mxu0 %v2931
    %2965 = vmatprep.subr.mxu0 0.0
    %2966 = vmatpush1.msra.mxu0 %v2932
    %2967 = vmatprep.subr.mxu0 0.0
    %2968 = vmatpush1.msra.mxu0 %v2933
    %2969 = vmatprep.subr.mxu0 0.0
    %2970 = vmatpush1.msra.mxu0 %v2934
    %2971 = vmatprep.subr.mxu0 0.0
    %2972 = vmatpush1.msra.mxu0 %v2935
    %2973 = vmatprep.subr.mxu0 0.0
    %2974 = vmatpush1.msra.mxu0 %v2936
    %2975 = vmatprep.subr.mxu0 0.0
    %2976 = vmatpush1.msra.mxu0 %v2937
    %2977 = vmatprep.subr.mxu0 0.0
    %2978 = vmatpush1.msra.mxu0 %v2938
    %2979 = vmatprep.subr.mxu0 0.0
    %2980 = vmatpush1.msra.mxu0 %v2939
    %2981 = vmatprep.subr.mxu0 0.0
    %2982 = vmatpush1.msra.mxu0 %v2940
    %2983 = vmatprep.subr.mxu0 0.0
    %2984 = vmatpush1.msra.mxu0 %v2941
    %2985 = vmatprep.subr.mxu0 0.0
    %2986 = vmatpush1.msra.mxu0 %v2942
    %2987 = vmatprep.subr.mxu0 0.0
    %2988 = vmatpush1.msra.mxu0 %v2943
    %2989 = vmatprep.subr.mxu0 0.0
    %2990 = vmatpush1.msra.mxu0 %v2944
    %2991 = vmatprep.subr.mxu0 0.0
    %2992 = vmatpush1.msra.mxu0 %v2945
    %2993 = vmatprep.subr.mxu0 0.0
    %2994 = vmatpush1.msra.mxu0 %v2946
    %2995 = vmatprep.subr.mxu0 0.0
    %2996 = vmatpush1.msra.mxu0 %v2947
    %2997 = vmatprep.subr.mxu0 0.0
    %2998 = vmatpush1.msra.mxu0 %v2948
    %2999 = vmatprep.subr.mxu0 0.0
    %3000 = vmatpush1.msra.mxu0 %v2949
    %3001 = vmatprep.subr.mxu0 0.0
    %3002 = vmatpush1.msra.mxu0 %v2950
    %3003 = vmatprep.subr.mxu0 0.0
    %3004 = vmatpush1.msra.mxu0 %v2951
    %3005 = vmatprep.subr.mxu0 0.0
    %3006 = vmatpush1.msra.mxu0 %v2952
    %3007 = vmatprep.subr.mxu0 0.0
    %3008 = vmatpush1.msra.mxu0 %v2953
    %3009 = vmatprep.subr.mxu0 0.0
    %3010 = vmatpush1.msra.mxu0 %v2959
    %3011 = vmatprep.subr.mxu0 0.0
    %3012 = vmatpush1.msra.mxu0 0.0
    %3013 = vmatprep.subr.mxu0 0.0
    %3014 = vmatpush1.msra.mxu0 0.0
    %3015 = vmatprep.subr.mxu0 0.0
    %3016 = vmatpush1.msra.mxu0 0.0
    %3017 = vmatprep.subr.mxu0 0.0
    %3018 = vmatpush1.msra.mxu0 0.0
    %3019 = vmatprep.subr.mxu0 0.0
    %3020 = vmatpush1.msra.mxu0 0.0
    %3021 = vmatprep.subr.mxu0 0.0
    %3022 = vmatpush1.msra.mxu0 0.0
    %3023 = vmatprep.subr.mxu0 0.0
    %3024 = vmatpush1.msra.mxu0 0.0
    %3025 = vmatprep.mubr.f32.mxu0 %v2956
    %3026 = vmatmul.mubr.f32.gmra.mrb[0].mxu0 %v2926
    %v3027 = vpop.f32.mrb[0].mxu0
    %v3028 = vadd.f32 0.0, %v3027
    %v3029 = vpop.f32.mrb[0].mxu0
    %3030 = vdwg.mxu0
    %v3031 = vmul.f32 %v3028, %v96
    %v3032 = vsel %vm1858, %v3031, 0.0
    %v3033 = vrot.slane %v3032, 4
    %v3034 = vadd.f32 %v3032, %v3033
    %v3035 = vrot.slane %v3034, 2
    %v3036 = vadd.f32 %v3034, %v3035
    %v3037 = vrot.slane %v3036, 1
    %v3038 = vadd.f32 %v3036, %v3037
    %v3040 = vsel %vm1858, %v3038, 0
    %3042 = vmatprep.subr.mxu0 0.0
    %3043 = vmatpush1.msra.mxu0 %v97
    %3044 = vmatprep.subr.mxu0 0.0
    %3045 = vmatpush1.msra.mxu0 %v98
    %3046 = vmatprep.subr.mxu0 0.0
    %3047 = vmatpush1.msra.mxu0 %v99
    %3048 = vmatprep.subr.mxu0 0.0
    %3049 = vmatpush1.msra.mxu0 %v100
    %3050 = vmatprep.subr.mxu0 0.0
    %3051 = vmatpush1.msra.mxu0 %v101
    %3052 = vmatprep.subr.mxu0 0.0
    %3053 = vmatpush1.msra.mxu0 %v102
    %3054 = vmatprep.subr.mxu0 0.0
    %3055 = vmatpush1.msra.mxu0 %v103
    %3056 = vmatprep.subr.mxu0 0.0
    %3057 = vmatpush1.msra.mxu0 %v104
    %3058 = vmatprep.subr.mxu0 0.0
    %3059 = vmatpush1.msra.mxu0 %v105
    %3060 = vmatprep.subr.mxu0 0.0
    %3061 = vmatpush1.msra.mxu0 %v106
    %3062 = vmatprep.subr.mxu0 0.0
    %3063 = vmatpush1.msra.mxu0 0.0
    %3064 = vmatprep.subr.mxu0 0.0
    %3065 = vmatpush1.msra.mxu0 0.0
    %3066 = vmatprep.subr.mxu0 0.0
    %3067 = vmatpush1.msra.mxu0 0.0
    %3068 = vmatprep.subr.mxu0 0.0
    %3069 = vmatpush1.msra.mxu0 0.0
    %3070 = vmatprep.subr.mxu0 0.0
    %3071 = vmatpush1.msra.mxu0 0.0
    %3072 = vmatprep.subr.mxu0 0.0
    %3073 = vmatpush1.msra.mxu0 0.0
    %3074 = vmatprep.subr.mxu0 0.0
    %3075 = vmatpush1.msra.mxu0 0.0
    %3076 = vmatprep.subr.mxu0 0.0
    %3077 = vmatpush1.msra.mxu0 0.0
    %3078 = vmatprep.subr.mxu0 0.0
    %3079 = vmatpush1.msra.mxu0 0.0
    %3080 = vmatprep.subr.mxu0 0.0
    %3081 = vmatpush1.msra.mxu0 0.0
    %3082 = vmatprep.subr.mxu0 0.0
    %3083 = vmatpush1.msra.mxu0 0.0
    %3084 = vmatprep.subr.mxu0 0.0
    %3085 = vmatpush1.msra.mxu0 0.0
    %3086 = vmatprep.subr.mxu0 0.0
    %3087 = vmatpush1.msra.mxu0 0.0
    %3088 = vmatprep.subr.mxu0 0.0
    %3089 = vmatpush1.msra.mxu0 0.0
    %3090 = vmatprep.subr.mxu0 0.0
    %3091 = vmatpush1.msra.mxu0 0.0
    %3092 = vmatprep.subr.mxu0 0.0
    %3093 = vmatpush1.msra.mxu0 0.0
    %3094 = vmatprep.subr.mxu0 0.0
    %3095 = vmatpush1.msra.mxu0 0.0
    %3096 = vmatprep.subr.mxu0 0.0
    %3097 = vmatpush1.msra.mxu0 0.0
    %3098 = vmatprep.subr.mxu0 0.0
    %3099 = vmatpush1.msra.mxu0 0.0
    %3100 = vmatprep.subr.mxu0 0.0
    %3101 = vmatpush1.msra.mxu0 0.0
    %3102 = vmatprep.subr.mxu0 0.0
    %3103 = vmatpush1.msra.mxu0 0.0
    %3104 = vmatprep.subr.mxu0 0.0
    %3105 = vmatpush1.msra.mxu0 0.0
    %3106 = vmatprep.mubr.f32.mxu0 0.0
    %3107 = vmatmul.mubr.f32.gmra.mrb[0].mxu0 %v3040
    %v3108 = vpop.f32.mrb[0].mxu0
    %v3109 = vadd.f32 0.0, %v3108
    %v3110 = vpop.f32.mrb[0].mxu0
    %3111 = vdwg.mxu0
    %3114 = vrot.lane.b32.xlu0 %v2927, 60
    %v3115 = vpop.permute.xlu0 %3114
    %3116 = vrot.lane.b32.xlu0 %v2928, 60
    %v3117 = vpop.permute.xlu0 %3116
    %3118 = vrot.lane.b32.xlu0 %v2929, 60
    %v3119 = vpop.permute.xlu0 %3118
    %v3120 = vsel %vm1947, %v3115, %v3117
    %v3121 = vsel %vm1947, %v3117, %v3119
    %v3123 = vsel %vm1779, %v3121, 0
    %3125 = vmatprep.subr.mxu0 0.0
    %3126 = vmatpush1.msra.mxu0 %v2930
    %3127 = vmatprep.subr.mxu0 0.0
    %3128 = vmatpush1.msra.mxu0 %v2931
    %3129 = vmatprep.subr.mxu0 0.0
    %3130 = vmatpush1.msra.mxu0 %v2932
    %3131 = vmatprep.subr.mxu0 0.0
    %3132 = vmatpush1.msra.mxu0 %v2933
    %3133 = vmatprep.subr.mxu0 0.0
    %3134 = vmatpush1.msra.mxu0 %v2934
    %3135 = vmatprep.subr.mxu0 0.0
    %3136 = vmatpush1.msra.mxu0 %v2935
    %3137 = vmatprep.subr.mxu0 0.0
    %3138 = vmatpush1.msra.mxu0 %v2936
    %3139 = vmatprep.subr.mxu0 0.0
    %3140 = vmatpush1.msra.mxu0 %v2937
    %3141 = vmatprep.subr.mxu0 0.0
    %3142 = vmatpush1.msra.mxu0 %v2938
    %3143 = vmatprep.subr.mxu0 0.0
    %3144 = vmatpush1.msra.mxu0 %v2939
    %3145 = vmatprep.subr.mxu0 0.0
    %3146 = vmatpush1.msra.mxu0 %v2940
    %3147 = vmatprep.subr.mxu0 0.0
    %3148 = vmatpush1.msra.mxu0 %v2941
    %3149 = vmatprep.subr.mxu0 0.0
    %3150 = vmatpush1.msra.mxu0 %v2942
    %3151 = vmatprep.subr.mxu0 0.0
    %3152 = vmatpush1.msra.mxu0 %v2943
    %3153 = vmatprep.subr.mxu0 0.0
    %3154 = vmatpush1.msra.mxu0 %v2944
    %3155 = vmatprep.subr.mxu0 0.0
    %3156 = vmatpush1.msra.mxu0 %v2945
    %3157 = vmatprep.subr.mxu0 0.0
    %3158 = vmatpush1.msra.mxu0 %v2946
    %3159 = vmatprep.subr.mxu0 0.0
    %3160 = vmatpush1.msra.mxu0 %v2947
    %3161 = vmatprep.subr.mxu0 0.0
    %3162 = vmatpush1.msra.mxu0 %v2948
    %3163 = vmatprep.subr.mxu0 0.0
    %3164 = vmatpush1.msra.mxu0 %v2949
    %3165 = vmatprep.subr.mxu0 0.0
    %3166 = vmatpush1.msra.mxu0 %v2950
    %3167 = vmatprep.subr.mxu0 0.0
    %3168 = vmatpush1.msra.mxu0 %v2951
    %3169 = vmatprep.subr.mxu0 0.0
    %3170 = vmatpush1.msra.mxu0 %v2952
    %3171 = vmatprep.subr.mxu0 0.0
    %3172 = vmatpush1.msra.mxu0 %v2953
    %3173 = vmatprep.subr.mxu0 0.0
    %3174 = vmatpush1.msra.mxu0 %v2959
    %3175 = vmatprep.subr.mxu0 0.0
    %3176 = vmatpush1.msra.mxu0 0.0
    %3177 = vmatprep.subr.mxu0 0.0
    %3178 = vmatpush1.msra.mxu0 0.0
    %3179 = vmatprep.subr.mxu0 0.0
    %3180 = vmatpush1.msra.mxu0 0.0
    %3181 = vmatprep.subr.mxu0 0.0
    %3182 = vmatpush1.msra.mxu0 0.0
    %3183 = vmatprep.subr.mxu0 0.0
    %3184 = vmatpush1.msra.mxu0 0.0
    %3185 = vmatprep.subr.mxu0 0.0
    %3186 = vmatpush1.msra.mxu0 0.0
    %3187 = vmatprep.subr.mxu0 0.0
    %3188 = vmatpush1.msra.mxu0 0.0
    %3189 = vmatprep.mubr.f32.mxu0 %v3123
    %3190 = vmatmul.mubr.f32.gmra.mrb[0].mxu0 %v3120
    %v3191 = vpop.f32.mrb[0].mxu0
    %v3192 = vadd.f32 0.0, %v3191
    %v3193 = vpop.f32.mrb[0].mxu0
    %3194 = vdwg.mxu0
    %v3195 = vmul.f32 %v3192, %v96
    %v3196 = vsel %vm1858, %v3195, 0.0
    %v3197 = vrot.slane %v3196, 4
    %v3198 = vadd.f32 %v3196, %v3197
    %v3199 = vrot.slane %v3198, 2
    %v3200 = vadd.f32 %v3198, %v3199
    %v3201 = vrot.slane %v3200, 1
    %v3202 = vadd.f32 %v3200, %v3201
    %v3204 = vsel %vm1858, %v3202, 0
    %3206 = vmatprep.subr.mxu0 0.0
    %3207 = vmatpush1.msra.mxu0 %v97
    %3208 = vmatprep.subr.mxu0 0.0
    %3209 = vmatpush1.msra.mxu0 %v98
    %3210 = vmatprep.subr.mxu0 0.0
    %3211 = vmatpush1.msra.mxu0 %v99
    %3212 = vmatprep.subr.mxu0 0.0
    %3213 = vmatpush1.msra.mxu0 %v100
    %3214 = vmatprep.subr.mxu0 0.0
    %3215 = vmatpush1.msra.mxu0 %v101
    %3216 = vmatprep.subr.mxu0 0.0
    %3217 = vmatpush1.msra.mxu0 %v102
    %3218 = vmatprep.subr.mxu0 0.0
    %3219 = vmatpush1.msra.mxu0 %v103
    %3220 = vmatprep.subr.mxu0 0.0
    %3221 = vmatpush1.msra.mxu0 %v104
    %3222 = vmatprep.subr.mxu0 0.0
    %3223 = vmatpush1.msra.mxu0 %v105
    %3224 = vmatprep.subr.mxu0 0.0
    %3225 = vmatpush1.msra.mxu0 %v106
    %3226 = vmatprep.subr.mxu0 0.0
    %3227 = vmatpush1.msra.mxu0 0.0
    %3228 = vmatprep.subr.mxu0 0.0
    %3229 = vmatpush1.msra.mxu0 0.0
    %3230 = vmatprep.subr.mxu0 0.0
    %3231 = vmatpush1.msra.mxu0 0.0
    %3232 = vmatprep.subr.mxu0 0.0
    %3233 = vmatpush1.msra.mxu0 0.0
    %3234 = vmatprep.subr.mxu0 0.0
    %3235 = vmatpush1.msra.mxu0 0.0
    %3236 = vmatprep.subr.mxu0 0.0
    %3237 = vmatpush1.msra.mxu0 0.0
    %3238 = vmatprep.subr.mxu0 0.0
    %3239 = vmatpush1.msra.mxu0 0.0
    %3240 = vmatprep.subr.mxu0 0.0
    %3241 = vmatpush1.msra.mxu0 0.0
    %3242 = vmatprep.subr.mxu0 0.0
    %3243 = vmatpush1.msra.mxu0 0.0
    %3244 = vmatprep.subr.mxu0 0.0
    %3245 = vmatpush1.msra.mxu0 0.0
    %3246 = vmatprep.subr.mxu0 0.0
    %3247 = vmatpush1.msra.mxu0 0.0
    %3248 = vmatprep.subr.mxu0 0.0
    %3249 = vmatpush1.msra.mxu0 0.0
    %3250 = vmatprep.subr.mxu0 0.0
    %3251 = vmatpush1.msra.mxu0 0.0
    %3252 = vmatprep.subr.mxu0 0.0
    %3253 = vmatpush1.msra.mxu0 0.0
    %3254 = vmatprep.subr.mxu0 0.0
    %3255 = vmatpush1.msra.mxu0 0.0
    %3256 = vmatprep.subr.mxu0 0.0
    %3257 = vmatpush1.msra.mxu0 0.0
    %3258 = vmatprep.subr.mxu0 0.0
    %3259 = vmatpush1.msra.mxu0 0.0
    %3260 = vmatprep.subr.mxu0 0.0
    %3261 = vmatpush1.msra.mxu0 0.0
    %3262 = vmatprep.subr.mxu0 0.0
    %3263 = vmatpush1.msra.mxu0 0.0
    %3264 = vmatprep.subr.mxu0 0.0
    %3265 = vmatpush1.msra.mxu0 0.0
    %3266 = vmatprep.subr.mxu0 0.0
    %3267 = vmatpush1.msra.mxu0 0.0
    %3268 = vmatprep.subr.mxu0 0.0
    %3269 = vmatpush1.msra.mxu0 0.0
    %3270 = vmatprep.mubr.f32.mxu0 0.0
    %3271 = vmatmul.mubr.f32.gmra.mrb[0].mxu0 %v3204
    %v3272 = vpop.f32.mrb[0].mxu0
    %v3273 = vadd.f32 0.0, %v3272
    %v3274 = vpop.f32.mrb[0].mxu0
    %3275 = vdwg.mxu0
    %v3277 = vrot.slane %v3273, 7
    %v3279 = vsel %vm2107, %v3109, %v3277
    %v3280 = vadd.f32 %v2115, %v3279
    %vm3281 = vcmask 74752
    %3282 = vst.msk [vmem:[#allocation4] sm:$0x3] %vm3281, %v3280
    // Predicated region
    $region82: #{mousenet_forward.1} parent=1 // pred_check
      _
    $region83: #{mousenet_forward.1} parent=1 // pred_check_branch
      %3284 = sbr.rel (0) target = $region85
    $region84: #{mousenet_forward.1} parent=1 // pred_region
      %s3286 = ssub.s32 32, 32
      %3287 = vsyncadd [#allocation5], %s3286
      %s3289 = sshll.u32 [#allocation4], 4
      %s3290 = int_to_ptr.vmem [resolvable:$true] %s3289
      %3292 = dma.vmem_to_hbm [thread:$0]  %s3290, 32, %s20, [#allocation5]
    $region85: #{mousenet_forward.1} parent=1 // pred_fallthru
      _
    // Predicated region
    $region86: #{mousenet_forward.1} parent=1 // pred_check
      _
    $region87: #{mousenet_forward.1} parent=1 // pred_check_branch
      %3294 = sbr.rel (0) target = $region89
    $region88: #{mousenet_forward.1} parent=1 // pred_region
      %3295 = dma.done [#allocation5], 32
    $region89: #{mousenet_forward.1} parent=1 // pred_fallthru
      _
    %3296 = vsyncpa [#allocation5], 1

</llo_original>
